<compile_context>
chip_gen: v7x
topology: tpu7x:2x2x1
jax: 0.10.0
libtpu: 0.0.40
codegen_flags: <defaults>
</compile_context>

<pallas_src>
import functools
import math

import jax
import jax.numpy as jnp
from jax import lax
from jax.experimental import pallas as pl
from jax.experimental.pallas import tpu as pltpu

_SQRT1_2 = 0.7071067811865476


# ---------------------------------------------------------------------------
# elementwise helpers (kernel-only: pl.reciprocal needs a Pallas context)
# ---------------------------------------------------------------------------
def _sigmoid(x):
    return pl.reciprocal(1.0 + jnp.exp(-x), approx=True)


def _silu(x):
    return x * _sigmoid(x)


def _softplus(x):
    return jnp.maximum(x, 0.0) + jnp.log(1.0 + jnp.exp(-jnp.abs(x)))


def _erf(x):
    # Abramowitz & Stegun 7.1.26 polynomial (|err| < 1.5e-7) so exact-GELU stays
    # in-kernel without relying on a lax.erf lowering.
    a1, a2, a3, a4, a5 = (0.254829592, -0.284496736, 1.421413741,
                          -1.453152027, 1.061405429)
    p = 0.3275911
    ax = jnp.abs(x)
    t = pl.reciprocal(1.0 + p * ax, approx=True)
    poly = ((((a5 * t + a4) * t + a3) * t + a2) * t + a1) * t
    y = 1.0 - poly * jnp.exp(-ax * ax)
    return jnp.where(x >= 0, y, -y)


def _gelu(x):  # exact (erf) GELU, matching nn.GELU()
    return 0.5 * x * (1.0 + _erf(x * _SQRT1_2))


def _spatial_layernorm(x, eps=1e-5):
    # x: (N, C).  F.layer_norm(x_nchw, [H, W]) == per-channel norm over N spatial pos.
    # Single pass: var = E[x^2] - mean^2 (halves the cross-sublane reductions).
    inv_n = 1.0 / x.shape[0]
    mean = jnp.sum(x, axis=0, keepdims=True) * inv_n
    ex2 = jnp.sum(x * x, axis=0, keepdims=True) * inv_n
    var = jnp.maximum(ex2 - mean * mean, 0.0)
    return (x - mean) * lax.rsqrt(var + eps)


def _shift_rows(x, s):
    """y[i, :] = x[(i + s) % N, :] via an XLU sublane rotation.

    pltpu.roll follows the jnp.roll convention (roll(x, k)[i] = x[i - k]); wrapped
    rows are zeroed by the caller's position masks.
    """
    n = x.shape[0]
    amt = (-s) % n
    if amt == 0:
        return x
    return pltpu.roll(x, shift=amt, axis=0)


def _dwconv3x3(x, w9, b, msk, W):
    """Depthwise 3x3, stride 1, pad 1 on a row-major (N, C) slab via sublane rolls.

    w9: (9, C) with tap index k = (dy+1)*3 + (dx+1); b: (1, C);
    msk: (N, 16) host-precomputed per-tap output-position validity masks (cols 0..8).
    """
    acc = b + x * w9[4:5, :]                       # centre tap, always valid
    for dy in (-1, 0, 1):
        for dx in (-1, 0, 1):
            if dy == 0 and dx == 0:
                continue
            k = (dy + 1) * 3 + (dx + 1)
            tap = _shift_rows(x, dy * W + dx) * msk[:, k:k + 1]
            acc = acc + tap * w9[k:k + 1, :]
    return acc


# ---------------------------------------------------------------------------
# fused kernel: norm2 + stacked split-channel Mamba + fc1/DWConv/GELU/fc2/DWConv
# ---------------------------------------------------------------------------
def _ucm_block2_kernel(x_ref, gm_ref, lnw_ref, lnb_ref,
                       wfu_ref, b1_ref, cw_ref, cb_ref, dtb_ref, wssm_ref,
                       tT_ref, na_ref, fF_ref, dpar_ref, wo_ref,
                       w2_ref, b2_ref, dww_ref, dwb_ref, dw1w_ref, dw1b_ref,
                       msk_ref,
                       o_ref, dah_sc, dbu_sc,
                       *, W, P, di, DS, hidden, K, CH):
    N = x_ref.shape[1]
    D2 = P * 2 * di           # lanes of the stacked x_in / z / dt / u slabs
    S2 = P * 2 * DS           # lanes of the stacked SSM state
    PH = P * hidden
    msk = msk_ref[...]

    # ---- norm2: per-(batch, token) LayerNorm over that batch's C lanes ----------
    x = x_ref[0]                                              # (N, P*C)
    gm = gm_ref[...]                                          # block-diag 1/C matrix
    mean = jnp.dot(x, gm, preferred_element_type=jnp.float32)
    ex2 = jnp.dot(x * x, gm, preferred_element_type=jnp.float32)
    var = jnp.maximum(ex2 - mean * mean, 0.0)
    xn = (x - mean) * lax.rsqrt(var + 1e-5) * lnw_ref[...] + lnb_ref[...]
    xn16 = xn.astype(jnp.bfloat16)

    # ---- one MXU launch for everything that consumes norm2(x): [x_in | z | fc1] ----
    fused = jnp.dot(xn16, wfu_ref[...], preferred_element_type=jnp.float32)
    xin = fused[:, 0:D2]
    z = fused[:, D2:2 * D2]
    hid = fused[:, 2 * D2:2 * D2 + PH] + b1_ref[...]

    # ---- causal depthwise conv1d along tokens (both halves / batches lane-stacked) --
    cw = cw_ref[...]
    acc = cb_ref[...] + xin * cw[K - 1:K, :]
    for d in range(1, K):
        tap = _shift_rows(xin, -d) * msk[:, 9 + d - 1:9 + d]
        acc = acc + tap * cw[K - 1 - d:K - d, :]
    u = _silu(acc)                                            # (N, D2)

    # ---- fused input-dependent SSM parameters: [dt | B | C] in one matmul ----------
    ssm = jnp.dot(u.astype(jnp.bfloat16), wssm_ref[...],
                  preferred_element_type=jnp.float32)
    delta = _softplus(ssm[:, 0:D2] + dtb_ref[...])
    Bx = ssm[:, D2:D2 + S2]
    Cx = ssm[:, D2 + S2:D2 + 2 * S2]

    # broadcast delta / delta*u across d_state with a single stacked 0/1 matmul (exact)
    tiled = jnp.dot(jnp.concatenate([delta, delta * u], axis=0), tT_ref[...],
                    preferred_element_type=jnp.float32)       # (2N, S2)
    dah_sc[...] = jnp.exp(tiled[0:N, :] * na_ref[...])        # exp(dt*A)
    dbu_sc[...] = tiled[N:2 * N, :] * Bx                      # dt*B*u

    # ---- chunked selective scan: both halves + packed batches ride one recurrence ---
    def chunk(ci, h):
        base = pl.multiple_of(ci * CH, CH)
        rows = []
        for r in range(CH):                                   # unrolled recurrence
            h = dah_sc[pl.ds(base + r, 1), :] * h + dbu_sc[pl.ds(base + r, 1), :]
            rows.append(h)
        # single aligned (CH, S2) writeback of the hidden states for this chunk
        dah_sc[pl.ds(base, CH), :] = jnp.concatenate(rows, axis=0)
        return h

    lax.fori_loop(0, N // CH, chunk, jnp.zeros((1, S2), jnp.float32))

    # ---- y = sum_states h*C (0/1 matmul), + D*u, SiLU gate, out-project -------------
    y = jnp.dot(dah_sc[...] * Cx, fF_ref[...], preferred_element_type=jnp.float32)
    y = (y + u * dpar_ref[...]) * _silu(z)
    x1 = xn + jnp.dot(y.astype(jnp.bfloat16), wo_ref[...],
                      preferred_element_type=jnp.float32)     # xn + mamba_cat

    # ---- fc1(done) -> spatial-LN -> DWConv -> GELU -> fc2 -> spatial-LN -> DWConv ---
    hid = _spatial_layernorm(hid)
    hid = _dwconv3x3(hid, dww_ref[...], dwb_ref[...], msk, W)
    hid = _gelu(hid)
    hid = jnp.dot(hid.astype(jnp.bfloat16), w2_ref[...],
                  preferred_element_type=jnp.float32) + b2_ref[...]
    hid = _spatial_layernorm(hid)
    hid = _dwconv3x3(hid, dw1w_ref[...], dw1b_ref[...], msk, W)

    # x += x1 ; x = x + DropPath(x)  (drop_path == 0 -> Identity)  =>  2 * (mlp + x1)
    o_ref[0] = (2.0 * (hid + x1)).astype(o_ref.dtype)


# ---------------------------------------------------------------------------
# wrapper: host-side weight packing + pallas_call
# ---------------------------------------------------------------------------
def ucm_block2_forward(x, H, W, params):
    """x: (B, N, C) float32 with N == H * W.  Returns (B, N, C) float32."""
    B, N, C = x.shape
    assert N == H * W and C % 2 == 0
    f32, b16 = jnp.float32, jnp.bfloat16

    m = [params["mamba1"], params["mamba2"]]
    half = C // 2
    di = m[0]["winx_t"].shape[1]
    ns = m[0]["wb_t"].shape[1]
    DS = ns * di
    hidden = params["w1_t"].shape[1]
    K = m[0]["conv_w"].shape[0]
    assert hidden == C, "reference forward requires mlp_hidden_dim == dim"
    assert K <= 8

    # lane packing: put P batch elements side by side on the lane axis so the working
    # slab / output store is as lane-dense as possible.
    P = max(1, min(B, 128 // C)) if C <= 128 else 1
    B_pad = ((B + P - 1) // P) * P
    G = B_pad // P
    PC, D2, S2, PH = P * C, P * 2 * di, P * 2 * DS, P * hidden

    # scan chunk size: biggest of 8/4/2/1 that divides N and keeps one chunk's
    # writeback slab within ~half the vreg file.
    CH = 1
    for cand in (8, 4, 2):
        if N % cand == 0 and cand * S2 <= 4096:
            CH = cand
            break

    # ---- host-side weight packing (block-diagonal over packed batches / halves) ----
    gm = jnp.kron(jnp.eye(P, dtype=f32), jnp.full((C, C), 1.0 / C, f32))
    lnw_p = jnp.tile(params["ln_w"], (1, P))
    lnb_p = jnp.tile(params["ln_b"], (1, P))

    # fused in-projection producing [x_in | z | fc1-hidden] with one matmul
    wfu = jnp.zeros((PC, 2 * D2 + PH), f32)
    for p in range(P):
        for h in range(2):
            r0 = p * C + h * half
            c0 = p * 2 * di + h * di
            wfu = wfu.at[r0:r0 + half, c0:c0 + di].set(m[h]["winx_t"])
            wfu = wfu.at[r0:r0 + half, D2 + c0:D2 + c0 + di].set(m[h]["winz_t"])
        wfu = wfu.at[p * C:(p + 1) * C,
                     2 * D2 + p * hidden:2 * D2 + (p + 1) * hidden].set(params["w1_t"])
    wfu = wfu.astype(b16)
    b1_p = jnp.tile(params["b1"], (1, P))

    # causal conv1d weights / bias (depthwise -> lane-tiled)
    cw_p = jnp.tile(jnp.concatenate([m[0]["conv_w"], m[1]["conv_w"]], axis=1), (1, P))
    cb_p = jnp.tile(jnp.concatenate([m[0]["conv_b"], m[1]["conv_b"]], axis=1), (1, P))

    # fused SSM projection producing [dt | B | C]; the low-rank dt projection is folded
    wssm = jnp.zeros((D2, D2 + 2 * S2), f32)
    for p in range(P):
        for h in range(2):
            r0 = p * 2 * di + h * di
            s0 = p * 2 * DS + h * DS
            wssm = wssm.at[r0:r0 + di, r0:r0 + di].set(m[h]["wdtin_t"] @ m[h]["wdt_t"])
            wssm = wssm.at[r0:r0 + di, D2 + s0:D2 + s0 + DS].set(
                jnp.repeat(m[h]["wb_t"], di, axis=1))
            wssm = wssm.at[r0:r0 + di, D2 + S2 + s0:D2 + S2 + s0 + DS].set(
                jnp.repeat(m[h]["wc_t"], di, axis=1))
    wssm = wssm.astype(b16)
    dtb_p = jnp.tile(jnp.concatenate([m[0]["dt_b"], m[1]["dt_b"]], axis=1), (1, P))

    # 0/1 state-broadcast / state-sum matrices (kept f32 so they stay exact)
    tT_p = jnp.kron(jnp.eye(2 * P, dtype=f32),
                    jnp.tile(jnp.eye(di, dtype=f32), (1, ns)))        # (D2, S2)
    fF_p = jnp.kron(jnp.eye(2 * P, dtype=f32),
                    jnp.tile(jnp.eye(di, dtype=f32), (ns, 1)))        # (S2, D2)
    na_p = jnp.tile(jnp.concatenate(
        [(-jnp.exp(m[h]["alog_t"])).reshape(1, DS) for h in range(2)], axis=1), (1, P))
    dp_p = jnp.tile(jnp.concatenate([m[0]["d"], m[1]["d"]], axis=1), (1, P))

    wo_p = jnp.zeros((D2, PC), f32)
    for p in range(P):
        for h in range(2):
            wo_p = wo_p.at[p * 2 * di + h * di:p * 2 * di + (h + 1) * di,
                           p * C + h * half:p * C + (h + 1) * half].set(m[h]["wout_t"])
    wo_p = wo_p.astype(b16)

    w2_p = jnp.kron(jnp.eye(P, dtype=f32), params["w2_t"]).astype(b16)
    b2_p = jnp.tile(params["b2"], (1, P))
    dww_p = jnp.tile(params["dw_w"], (1, P))
    dwb_p = jnp.tile(params["dw_b"], (1, P))
    dw1w_p = jnp.tile(params["dw1_w"], (1, P))
    dw1b_p = jnp.tile(params["dw1_b"], (1, P))

    # ---- precomputed position masks: cols 0..8 dwconv taps, 9..9+K-2 causal conv ----
    pos = jnp.arange(N, dtype=jnp.int32)
    colp, rowp = pos % W, pos // W
    cols = []
    for dy in (-1, 0, 1):
        for dx in (-1, 0, 1):
            ok = jnp.ones((N,), bool)
            if dy == -1:
                ok = ok & (rowp >= 1)
            elif dy == 1:
                ok = ok & (rowp <= H - 2)
            if dx == -1:
                ok = ok & (colp >= 1)
            elif dx == 1:
                ok = ok & (colp <= W - 2)
            cols.append(ok)
    for d in range(1, K):
        cols.append(pos >= d)
    while len(cols) < 16:
        cols.append(jnp.ones((N,), bool))
    maskc = jnp.stack(cols, axis=1).astype(f32)               # (N, 16)

    const_args = (gm, lnw_p, lnb_p, wfu, b1_p, cw_p, cb_p, dtb_p, wssm,
                  tT_p, na_p, fF_p, dp_p, wo_p, w2_p, b2_p,
                  dww_p, dwb_p, dw1w_p, dw1b_p, maskc)

    # ---- lane-pack the batch: (B, N, C) -> (G, N, P*C) ----
    if B_pad != B:
        x = jnp.concatenate([x, jnp.zeros((B_pad - B, N, C), x.dtype)], axis=0)
    xp = x.reshape(G, P, N, C).transpose(0, 2, 1, 3).reshape(G, N, PC)

    def _rep_spec(a):
        nd = a.ndim
        return pl.BlockSpec(a.shape, lambda b, nd=nd: (0,) * nd)

    # TODO(synk): for v7x with G == 1 add a second "parallel" grid axis over row tiles
    # of N (1-row halo for the 3x3 dwconv) so both TensorCores stay busy, and consider
    # pipeline_mode=pl.Buffered(1) on the weight specs to trim VMEM at production dims.
    out = pl.pallas_call(
        functools.partial(_ucm_block2_kernel, W=W, P=P, di=di, DS=DS,
                          hidden=hidden, K=K, CH=CH),
        out_shape=jax.ShapeDtypeStruct((G, N, PC), f32),
        grid=(G,),
        in_specs=[pl.BlockSpec((1, N, PC), lambda b: (b, 0, 0))]
                 + [_rep_spec(a) for a in const_args],
        out_specs=pl.BlockSpec((1, N, PC), lambda b: (b, 0, 0)),
        scratch_shapes=[pltpu.VMEM((N, S2), f32),     # exp(dt*A), overwritten with h_t
                        pltpu.VMEM((N, S2), f32)],    # dt*B*u
        compiler_params=pltpu.CompilerParams(
            dimension_semantics=("parallel",),
            vmem_limit_bytes=32 * 1024 * 1024),
    )(xp, *const_args)

    out = out.reshape(G, N, P, C).transpose(0, 2, 1, 3).reshape(B_pad, N, C)
    return out[:B]


# ---------------------------------------------------------------------------
# deterministic synthetic parameters (shapes follow the module's __init__)
# ---------------------------------------------------------------------------
def _init_mamba_params(key, d_model, d_state=4, d_conv=4, expand=2):
    d_inner = expand * d_model
    dt_rank = max(1, math.ceil(d_model / 16))
    ks = jax.random.split(key, 9)
    std = 0.02
    return {
        "winx_t": std * jax.random.normal(ks[0], (d_model, d_inner), jnp.float32),
        "winz_t": std * jax.random.normal(ks[1], (d_model, d_inner), jnp.float32),
        "conv_w": 0.2 * jax.random.normal(ks[2], (d_conv, d_inner), jnp.float32),
        "conv_b": 0.05 * jax.random.normal(ks[3], (1, d_inner), jnp.float32),
        "wdtin_t": std * jax.random.normal(ks[4], (d_inner, dt_rank), jnp.float32),
        "wb_t": std * jax.random.normal(ks[5], (d_inner, d_state), jnp.float32),
        "wc_t": std * jax.random.normal(ks[6], (d_inner, d_state), jnp.float32),
        "wdt_t": std * jax.random.normal(ks[7], (dt_rank, d_inner), jnp.float32),
        "dt_b": jnp.zeros((1, d_inner), jnp.float32),   # _init_weights zeroes biases
        "alog_t": jnp.tile(jnp.log(jnp.arange(1, d_state + 1,
                                              dtype=jnp.float32))[:, None],
                           (1, d_inner)),               # S4D-real A_log
        "d": jnp.ones((1, d_inner), jnp.float32),
        "wout_t": std * jax.random.normal(ks[8], (d_inner, d_model), jnp.float32),
    }


def init_params(key, dim, mlp_ratio=1.0):
    hidden = int(dim * mlp_ratio)
    assert hidden == dim, "reference forward requires mlp_hidden_dim == dim"
    ks = jax.random.split(key, 8)
    std = 0.02
    conv_std = math.sqrt(2.0 / 9.0)
    return {
        "ln_w": jnp.ones((1, dim), jnp.float32),
        "ln_b": jnp.zeros((1, dim), jnp.float32),
        "w1_t": std * jax.random.normal(ks[0], (dim, hidden), jnp.float32),
        "b1": jnp.zeros((1, hidden), jnp.float32),
        "dw_w": conv_std * jax.random.normal(ks[1], (9, hidden), jnp.float32),
        "dw_b": jnp.zeros((1, hidden), jnp.float32),
        "w2_t": std * jax.random.normal(ks[2], (hidden, dim), jnp.float32),
        "b2": jnp.zeros((1, dim), jnp.float32),
        "dw1_w": conv_std * jax.random.normal(ks[3], (9, dim), jnp.float32),
        "dw1_b": jnp.zeros((1, dim), jnp.float32),
        "mamba1": _init_mamba_params(ks[4], hidden // 2, 4, 4, 2),
        "mamba2": _init_mamba_params(ks[5], hidden // 2, 4, 4, 2),
    }


# ---------------------------------------------------------------------------
# pure-JAX (non-Pallas) reference, used as a cross-check.  The projections use the
# same bf16-operand / f32-accumulate numerics as the kernel; everything else is f32.
# ---------------------------------------------------------------------------
def _bdot(a, b):
    return jnp.dot(a.astype(jnp.bfloat16), b.astype(jnp.bfloat16),
                   preferred_element_type=jnp.float32)


def _ref_dwconv(x_bchw, w9, bias):
    B, C, H, W = x_bchw.shape
    xp = jnp.pad(x_bchw, ((0, 0), (0, 0), (1, 1), (1, 1)))
    out = jnp.zeros_like(x_bchw) + bias.reshape(1, C, 1, 1)
    for dy in (-1, 0, 1):
        for dx in (-1, 0, 1):
            k = (dy + 1) * 3 + (dx + 1)
            patch = xp[:, :, 1 + dy:1 + dy + H, 1 + dx:1 + dx + W]
            out = out + patch * w9[k].reshape(1, C, 1, 1)
    return out


def _ref_spatial_ln(x_bchw, eps=1e-5):
    mn = x_bchw.mean(axis=(2, 3), keepdims=True)
    v = ((x_bchw - mn) ** 2).mean(axis=(2, 3), keepdims=True)
    return (x_bchw - mn) / jnp.sqrt(v + eps)


def _ref_mamba(x, p):
    B, L, _ = x.shape
    xin = _bdot(x, p["winx_t"])
    z = _bdot(x, p["winz_t"])
    K = p["conv_w"].shape[0]
    xpad = jnp.pad(xin, ((0, 0), (K - 1, 0), (0, 0)))
    acc = jnp.zeros_like(xin) + p["conv_b"][None]
    for k in range(K):
        acc = acc + xpad[:, k:k + L, :] * p["conv_w"][k][None, None, :]
    u = acc * jax.nn.sigmoid(acc)
    delta = jax.nn.softplus(_bdot(u, p["wdtin_t"] @ p["wdt_t"]) + p["dt_b"][None])
    Bm = _bdot(u, p["wb_t"])
    Cm = _bdot(u, p["wc_t"])
    A = -jnp.exp(p["alog_t"])                       # (d_state, d_inner)

    def scan_fn(h, inp):
        d_t, u_t, b_t, c_t = inp
        dA = jnp.exp(d_t[:, None, :] * A[None])
        h = dA * h + d_t[:, None, :] * b_t[:, :, None] * u_t[:, None, :]
        return h, jnp.sum(h * c_t[:, :, None], axis=1)

    h0 = jnp.zeros((B, A.shape[0], A.shape[1]), jnp.float32)
    _, ys = lax.scan(scan_fn, h0,
                     (jnp.swapaxes(delta, 0, 1), jnp.swapaxes(u, 0, 1),
                      jnp.swapaxes(Bm, 0, 1), jnp.swapaxes(Cm, 0, 1)))
    y = jnp.swapaxes(ys, 0, 1)
    y = y + u * p["d"][None]
    y = y * (z * jax.nn.sigmoid(z))
    return _bdot(y, p["wout_t"])


def _ref_forward(x, H, W, p):
    B, N, C = x.shape
    mn = x.mean(-1, keepdims=True)
    v = ((x - mn) ** 2).mean(-1, keepdims=True)
    xn = (x - mn) / jnp.sqrt(v + 1e-5) * p["ln_w"][None] + p["ln_b"][None]
    half = C // 2
    mcat = jnp.concatenate([_ref_mamba(xn[..., :half], p["mamba1"]),
                            _ref_mamba(xn[..., half:], p["mamba2"])], axis=-1)
    x1 = xn + mcat

    h = _bdot(xn, p["w1_t"]) + p["b1"][None]
    hidden = h.shape[-1]
    img = jnp.swapaxes(h, 1, 2).reshape(B, hidden, H, W)
    img = _ref_dwconv(_ref_spatial_ln(img), p["dw_w"], p["dw_b"][0])
    h = jnp.swapaxes(img.reshape(B, hidden, N), 1, 2)
    h = 0.5 * h * (1.0 + jax.scipy.special.erf(h * _SQRT1_2))
    h = _bdot(h, p["w2_t"]) + p["b2"][None]
    img = jnp.swapaxes(h, 1, 2).reshape(B, C, H, W)
    img = _ref_dwconv(_ref_spatial_ln(img), p["dw1_w"], p["dw1_b"][0])
    h = jnp.swapaxes(img.reshape(B, C, N), 1, 2)
    return 2.0 * (h + x1)


# ---------------------------------------------------------------------------
if __name__ == "__main__":
    B, dim, H, W = 2, 32, 8, 8
    N = H * W

    key = jax.random.PRNGKey(0)
    kx, kp = jax.random.split(key)
    x = jax.random.normal(kx, (B, N, dim), jnp.float32)
    params = init_params(kp, dim, mlp_ratio=1.0)

    out = jax.block_until_ready(ucm_block2_forward(x, H, W, params))
    assert out.shape == (B, N, dim)
    assert bool(jnp.all(jnp.isfinite(out)))

    ref = _ref_forward(x, H, W, params)
    err = float(jnp.max(jnp.abs(out - ref)))
    # Tolerance covers bf16-operand matmul rounding, the erf polynomial and the
    # approximate EUP reciprocals used inside the kernel (values are O(1)).
    assert err < 3e-2, f"mismatch vs pure-JAX reference: max abs err = {err}"
    print("KERNEL_OK")
</pallas_src>

<mosaic_0001>
module attributes {stable_mosaic.version = 11 : i64} {
  func.func @_ucm_block2_kernel(%arg0: i32, %arg1: memref<1x64x64xf32, #tpu.memory_space<vmem>>, %arg2: memref<64x64xf32, #tpu.memory_space<vmem>>, %arg3: memref<1x64xf32, #tpu.memory_space<vmem>>, %arg4: memref<1x64xf32, #tpu.memory_space<vmem>>, %arg5: memref<64x320xbf16, #tpu.memory_space<vmem>>, %arg6: memref<1x64xf32, #tpu.memory_space<vmem>>, %arg7: memref<4x128xf32, #tpu.memory_space<vmem>>, %arg8: memref<1x128xf32, #tpu.memory_space<vmem>>, %arg9: memref<1x128xf32, #tpu.memory_space<vmem>>, %arg10: memref<128x1152xbf16, #tpu.memory_space<vmem>>, %arg11: memref<128x512xf32, #tpu.memory_space<vmem>>, %arg12: memref<1x512xf32, #tpu.memory_space<vmem>>, %arg13: memref<512x128xf32, #tpu.memory_space<vmem>>, %arg14: memref<1x128xf32, #tpu.memory_space<vmem>>, %arg15: memref<128x64xbf16, #tpu.memory_space<vmem>>, %arg16: memref<64x64xbf16, #tpu.memory_space<vmem>>, %arg17: memref<1x64xf32, #tpu.memory_space<vmem>>, %arg18: memref<9x64xf32, #tpu.memory_space<vmem>>, %arg19: memref<1x64xf32, #tpu.memory_space<vmem>>, %arg20: memref<9x64xf32, #tpu.memory_space<vmem>>, %arg21: memref<1x64xf32, #tpu.memory_space<vmem>>, %arg22: memref<64x16xf32, #tpu.memory_space<vmem>>, %arg23: memref<1x64x64xf32, #tpu.memory_space<vmem>>, %arg24: memref<64x512xf32, #tpu.memory_space<vmem>>, %arg25: memref<64x512xf32, #tpu.memory_space<vmem>>) attributes {dimension_semantics = [#tpu.dimension_semantics<parallel>], iteration_bounds = array<i64: 1>, scalar_prefetch = 0 : i64, scratch_operands = 2 : i64, tpu.core_type = #tpu.core_type<tc>, window_params = [{transform_indices = @transform_0, window_bounds = array<i64: 1, 64, 64>}, {pipeline_mode = #tpu.pipeline_mode<synchronous>, transform_indices = @transform_1, window_bounds = array<i64: 64, 64>}, {pipeline_mode = #tpu.pipeline_mode<synchronous>, transform_indices = @transform_2, window_bounds = array<i64: 1, 64>}, {pipeline_mode = #tpu.pipeline_mode<synchronous>, transform_indices = @transform_3, window_bounds = array<i64: 1, 64>}, {pipeline_mode = #tpu.pipeline_mode<synchronous>, transform_indices = @transform_4, window_bounds = array<i64: 64, 320>}, {pipeline_mode = #tpu.pipeline_mode<synchronous>, transform_indices = @transform_5, window_bounds = array<i64: 1, 64>}, {pipeline_mode = #tpu.pipeline_mode<synchronous>, transform_indices = @transform_6, window_bounds = array<i64: 4, 128>}, {pipeline_mode = #tpu.pipeline_mode<synchronous>, transform_indices = @transform_7, window_bounds = array<i64: 1, 128>}, {pipeline_mode = #tpu.pipeline_mode<synchronous>, transform_indices = @transform_8, window_bounds = array<i64: 1, 128>}, {pipeline_mode = #tpu.pipeline_mode<synchronous>, transform_indices = @transform_9, window_bounds = array<i64: 128, 1152>}, {pipeline_mode = #tpu.pipeline_mode<synchronous>, transform_indices = @transform_10, window_bounds = array<i64: 128, 512>}, {pipeline_mode = #tpu.pipeline_mode<synchronous>, transform_indices = @transform_11, window_bounds = array<i64: 1, 512>}, {pipeline_mode = #tpu.pipeline_mode<synchronous>, transform_indices = @transform_12, window_bounds = array<i64: 512, 128>}, {pipeline_mode = #tpu.pipeline_mode<synchronous>, transform_indices = @transform_13, window_bounds = array<i64: 1, 128>}, {pipeline_mode = #tpu.pipeline_mode<synchronous>, transform_indices = @transform_14, window_bounds = array<i64: 128, 64>}, {pipeline_mode = #tpu.pipeline_mode<synchronous>, transform_indices = @transform_15, window_bounds = array<i64: 64, 64>}, {pipeline_mode = #tpu.pipeline_mode<synchronous>, transform_indices = @transform_16, window_bounds = array<i64: 1, 64>}, {pipeline_mode = #tpu.pipeline_mode<synchronous>, transform_indices = @transform_17, window_bounds = array<i64: 9, 64>}, {pipeline_mode = #tpu.pipeline_mode<synchronous>, transform_indices = @transform_18, window_bounds = array<i64: 1, 64>}, {pipeline_mode = #tpu.pipeline_mode<synchronous>, transform_indices = @transform_19, window_bounds = array<i64: 9, 64>}, {pipeline_mode = #tpu.pipeline_mode<synchronous>, transform_indices = @transform_20, window_bounds = array<i64: 1, 64>}, {pipeline_mode = #tpu.pipeline_mode<synchronous>, transform_indices = @transform_21, window_bounds = array<i64: 64, 16>}, {transform_indices = @transform_22, window_bounds = array<i64: 1, 64, 64>}]} {
    %c0 = arith.constant 0 : index
    %c0_0 = arith.constant 0 : index
    %0 = vector.load %arg22[%c0, %c0_0] : memref<64x16xf32, #tpu.memory_space<vmem>>, vector<64x16xf32>
    %c0_1 = arith.constant 0 : index
    %c0_2 = arith.constant 0 : index
    %c0_3 = arith.constant 0 : index
    %1 = vector.load %arg1[%c0_1, %c0_2, %c0_3] : memref<1x64x64xf32, #tpu.memory_space<vmem>>, vector<1x64x64xf32>
    %2 = vector.shape_cast %1 : vector<1x64x64xf32> to vector<64x64xf32>
    %c0_4 = arith.constant 0 : index
    %c0_5 = arith.constant 0 : index
    %3 = vector.load %arg2[%c0_4, %c0_5] : memref<64x64xf32, #tpu.memory_space<vmem>>, vector<64x64xf32>
    %cst = arith.constant dense<0.000000e+00> : vector<64x64xf32>
    %4 = tpu.matmul %2, %3, %cst {dimension_numbers = #tpu.dot_dimension_numbers<[1], [0], [0], [1], [0, 0, 1, 1], [], []>} : vector<64x64xf32>, vector<64x64xf32>, vector<64x64xf32> -> vector<64x64xf32>
    %5 = arith.mulf %2, %2 : vector<64x64xf32>
    %cst_6 = arith.constant dense<0.000000e+00> : vector<64x64xf32>
    %6 = tpu.matmul %5, %3, %cst_6 {dimension_numbers = #tpu.dot_dimension_numbers<[1], [0], [0], [1], [0, 0, 1, 1], [], []>} : vector<64x64xf32>, vector<64x64xf32>, vector<64x64xf32> -> vector<64x64xf32>
    %7 = arith.mulf %4, %4 : vector<64x64xf32>
    %8 = arith.subf %6, %7 : vector<64x64xf32>
    %cst_7 = arith.constant 0.000000e+00 : f32
    %9 = vector.broadcast %cst_7 : f32 to vector<64x64xf32>
    %10 = arith.maximumf %8, %9 : vector<64x64xf32>
    %11 = arith.subf %2, %4 : vector<64x64xf32>
    %cst_8 = arith.constant 9.99999974E-6 : f32
    %12 = vector.broadcast %cst_8 : f32 to vector<64x64xf32>
    %13 = arith.addf %10, %12 : vector<64x64xf32>
    %14 = math.rsqrt %13 : vector<64x64xf32>
    %15 = arith.mulf %11, %14 : vector<64x64xf32>
    %c0_9 = arith.constant 0 : index
    %c0_10 = arith.constant 0 : index
    %16 = vector.load %arg3[%c0_9, %c0_10] : memref<1x64xf32, #tpu.memory_space<vmem>>, vector<1x64xf32>
    %17 = vector.broadcast %16 : vector<1x64xf32> to vector<64x64xf32>
    %18 = arith.mulf %15, %17 : vector<64x64xf32>
    %c0_11 = arith.constant 0 : index
    %c0_12 = arith.constant 0 : index
    %19 = vector.load %arg4[%c0_11, %c0_12] : memref<1x64xf32, #tpu.memory_space<vmem>>, vector<1x64xf32>
    %20 = vector.broadcast %19 : vector<1x64xf32> to vector<64x64xf32>
    %21 = arith.addf %18, %20 : vector<64x64xf32>
    %22 = arith.truncf %21 : vector<64x64xf32> to vector<64x64xbf16>
    %c0_13 = arith.constant 0 : index
    %c0_14 = arith.constant 0 : index
    %23 = vector.load %arg5[%c0_13, %c0_14] : memref<64x320xbf16, #tpu.memory_space<vmem>>, vector<64x320xbf16>
    %cst_15 = arith.constant dense<0.000000e+00> : vector<64x320xf32>
    %24 = tpu.matmul %22, %23, %cst_15 {dimension_numbers = #tpu.dot_dimension_numbers<[1], [0], [0], [1], [0, 0, 1, 1], [], []>} : vector<64x64xbf16>, vector<64x320xbf16>, vector<64x320xf32> -> vector<64x320xf32>
    %25 = vector.extract_strided_slice %24 {offsets = [0, 0], sizes = [64, 128], strides = [1, 1]} : vector<64x320xf32> to vector<64x128xf32>
    %26 = vector.extract_strided_slice %24 {offsets = [0, 128], sizes = [64, 128], strides = [1, 1]} : vector<64x320xf32> to vector<64x128xf32>
    %27 = vector.extract_strided_slice %24 {offsets = [0, 256], sizes = [64, 64], strides = [1, 1]} : vector<64x320xf32> to vector<64x64xf32>
    %c0_16 = arith.constant 0 : index
    %c0_17 = arith.constant 0 : index
    %28 = vector.load %arg6[%c0_16, %c0_17] : memref<1x64xf32, #tpu.memory_space<vmem>>, vector<1x64xf32>
    %29 = vector.broadcast %28 : vector<1x64xf32> to vector<64x64xf32>
    %30 = arith.addf %27, %29 : vector<64x64xf32>
    %c0_18 = arith.constant 0 : index
    %c0_19 = arith.constant 0 : index
    %31 = vector.load %arg7[%c0_18, %c0_19] : memref<4x128xf32, #tpu.memory_space<vmem>>, vector<4x128xf32>
    %c0_20 = arith.constant 0 : index
    %c0_21 = arith.constant 0 : index
    %32 = vector.load %arg8[%c0_20, %c0_21] : memref<1x128xf32, #tpu.memory_space<vmem>>, vector<1x128xf32>
    %33 = vector.extract_strided_slice %31 {offsets = [3, 0], sizes = [1, 128], strides = [1, 1]} : vector<4x128xf32> to vector<1x128xf32>
    %34 = vector.broadcast %33 : vector<1x128xf32> to vector<64x128xf32>
    %35 = arith.mulf %25, %34 : vector<64x128xf32>
    %36 = vector.broadcast %32 : vector<1x128xf32> to vector<64x128xf32>
    %37 = arith.addf %36, %35 : vector<64x128xf32>
    %c1_i32 = arith.constant 1 : i32
    %38 = tpu.dynamic_rotate %25 by %c1_i32 dim 0 : vector<64x128xf32>, i32 -> vector<64x128xf32>
    %39 = vector.extract_strided_slice %0 {offsets = [0, 9], sizes = [64, 1], strides = [1, 1]} : vector<64x16xf32> to vector<64x1xf32>
    %40 = vector.broadcast %39 : vector<64x1xf32> to vector<64x128xf32>
    %41 = arith.mulf %38, %40 : vector<64x128xf32>
    %42 = vector.extract_strided_slice %31 {offsets = [2, 0], sizes = [1, 128], strides = [1, 1]} : vector<4x128xf32> to vector<1x128xf32>
    %43 = vector.broadcast %42 : vector<1x128xf32> to vector<64x128xf32>
    %44 = arith.mulf %41, %43 : vector<64x128xf32>
    %45 = arith.addf %37, %44 : vector<64x128xf32>
    %c2_i32 = arith.constant 2 : i32
    %46 = tpu.dynamic_rotate %25 by %c2_i32 dim 0 : vector<64x128xf32>, i32 -> vector<64x128xf32>
    %47 = vector.extract_strided_slice %0 {offsets = [0, 10], sizes = [64, 1], strides = [1, 1]} : vector<64x16xf32> to vector<64x1xf32>
    %48 = vector.broadcast %47 : vector<64x1xf32> to vector<64x128xf32>
    %49 = arith.mulf %46, %48 : vector<64x128xf32>
    %50 = vector.extract_strided_slice %31 {offsets = [1, 0], sizes = [1, 128], strides = [1, 1]} : vector<4x128xf32> to vector<1x128xf32>
    %51 = vector.broadcast %50 : vector<1x128xf32> to vector<64x128xf32>
    %52 = arith.mulf %49, %51 : vector<64x128xf32>
    %53 = arith.addf %45, %52 : vector<64x128xf32>
    %c3_i32 = arith.constant 3 : i32
    %54 = tpu.dynamic_rotate %25 by %c3_i32 dim 0 : vector<64x128xf32>, i32 -> vector<64x128xf32>
    %55 = vector.extract_strided_slice %0 {offsets = [0, 11], sizes = [64, 1], strides = [1, 1]} : vector<64x16xf32> to vector<64x1xf32>
    %56 = vector.broadcast %55 : vector<64x1xf32> to vector<64x128xf32>
    %57 = arith.mulf %54, %56 : vector<64x128xf32>
    %58 = vector.extract_strided_slice %31 {offsets = [0, 0], sizes = [1, 128], strides = [1, 1]} : vector<4x128xf32> to vector<1x128xf32>
    %59 = vector.broadcast %58 : vector<1x128xf32> to vector<64x128xf32>
    %60 = arith.mulf %57, %59 : vector<64x128xf32>
    %61 = arith.addf %53, %60 : vector<64x128xf32>
    %cst_22 = arith.constant 0.000000e+00 : f32
    %62 = vector.broadcast %cst_22 : f32 to vector<64x128xf32>
    %63 = arith.subf %62, %61 : vector<64x128xf32>
    %64 = math.exp %63 : vector<64x128xf32>
    %cst_23 = arith.constant 1.000000e+00 : f32
    %65 = vector.broadcast %cst_23 : f32 to vector<64x128xf32>
    %66 = arith.addf %65, %64 : vector<64x128xf32>
    %67 = tpu.reciprocal %66 {approx = true} : vector<64x128xf32> -> vector<64x128xf32>
    %68 = arith.mulf %61, %67 : vector<64x128xf32>
    %69 = arith.truncf %68 : vector<64x128xf32> to vector<64x128xbf16>
    %c0_24 = arith.constant 0 : index
    %c0_25 = arith.constant 0 : index
    %70 = vector.load %arg10[%c0_24, %c0_25] : memref<128x1152xbf16, #tpu.memory_space<vmem>>, vector<128x1152xbf16>
    %cst_26 = arith.constant dense<0.000000e+00> : vector<64x1152xf32>
    %71 = tpu.matmul %69, %70, %cst_26 {dimension_numbers = #tpu.dot_dimension_numbers<[1], [0], [0], [1], [0, 0, 1, 1], [], []>} : vector<64x128xbf16>, vector<128x1152xbf16>, vector<64x1152xf32> -> vector<64x1152xf32>
    %72 = vector.extract_strided_slice %71 {offsets = [0, 0], sizes = [64, 128], strides = [1, 1]} : vector<64x1152xf32> to vector<64x128xf32>
    %c0_27 = arith.constant 0 : index
    %c0_28 = arith.constant 0 : index
    %73 = vector.load %arg9[%c0_27, %c0_28] : memref<1x128xf32, #tpu.memory_space<vmem>>, vector<1x128xf32>
    %74 = vector.broadcast %73 : vector<1x128xf32> to vector<64x128xf32>
    %75 = arith.addf %72, %74 : vector<64x128xf32>
    %cst_29 = arith.constant 0.000000e+00 : f32
    %76 = vector.broadcast %cst_29 : f32 to vector<64x128xf32>
    %77 = arith.maximumf %75, %76 : vector<64x128xf32>
    %78 = math.absf %75 : vector<64x128xf32>
    %cst_30 = arith.constant 0.000000e+00 : f32
    %79 = vector.broadcast %cst_30 : f32 to vector<64x128xf32>
    %80 = arith.subf %79, %78 : vector<64x128xf32>
    %81 = math.exp %80 : vector<64x128xf32>
    %cst_31 = arith.constant 1.000000e+00 : f32
    %82 = vector.broadcast %cst_31 : f32 to vector<64x128xf32>
    %83 = arith.addf %82, %81 : vector<64x128xf32>
    %84 = math.log %83 : vector<64x128xf32>
    %85 = arith.addf %77, %84 : vector<64x128xf32>
    %86 = vector.extract_strided_slice %71 {offsets = [0, 128], sizes = [64, 512], strides = [1, 1]} : vector<64x1152xf32> to vector<64x512xf32>
    %87 = vector.extract_strided_slice %71 {offsets = [0, 640], sizes = [64, 512], strides = [1, 1]} : vector<64x1152xf32> to vector<64x512xf32>
    %88 = arith.mulf %85, %68 : vector<64x128xf32>
    %89 = tpu.concatenate %85, %88 in 0 : vector<64x128xf32>, vector<64x128xf32> -> vector<128x128xf32>
    %c0_32 = arith.constant 0 : index
    %c0_33 = arith.constant 0 : index
    %90 = vector.load %arg11[%c0_32, %c0_33] : memref<128x512xf32, #tpu.memory_space<vmem>>, vector<128x512xf32>
    %cst_34 = arith.constant dense<0.000000e+00> : vector<128x512xf32>
    %91 = tpu.matmul %89, %90, %cst_34 {dimension_numbers = #tpu.dot_dimension_numbers<[1], [0], [0], [1], [0, 0, 1, 1], [], []>} : vector<128x128xf32>, vector<128x512xf32>, vector<128x512xf32> -> vector<128x512xf32>
    %92 = vector.extract_strided_slice %91 {offsets = [0, 0], sizes = [64, 512], strides = [1, 1]} : vector<128x512xf32> to vector<64x512xf32>
    %c0_35 = arith.constant 0 : index
    %c0_36 = arith.constant 0 : index
    %93 = vector.load %arg12[%c0_35, %c0_36] : memref<1x512xf32, #tpu.memory_space<vmem>>, vector<1x512xf32>
    %94 = vector.broadcast %93 : vector<1x512xf32> to vector<64x512xf32>
    %95 = arith.mulf %92, %94 : vector<64x512xf32>
    %96 = math.exp %95 : vector<64x512xf32>
    %c0_37 = arith.constant 0 : index
    %c0_38 = arith.constant 0 : index
    %97 = vector.load %arg24[%c0_37, %c0_38] : memref<64x512xf32, #tpu.memory_space<vmem>>, vector<64x512xf32>
    tpu.vector_store %arg24[%c0_37, %c0_38], %96 {strides = array<i32>} : memref<64x512xf32, #tpu.memory_space<vmem>>, vector<64x512xf32>,
    %98 = vector.extract_strided_slice %91 {offsets = [64, 0], sizes = [64, 512], strides = [1, 1]} : vector<128x512xf32> to vector<64x512xf32>
    %99 = arith.mulf %98, %86 : vector<64x512xf32>
    %c0_39 = arith.constant 0 : index
    %c0_40 = arith.constant 0 : index
    %100 = vector.load %arg25[%c0_39, %c0_40] : memref<64x512xf32, #tpu.memory_space<vmem>>, vector<64x512xf32>
    tpu.vector_store %arg25[%c0_39, %c0_40], %99 {strides = array<i32>} : memref<64x512xf32, #tpu.memory_space<vmem>>, vector<64x512xf32>,
    %cst_41 = arith.constant 0.000000e+00 : f32
    %101 = vector.broadcast %cst_41 : f32 to vector<1x512xf32>
    %c0_i32 = arith.constant 0 : i32
    %c8_i32 = arith.constant 8 : i32
    %102 = arith.addi %c0_i32, %c8_i32 : i32
    %c1_i32_42 = arith.constant 1 : i32
    %103 = scf.for %arg26 = %c0_i32 to %102 step %c1_i32_42 iter_args(%arg27 = %101) -> (vector<1x512xf32>)  : i32 {
      %c8_i32_109 = arith.constant 8 : i32
      %357 = arith.muli %arg26, %c8_i32_109 : i32
      %358 = tpu.assume_multiple %357, 8 : i32
      %c0_i32_110 = arith.constant 0 : i32
      %359 = arith.addi %358, %c0_i32_110 : i32
      %360 = arith.index_cast %359 : i32 to index
      %c0_111 = arith.constant 0 : index
      %361 = vector.load %arg24[%360, %c0_111] : memref<64x512xf32, #tpu.memory_space<vmem>>, vector<1x512xf32>
      %362 = arith.mulf %361, %arg27 : vector<1x512xf32>
      %c0_i32_112 = arith.constant 0 : i32
      %363 = arith.addi %358, %c0_i32_112 : i32
      %364 = arith.index_cast %363 : i32 to index
      %c0_113 = arith.constant 0 : index
      %365 = vector.load %arg25[%364, %c0_113] : memref<64x512xf32, #tpu.memory_space<vmem>>, vector<1x512xf32>
      %366 = arith.addf %362, %365 : vector<1x512xf32>
      %c1_i32_114 = arith.constant 1 : i32
      %367 = arith.addi %358, %c1_i32_114 : i32
      %368 = arith.index_cast %367 : i32 to index
      %c0_115 = arith.constant 0 : index
      %369 = vector.load %arg24[%368, %c0_115] : memref<64x512xf32, #tpu.memory_space<vmem>>, vector<1x512xf32>
      %370 = arith.mulf %369, %366 : vector<1x512xf32>
      %c1_i32_116 = arith.constant 1 : i32
      %371 = arith.addi %358, %c1_i32_116 : i32
      %372 = arith.index_cast %371 : i32 to index
      %c0_117 = arith.constant 0 : index
      %373 = vector.load %arg25[%372, %c0_117] : memref<64x512xf32, #tpu.memory_space<vmem>>, vector<1x512xf32>
      %374 = arith.addf %370, %373 : vector<1x512xf32>
      %c2_i32_118 = arith.constant 2 : i32
      %375 = arith.addi %358, %c2_i32_118 : i32
      %376 = arith.index_cast %375 : i32 to index
      %c0_119 = arith.constant 0 : index
      %377 = vector.load %arg24[%376, %c0_119] : memref<64x512xf32, #tpu.memory_space<vmem>>, vector<1x512xf32>
      %378 = arith.mulf %377, %374 : vector<1x512xf32>
      %c2_i32_120 = arith.constant 2 : i32
      %379 = arith.addi %358, %c2_i32_120 : i32
      %380 = arith.index_cast %379 : i32 to index
      %c0_121 = arith.constant 0 : index
      %381 = vector.load %arg25[%380, %c0_121] : memref<64x512xf32, #tpu.memory_space<vmem>>, vector<1x512xf32>
      %382 = arith.addf %378, %381 : vector<1x512xf32>
      %c3_i32_122 = arith.constant 3 : i32
      %383 = arith.addi %358, %c3_i32_122 : i32
      %384 = arith.index_cast %383 : i32 to index
      %c0_123 = arith.constant 0 : index
      %385 = vector.load %arg24[%384, %c0_123] : memref<64x512xf32, #tpu.memory_space<vmem>>, vector<1x512xf32>
      %386 = arith.mulf %385, %382 : vector<1x512xf32>
      %c3_i32_124 = arith.constant 3 : i32
      %387 = arith.addi %358, %c3_i32_124 : i32
      %388 = arith.index_cast %387 : i32 to index
      %c0_125 = arith.constant 0 : index
      %389 = vector.load %arg25[%388, %c0_125] : memref<64x512xf32, #tpu.memory_space<vmem>>, vector<1x512xf32>
      %390 = arith.addf %386, %389 : vector<1x512xf32>
      %c4_i32 = arith.constant 4 : i32
      %391 = arith.addi %358, %c4_i32 : i32
      %392 = arith.index_cast %391 : i32 to index
      %c0_126 = arith.constant 0 : index
      %393 = vector.load %arg24[%392, %c0_126] : memref<64x512xf32, #tpu.memory_space<vmem>>, vector<1x512xf32>
      %394 = arith.mulf %393, %390 : vector<1x512xf32>
      %c4_i32_127 = arith.constant 4 : i32
      %395 = arith.addi %358, %c4_i32_127 : i32
      %396 = arith.index_cast %395 : i32 to index
      %c0_128 = arith.constant 0 : index
      %397 = vector.load %arg25[%396, %c0_128] : memref<64x512xf32, #tpu.memory_space<vmem>>, vector<1x512xf32>
      %398 = arith.addf %394, %397 : vector<1x512xf32>
      %c5_i32 = arith.constant 5 : i32
      %399 = arith.addi %358, %c5_i32 : i32
      %400 = arith.index_cast %399 : i32 to index
      %c0_129 = arith.constant 0 : index
      %401 = vector.load %arg24[%400, %c0_129] : memref<64x512xf32, #tpu.memory_space<vmem>>, vector<1x512xf32>
      %402 = arith.mulf %401, %398 : vector<1x512xf32>
      %c5_i32_130 = arith.constant 5 : i32
      %403 = arith.addi %358, %c5_i32_130 : i32
      %404 = arith.index_cast %403 : i32 to index
      %c0_131 = arith.constant 0 : index
      %405 = vector.load %arg25[%404, %c0_131] : memref<64x512xf32, #tpu.memory_space<vmem>>, vector<1x512xf32>
      %406 = arith.addf %402, %405 : vector<1x512xf32>
      %c6_i32 = arith.constant 6 : i32
      %407 = arith.addi %358, %c6_i32 : i32
      %408 = arith.index_cast %407 : i32 to index
      %c0_132 = arith.constant 0 : index
      %409 = vector.load %arg24[%408, %c0_132] : memref<64x512xf32, #tpu.memory_space<vmem>>, vector<1x512xf32>
      %410 = arith.mulf %409, %406 : vector<1x512xf32>
      %c6_i32_133 = arith.constant 6 : i32
      %411 = arith.addi %358, %c6_i32_133 : i32
      %412 = arith.index_cast %411 : i32 to index
      %c0_134 = arith.constant 0 : index
      %413 = vector.load %arg25[%412, %c0_134] : memref<64x512xf32, #tpu.memory_space<vmem>>, vector<1x512xf32>
      %414 = arith.addf %410, %413 : vector<1x512xf32>
      %c7_i32_135 = arith.constant 7 : i32
      %415 = arith.addi %358, %c7_i32_135 : i32
      %416 = arith.index_cast %415 : i32 to index
      %c0_136 = arith.constant 0 : index
      %417 = vector.load %arg24[%416, %c0_136] : memref<64x512xf32, #tpu.memory_space<vmem>>, vector<1x512xf32>
      %418 = arith.mulf %417, %414 : vector<1x512xf32>
      %c7_i32_137 = arith.constant 7 : i32
      %419 = arith.addi %358, %c7_i32_137 : i32
      %420 = arith.index_cast %419 : i32 to index
      %c0_138 = arith.constant 0 : index
      %421 = vector.load %arg25[%420, %c0_138] : memref<64x512xf32, #tpu.memory_space<vmem>>, vector<1x512xf32>
      %422 = arith.addf %418, %421 : vector<1x512xf32>
      %423 = tpu.concatenate %366, %374, %382, %390, %398, %406, %414, %422 in 0 : vector<1x512xf32>, vector<1x512xf32>, vector<1x512xf32>, vector<1x512xf32>, vector<1x512xf32>, vector<1x512xf32>, vector<1x512xf32>, vector<1x512xf32> -> vector<8x512xf32>
      %424 = arith.index_cast %358 : i32 to index
      %c0_139 = arith.constant 0 : index
      %425 = vector.load %arg24[%424, %c0_139] : memref<64x512xf32, #tpu.memory_space<vmem>>, vector<8x512xf32>
      tpu.vector_store %arg24[%424, %c0_139], %423 {strides = array<i32>} : memref<64x512xf32, #tpu.memory_space<vmem>>, vector<8x512xf32>,
      scf.yield %422 : vector<1x512xf32>
    }
    %c8_i32_43 = arith.constant 8 : i32
    %c0_44 = arith.constant 0 : index
    %c0_45 = arith.constant 0 : index
    %104 = vector.load %arg24[%c0_44, %c0_45] : memref<64x512xf32, #tpu.memory_space<vmem>>, vector<64x512xf32>
    %105 = arith.mulf %104, %87 : vector<64x512xf32>
    %c0_46 = arith.constant 0 : index
    %c0_47 = arith.constant 0 : index
    %106 = vector.load %arg13[%c0_46, %c0_47] : memref<512x128xf32, #tpu.memory_space<vmem>>, vector<512x128xf32>
    %cst_48 = arith.constant dense<0.000000e+00> : vector<64x128xf32>
    %107 = tpu.matmul %105, %106, %cst_48 {dimension_numbers = #tpu.dot_dimension_numbers<[1], [0], [0], [1], [0, 0, 1, 1], [], []>} : vector<64x512xf32>, vector<512x128xf32>, vector<64x128xf32> -> vector<64x128xf32>
    %c0_49 = arith.constant 0 : index
    %c0_50 = arith.constant 0 : index
    %108 = vector.load %arg14[%c0_49, %c0_50] : memref<1x128xf32, #tpu.memory_space<vmem>>, vector<1x128xf32>
    %109 = vector.broadcast %108 : vector<1x128xf32> to vector<64x128xf32>
    %110 = arith.mulf %68, %109 : vector<64x128xf32>
    %111 = arith.addf %107, %110 : vector<64x128xf32>
    %cst_51 = arith.constant 0.000000e+00 : f32
    %112 = vector.broadcast %cst_51 : f32 to vector<64x128xf32>
    %113 = arith.subf %112, %26 : vector<64x128xf32>
    %114 = math.exp %113 : vector<64x128xf32>
    %cst_52 = arith.constant 1.000000e+00 : f32
    %115 = vector.broadcast %cst_52 : f32 to vector<64x128xf32>
    %116 = arith.addf %115, %114 : vector<64x128xf32>
    %117 = tpu.reciprocal %116 {approx = true} : vector<64x128xf32> -> vector<64x128xf32>
    %118 = arith.mulf %26, %117 : vector<64x128xf32>
    %119 = arith.mulf %111, %118 : vector<64x128xf32>
    %120 = arith.truncf %119 : vector<64x128xf32> to vector<64x128xbf16>
    %c0_53 = arith.constant 0 : index
    %c0_54 = arith.constant 0 : index
    %121 = vector.load %arg15[%c0_53, %c0_54] : memref<128x64xbf16, #tpu.memory_space<vmem>>, vector<128x64xbf16>
    %cst_55 = arith.constant dense<0.000000e+00> : vector<64x64xf32>
    %122 = tpu.matmul %120, %121, %cst_55 {dimension_numbers = #tpu.dot_dimension_numbers<[1], [0], [0], [1], [0, 0, 1, 1], [], []>} : vector<64x128xbf16>, vector<128x64xbf16>, vector<64x64xf32> -> vector<64x64xf32>
    %123 = arith.addf %21, %122 : vector<64x64xf32>
    %cst_56 = arith.constant dense<0.000000e+00> : vector<64xf32>
    %124 = vector.multi_reduction <add>, %30, %cst_56 [0] : vector<64x64xf32> to vector<64xf32>
    %125 = vector.shape_cast %124 : vector<64xf32> to vector<1x64xf32>
    %cst_57 = arith.constant 1.562500e-02 : f32
    %126 = vector.broadcast %cst_57 : f32 to vector<1x64xf32>
    %127 = arith.mulf %125, %126 : vector<1x64xf32>
    %128 = arith.mulf %30, %30 : vector<64x64xf32>
    %cst_58 = arith.constant dense<0.000000e+00> : vector<64xf32>
    %129 = vector.multi_reduction <add>, %128, %cst_58 [0] : vector<64x64xf32> to vector<64xf32>
    %130 = vector.shape_cast %129 : vector<64xf32> to vector<1x64xf32>
    %cst_59 = arith.constant 1.562500e-02 : f32
    %131 = vector.broadcast %cst_59 : f32 to vector<1x64xf32>
    %132 = arith.mulf %130, %131 : vector<1x64xf32>
    %133 = arith.mulf %127, %127 : vector<1x64xf32>
    %134 = arith.subf %132, %133 : vector<1x64xf32>
    %cst_60 = arith.constant 0.000000e+00 : f32
    %135 = vector.broadcast %cst_60 : f32 to vector<1x64xf32>
    %136 = arith.maximumf %134, %135 : vector<1x64xf32>
    %137 = vector.broadcast %127 : vector<1x64xf32> to vector<64x64xf32>
    %138 = arith.subf %30, %137 : vector<64x64xf32>
    %cst_61 = arith.constant 9.99999974E-6 : f32
    %139 = vector.broadcast %cst_61 : f32 to vector<1x64xf32>
    %140 = arith.addf %136, %139 : vector<1x64xf32>
    %141 = math.rsqrt %140 : vector<1x64xf32>
    %142 = vector.broadcast %141 : vector<1x64xf32> to vector<64x64xf32>
    %143 = arith.mulf %138, %142 : vector<64x64xf32>
    %c0_62 = arith.constant 0 : index
    %c0_63 = arith.constant 0 : index
    %144 = vector.load %arg18[%c0_62, %c0_63] : memref<9x64xf32, #tpu.memory_space<vmem>>, vector<9x64xf32>
    %c0_64 = arith.constant 0 : index
    %c0_65 = arith.constant 0 : index
    %145 = vector.load %arg19[%c0_64, %c0_65] : memref<1x64xf32, #tpu.memory_space<vmem>>, vector<1x64xf32>
    %146 = vector.extract_strided_slice %144 {offsets = [4, 0], sizes = [1, 64], strides = [1, 1]} : vector<9x64xf32> to vector<1x64xf32>
    %147 = vector.broadcast %146 : vector<1x64xf32> to vector<64x64xf32>
    %148 = arith.mulf %143, %147 : vector<64x64xf32>
    %149 = vector.broadcast %145 : vector<1x64xf32> to vector<64x64xf32>
    %150 = arith.addf %149, %148 : vector<64x64xf32>
    %c9_i32 = arith.constant 9 : i32
    %151 = tpu.dynamic_rotate %143 by %c9_i32 dim 0 : vector<64x64xf32>, i32 -> vector<64x64xf32>
    %152 = vector.extract_strided_slice %0 {offsets = [0, 0], sizes = [64, 1], strides = [1, 1]} : vector<64x16xf32> to vector<64x1xf32>
    %153 = vector.broadcast %152 : vector<64x1xf32> to vector<64x64xf32>
    %154 = arith.mulf %151, %153 : vector<64x64xf32>
    %155 = vector.extract_strided_slice %144 {offsets = [0, 0], sizes = [1, 64], strides = [1, 1]} : vector<9x64xf32> to vector<1x64xf32>
    %156 = vector.broadcast %155 : vector<1x64xf32> to vector<64x64xf32>
    %157 = arith.mulf %154, %156 : vector<64x64xf32>
    %158 = arith.addf %150, %157 : vector<64x64xf32>
    %c8_i32_66 = arith.constant 8 : i32
    %159 = tpu.dynamic_rotate %143 by %c8_i32_66 dim 0 : vector<64x64xf32>, i32 -> vector<64x64xf32>
    %160 = vector.extract_strided_slice %0 {offsets = [0, 1], sizes = [64, 1], strides = [1, 1]} : vector<64x16xf32> to vector<64x1xf32>
    %161 = vector.broadcast %160 : vector<64x1xf32> to vector<64x64xf32>
    %162 = arith.mulf %159, %161 : vector<64x64xf32>
    %163 = vector.extract_strided_slice %144 {offsets = [1, 0], sizes = [1, 64], strides = [1, 1]} : vector<9x64xf32> to vector<1x64xf32>
    %164 = vector.broadcast %163 : vector<1x64xf32> to vector<64x64xf32>
    %165 = arith.mulf %162, %164 : vector<64x64xf32>
    %166 = arith.addf %158, %165 : vector<64x64xf32>
    %c7_i32 = arith.constant 7 : i32
    %167 = tpu.dynamic_rotate %143 by %c7_i32 dim 0 : vector<64x64xf32>, i32 -> vector<64x64xf32>
    %168 = vector.extract_strided_slice %0 {offsets = [0, 2], sizes = [64, 1], strides = [1, 1]} : vector<64x16xf32> to vector<64x1xf32>
    %169 = vector.broadcast %168 : vector<64x1xf32> to vector<64x64xf32>
    %170 = arith.mulf %167, %169 : vector<64x64xf32>
    %171 = vector.extract_strided_slice %144 {offsets = [2, 0], sizes = [1, 64], strides = [1, 1]} : vector<9x64xf32> to vector<1x64xf32>
    %172 = vector.broadcast %171 : vector<1x64xf32> to vector<64x64xf32>
    %173 = arith.mulf %170, %172 : vector<64x64xf32>
    %174 = arith.addf %166, %173 : vector<64x64xf32>
    %c1_i32_67 = arith.constant 1 : i32
    %175 = tpu.dynamic_rotate %143 by %c1_i32_67 dim 0 : vector<64x64xf32>, i32 -> vector<64x64xf32>
    %176 = vector.extract_strided_slice %0 {offsets = [0, 3], sizes = [64, 1], strides = [1, 1]} : vector<64x16xf32> to vector<64x1xf32>
    %177 = vector.broadcast %176 : vector<64x1xf32> to vector<64x64xf32>
    %178 = arith.mulf %175, %177 : vector<64x64xf32>
    %179 = vector.extract_strided_slice %144 {offsets = [3, 0], sizes = [1, 64], strides = [1, 1]} : vector<9x64xf32> to vector<1x64xf32>
    %180 = vector.broadcast %179 : vector<1x64xf32> to vector<64x64xf32>
    %181 = arith.mulf %178, %180 : vector<64x64xf32>
    %182 = arith.addf %174, %181 : vector<64x64xf32>
    %c63_i32 = arith.constant 63 : i32
    %183 = tpu.dynamic_rotate %143 by %c63_i32 dim 0 : vector<64x64xf32>, i32 -> vector<64x64xf32>
    %184 = vector.extract_strided_slice %0 {offsets = [0, 5], sizes = [64, 1], strides = [1, 1]} : vector<64x16xf32> to vector<64x1xf32>
    %185 = vector.broadcast %184 : vector<64x1xf32> to vector<64x64xf32>
    %186 = arith.mulf %183, %185 : vector<64x64xf32>
    %187 = vector.extract_strided_slice %144 {offsets = [5, 0], sizes = [1, 64], strides = [1, 1]} : vector<9x64xf32> to vector<1x64xf32>
    %188 = vector.broadcast %187 : vector<1x64xf32> to vector<64x64xf32>
    %189 = arith.mulf %186, %188 : vector<64x64xf32>
    %190 = arith.addf %182, %189 : vector<64x64xf32>
    %c57_i32 = arith.constant 57 : i32
    %191 = tpu.dynamic_rotate %143 by %c57_i32 dim 0 : vector<64x64xf32>, i32 -> vector<64x64xf32>
    %192 = vector.extract_strided_slice %0 {offsets = [0, 6], sizes = [64, 1], strides = [1, 1]} : vector<64x16xf32> to vector<64x1xf32>
    %193 = vector.broadcast %192 : vector<64x1xf32> to vector<64x64xf32>
    %194 = arith.mulf %191, %193 : vector<64x64xf32>
    %195 = vector.extract_strided_slice %144 {offsets = [6, 0], sizes = [1, 64], strides = [1, 1]} : vector<9x64xf32> to vector<1x64xf32>
    %196 = vector.broadcast %195 : vector<1x64xf32> to vector<64x64xf32>
    %197 = arith.mulf %194, %196 : vector<64x64xf32>
    %198 = arith.addf %190, %197 : vector<64x64xf32>
    %c56_i32 = arith.constant 56 : i32
    %199 = tpu.dynamic_rotate %143 by %c56_i32 dim 0 : vector<64x64xf32>, i32 -> vector<64x64xf32>
    %200 = vector.extract_strided_slice %0 {offsets = [0, 7], sizes = [64, 1], strides = [1, 1]} : vector<64x16xf32> to vector<64x1xf32>
    %201 = vector.broadcast %200 : vector<64x1xf32> to vector<64x64xf32>
    %202 = arith.mulf %199, %201 : vector<64x64xf32>
    %203 = vector.extract_strided_slice %144 {offsets = [7, 0], sizes = [1, 64], strides = [1, 1]} : vector<9x64xf32> to vector<1x64xf32>
    %204 = vector.broadcast %203 : vector<1x64xf32> to vector<64x64xf32>
    %205 = arith.mulf %202, %204 : vector<64x64xf32>
    %206 = arith.addf %198, %205 : vector<64x64xf32>
    %c55_i32 = arith.constant 55 : i32
    %207 = tpu.dynamic_rotate %143 by %c55_i32 dim 0 : vector<64x64xf32>, i32 -> vector<64x64xf32>
    %208 = vector.extract_strided_slice %0 {offsets = [0, 8], sizes = [64, 1], strides = [1, 1]} : vector<64x16xf32> to vector<64x1xf32>
    %209 = vector.broadcast %208 : vector<64x1xf32> to vector<64x64xf32>
    %210 = arith.mulf %207, %209 : vector<64x64xf32>
    %211 = vector.extract_strided_slice %144 {offsets = [8, 0], sizes = [1, 64], strides = [1, 1]} : vector<9x64xf32> to vector<1x64xf32>
    %212 = vector.broadcast %211 : vector<1x64xf32> to vector<64x64xf32>
    %213 = arith.mulf %210, %212 : vector<64x64xf32>
    %214 = arith.addf %206, %213 : vector<64x64xf32>
    %cst_68 = arith.constant 5.000000e-01 : f32
    %215 = vector.broadcast %cst_68 : f32 to vector<64x64xf32>
    %216 = arith.mulf %215, %214 : vector<64x64xf32>
    %cst_69 = arith.constant 0.707106769 : f32
    %217 = vector.broadcast %cst_69 : f32 to vector<64x64xf32>
    %218 = arith.mulf %214, %217 : vector<64x64xf32>
    %219 = math.absf %218 : vector<64x64xf32>
    %cst_70 = arith.constant 0.327591091 : f32
    %220 = vector.broadcast %cst_70 : f32 to vector<64x64xf32>
    %221 = arith.mulf %220, %219 : vector<64x64xf32>
    %cst_71 = arith.constant 1.000000e+00 : f32
    %222 = vector.broadcast %cst_71 : f32 to vector<64x64xf32>
    %223 = arith.addf %222, %221 : vector<64x64xf32>
    %224 = tpu.reciprocal %223 {approx = true} : vector<64x64xf32> -> vector<64x64xf32>
    %cst_72 = arith.constant 1.06140542 : f32
    %225 = vector.broadcast %cst_72 : f32 to vector<64x64xf32>
    %226 = arith.mulf %225, %224 : vector<64x64xf32>
    %cst_73 = arith.constant -1.45315206 : f32
    %227 = vector.broadcast %cst_73 : f32 to vector<64x64xf32>
    %228 = arith.addf %226, %227 : vector<64x64xf32>
    %229 = arith.mulf %228, %224 : vector<64x64xf32>
    %cst_74 = arith.constant 1.42141378 : f32
    %230 = vector.broadcast %cst_74 : f32 to vector<64x64xf32>
    %231 = arith.addf %229, %230 : vector<64x64xf32>
    %232 = arith.mulf %231, %224 : vector<64x64xf32>
    %cst_75 = arith.constant -0.284496725 : f32
    %233 = vector.broadcast %cst_75 : f32 to vector<64x64xf32>
    %234 = arith.addf %232, %233 : vector<64x64xf32>
    %235 = arith.mulf %234, %224 : vector<64x64xf32>
    %cst_76 = arith.constant 0.254829586 : f32
    %236 = vector.broadcast %cst_76 : f32 to vector<64x64xf32>
    %237 = arith.addf %235, %236 : vector<64x64xf32>
    %238 = arith.mulf %237, %224 : vector<64x64xf32>
    %cst_77 = arith.constant 0.000000e+00 : f32
    %239 = vector.broadcast %cst_77 : f32 to vector<64x64xf32>
    %240 = arith.subf %239, %219 : vector<64x64xf32>
    %241 = arith.mulf %240, %219 : vector<64x64xf32>
    %242 = math.exp %241 : vector<64x64xf32>
    %243 = arith.mulf %238, %242 : vector<64x64xf32>
    %cst_78 = arith.constant 1.000000e+00 : f32
    %244 = vector.broadcast %cst_78 : f32 to vector<64x64xf32>
    %245 = arith.subf %244, %243 : vector<64x64xf32>
    %cst_79 = arith.constant 0.000000e+00 : f32
    %246 = vector.broadcast %cst_79 : f32 to vector<64x64xf32>
    %247 = arith.cmpf oge, %218, %246 : vector<64x64xf32>
    %cst_80 = arith.constant 0.000000e+00 : f32
    %248 = vector.broadcast %cst_80 : f32 to vector<64x64xf32>
    %249 = arith.subf %248, %245 : vector<64x64xf32>
    %250 = arith.select %247, %245, %249 : vector<64x64xi1>, vector<64x64xf32>
    %cst_81 = arith.constant 1.000000e+00 : f32
    %251 = vector.broadcast %cst_81 : f32 to vector<64x64xf32>
    %252 = arith.addf %251, %250 : vector<64x64xf32>
    %253 = arith.mulf %216, %252 : vector<64x64xf32>
    %254 = arith.truncf %253 : vector<64x64xf32> to vector<64x64xbf16>
    %c0_82 = arith.constant 0 : index
    %c0_83 = arith.constant 0 : index
    %255 = vector.load %arg16[%c0_82, %c0_83] : memref<64x64xbf16, #tpu.memory_space<vmem>>, vector<64x64xbf16>
    %cst_84 = arith.constant dense<0.000000e+00> : vector<64x64xf32>
    %256 = tpu.matmul %254, %255, %cst_84 {dimension_numbers = #tpu.dot_dimension_numbers<[1], [0], [0], [1], [0, 0, 1, 1], [], []>} : vector<64x64xbf16>, vector<64x64xbf16>, vector<64x64xf32> -> vector<64x64xf32>
    %c0_85 = arith.constant 0 : index
    %c0_86 = arith.constant 0 : index
    %257 = vector.load %arg17[%c0_85, %c0_86] : memref<1x64xf32, #tpu.memory_space<vmem>>, vector<1x64xf32>
    %258 = vector.broadcast %257 : vector<1x64xf32> to vector<64x64xf32>
    %259 = arith.addf %256, %258 : vector<64x64xf32>
    %cst_87 = arith.constant dense<0.000000e+00> : vector<64xf32>
    %260 = vector.multi_reduction <add>, %259, %cst_87 [0] : vector<64x64xf32> to vector<64xf32>
    %261 = vector.shape_cast %260 : vector<64xf32> to vector<1x64xf32>
    %cst_88 = arith.constant 1.562500e-02 : f32
    %262 = vector.broadcast %cst_88 : f32 to vector<1x64xf32>
    %263 = arith.mulf %261, %262 : vector<1x64xf32>
    %264 = arith.mulf %259, %259 : vector<64x64xf32>
    %cst_89 = arith.constant dense<0.000000e+00> : vector<64xf32>
    %265 = vector.multi_reduction <add>, %264, %cst_89 [0] : vector<64x64xf32> to vector<64xf32>
    %266 = vector.shape_cast %265 : vector<64xf32> to vector<1x64xf32>
    %cst_90 = arith.constant 1.562500e-02 : f32
    %267 = vector.broadcast %cst_90 : f32 to vector<1x64xf32>
    %268 = arith.mulf %266, %267 : vector<1x64xf32>
    %269 = arith.mulf %263, %263 : vector<1x64xf32>
    %270 = arith.subf %268, %269 : vector<1x64xf32>
    %cst_91 = arith.constant 0.000000e+00 : f32
    %271 = vector.broadcast %cst_91 : f32 to vector<1x64xf32>
    %272 = arith.maximumf %270, %271 : vector<1x64xf32>
    %273 = vector.broadcast %263 : vector<1x64xf32> to vector<64x64xf32>
    %274 = arith.subf %259, %273 : vector<64x64xf32>
    %cst_92 = arith.constant 9.99999974E-6 : f32
    %275 = vector.broadcast %cst_92 : f32 to vector<1x64xf32>
    %276 = arith.addf %272, %275 : vector<1x64xf32>
    %277 = math.rsqrt %276 : vector<1x64xf32>
    %278 = vector.broadcast %277 : vector<1x64xf32> to vector<64x64xf32>
    %279 = arith.mulf %274, %278 : vector<64x64xf32>
    %c0_93 = arith.constant 0 : index
    %c0_94 = arith.constant 0 : index
    %280 = vector.load %arg20[%c0_93, %c0_94] : memref<9x64xf32, #tpu.memory_space<vmem>>, vector<9x64xf32>
    %c0_95 = arith.constant 0 : index
    %c0_96 = arith.constant 0 : index
    %281 = vector.load %arg21[%c0_95, %c0_96] : memref<1x64xf32, #tpu.memory_space<vmem>>, vector<1x64xf32>
    %282 = vector.extract_strided_slice %280 {offsets = [4, 0], sizes = [1, 64], strides = [1, 1]} : vector<9x64xf32> to vector<1x64xf32>
    %283 = vector.broadcast %282 : vector<1x64xf32> to vector<64x64xf32>
    %284 = arith.mulf %279, %283 : vector<64x64xf32>
    %285 = vector.broadcast %281 : vector<1x64xf32> to vector<64x64xf32>
    %286 = arith.addf %285, %284 : vector<64x64xf32>
    %c9_i32_97 = arith.constant 9 : i32
    %287 = tpu.dynamic_rotate %279 by %c9_i32_97 dim 0 : vector<64x64xf32>, i32 -> vector<64x64xf32>
    %288 = vector.extract_strided_slice %0 {offsets = [0, 0], sizes = [64, 1], strides = [1, 1]} : vector<64x16xf32> to vector<64x1xf32>
    %289 = vector.broadcast %288 : vector<64x1xf32> to vector<64x64xf32>
    %290 = arith.mulf %287, %289 : vector<64x64xf32>
    %291 = vector.extract_strided_slice %280 {offsets = [0, 0], sizes = [1, 64], strides = [1, 1]} : vector<9x64xf32> to vector<1x64xf32>
    %292 = vector.broadcast %291 : vector<1x64xf32> to vector<64x64xf32>
    %293 = arith.mulf %290, %292 : vector<64x64xf32>
    %294 = arith.addf %286, %293 : vector<64x64xf32>
    %c8_i32_98 = arith.constant 8 : i32
    %295 = tpu.dynamic_rotate %279 by %c8_i32_98 dim 0 : vector<64x64xf32>, i32 -> vector<64x64xf32>
    %296 = vector.extract_strided_slice %0 {offsets = [0, 1], sizes = [64, 1], strides = [1, 1]} : vector<64x16xf32> to vector<64x1xf32>
    %297 = vector.broadcast %296 : vector<64x1xf32> to vector<64x64xf32>
    %298 = arith.mulf %295, %297 : vector<64x64xf32>
    %299 = vector.extract_strided_slice %280 {offsets = [1, 0], sizes = [1, 64], strides = [1, 1]} : vector<9x64xf32> to vector<1x64xf32>
    %300 = vector.broadcast %299 : vector<1x64xf32> to vector<64x64xf32>
    %301 = arith.mulf %298, %300 : vector<64x64xf32>
    %302 = arith.addf %294, %301 : vector<64x64xf32>
    %c7_i32_99 = arith.constant 7 : i32
    %303 = tpu.dynamic_rotate %279 by %c7_i32_99 dim 0 : vector<64x64xf32>, i32 -> vector<64x64xf32>
    %304 = vector.extract_strided_slice %0 {offsets = [0, 2], sizes = [64, 1], strides = [1, 1]} : vector<64x16xf32> to vector<64x1xf32>
    %305 = vector.broadcast %304 : vector<64x1xf32> to vector<64x64xf32>
    %306 = arith.mulf %303, %305 : vector<64x64xf32>
    %307 = vector.extract_strided_slice %280 {offsets = [2, 0], sizes = [1, 64], strides = [1, 1]} : vector<9x64xf32> to vector<1x64xf32>
    %308 = vector.broadcast %307 : vector<1x64xf32> to vector<64x64xf32>
    %309 = arith.mulf %306, %308 : vector<64x64xf32>
    %310 = arith.addf %302, %309 : vector<64x64xf32>
    %c1_i32_100 = arith.constant 1 : i32
    %311 = tpu.dynamic_rotate %279 by %c1_i32_100 dim 0 : vector<64x64xf32>, i32 -> vector<64x64xf32>
    %312 = vector.extract_strided_slice %0 {offsets = [0, 3], sizes = [64, 1], strides = [1, 1]} : vector<64x16xf32> to vector<64x1xf32>
    %313 = vector.broadcast %312 : vector<64x1xf32> to vector<64x64xf32>
    %314 = arith.mulf %311, %313 : vector<64x64xf32>
    %315 = vector.extract_strided_slice %280 {offsets = [3, 0], sizes = [1, 64], strides = [1, 1]} : vector<9x64xf32> to vector<1x64xf32>
    %316 = vector.broadcast %315 : vector<1x64xf32> to vector<64x64xf32>
    %317 = arith.mulf %314, %316 : vector<64x64xf32>
    %318 = arith.addf %310, %317 : vector<64x64xf32>
    %c63_i32_101 = arith.constant 63 : i32
    %319 = tpu.dynamic_rotate %279 by %c63_i32_101 dim 0 : vector<64x64xf32>, i32 -> vector<64x64xf32>
    %320 = vector.extract_strided_slice %0 {offsets = [0, 5], sizes = [64, 1], strides = [1, 1]} : vector<64x16xf32> to vector<64x1xf32>
    %321 = vector.broadcast %320 : vector<64x1xf32> to vector<64x64xf32>
    %322 = arith.mulf %319, %321 : vector<64x64xf32>
    %323 = vector.extract_strided_slice %280 {offsets = [5, 0], sizes = [1, 64], strides = [1, 1]} : vector<9x64xf32> to vector<1x64xf32>
    %324 = vector.broadcast %323 : vector<1x64xf32> to vector<64x64xf32>
    %325 = arith.mulf %322, %324 : vector<64x64xf32>
    %326 = arith.addf %318, %325 : vector<64x64xf32>
    %c57_i32_102 = arith.constant 57 : i32
    %327 = tpu.dynamic_rotate %279 by %c57_i32_102 dim 0 : vector<64x64xf32>, i32 -> vector<64x64xf32>
    %328 = vector.extract_strided_slice %0 {offsets = [0, 6], sizes = [64, 1], strides = [1, 1]} : vector<64x16xf32> to vector<64x1xf32>
    %329 = vector.broadcast %328 : vector<64x1xf32> to vector<64x64xf32>
    %330 = arith.mulf %327, %329 : vector<64x64xf32>
    %331 = vector.extract_strided_slice %280 {offsets = [6, 0], sizes = [1, 64], strides = [1, 1]} : vector<9x64xf32> to vector<1x64xf32>
    %332 = vector.broadcast %331 : vector<1x64xf32> to vector<64x64xf32>
    %333 = arith.mulf %330, %332 : vector<64x64xf32>
    %334 = arith.addf %326, %333 : vector<64x64xf32>
    %c56_i32_103 = arith.constant 56 : i32
    %335 = tpu.dynamic_rotate %279 by %c56_i32_103 dim 0 : vector<64x64xf32>, i32 -> vector<64x64xf32>
    %336 = vector.extract_strided_slice %0 {offsets = [0, 7], sizes = [64, 1], strides = [1, 1]} : vector<64x16xf32> to vector<64x1xf32>
    %337 = vector.broadcast %336 : vector<64x1xf32> to vector<64x64xf32>
    %338 = arith.mulf %335, %337 : vector<64x64xf32>
    %339 = vector.extract_strided_slice %280 {offsets = [7, 0], sizes = [1, 64], strides = [1, 1]} : vector<9x64xf32> to vector<1x64xf32>
    %340 = vector.broadcast %339 : vector<1x64xf32> to vector<64x64xf32>
    %341 = arith.mulf %338, %340 : vector<64x64xf32>
    %342 = arith.addf %334, %341 : vector<64x64xf32>
    %c55_i32_104 = arith.constant 55 : i32
    %343 = tpu.dynamic_rotate %279 by %c55_i32_104 dim 0 : vector<64x64xf32>, i32 -> vector<64x64xf32>
    %344 = vector.extract_strided_slice %0 {offsets = [0, 8], sizes = [64, 1], strides = [1, 1]} : vector<64x16xf32> to vector<64x1xf32>
    %345 = vector.broadcast %344 : vector<64x1xf32> to vector<64x64xf32>
    %346 = arith.mulf %343, %345 : vector<64x64xf32>
    %347 = vector.extract_strided_slice %280 {offsets = [8, 0], sizes = [1, 64], strides = [1, 1]} : vector<9x64xf32> to vector<1x64xf32>
    %348 = vector.broadcast %347 : vector<1x64xf32> to vector<64x64xf32>
    %349 = arith.mulf %346, %348 : vector<64x64xf32>
    %350 = arith.addf %342, %349 : vector<64x64xf32>
    %351 = arith.addf %350, %123 : vector<64x64xf32>
    %cst_105 = arith.constant 2.000000e+00 : f32
    %352 = vector.broadcast %cst_105 : f32 to vector<64x64xf32>
    %353 = arith.mulf %352, %351 : vector<64x64xf32>
    %c0_106 = arith.constant 0 : index
    %c0_107 = arith.constant 0 : index
    %c0_108 = arith.constant 0 : index
    %354 = vector.load %arg23[%c0_106, %c0_107, %c0_108] : memref<1x64x64xf32, #tpu.memory_space<vmem>>, vector<1x64x64xf32>
    %355 = vector.shape_cast %354 : vector<1x64x64xf32> to vector<64x64xf32>
    %356 = vector.shape_cast %353 : vector<64x64xf32> to vector<1x64x64xf32>
    tpu.vector_store %arg23[%c0_106, %c0_107, %c0_108], %356 {strides = array<i32>} : memref<1x64x64xf32, #tpu.memory_space<vmem>>, vector<1x64x64xf32>,
    return
  }
  func.func @transform_0(%arg0: i32) -> (i32, i32, i32) {
    %c0_i32 = arith.constant 0 : i32
    %c0_i32_0 = arith.constant 0 : i32
    %c0_i32_1 = arith.constant 0 : i32
    return %arg0, %c0_i32, %c0_i32_0 : i32, i32, i32
  }
  func.func @transform_1(%arg0: i32) -> (i32, i32) {
    %c0_i32 = arith.constant 0 : i32
    %c0_i32_0 = arith.constant 0 : i32
    %c0_i32_1 = arith.constant 0 : i32
    return %c0_i32, %c0_i32_0 : i32, i32
  }
  func.func @transform_2(%arg0: i32) -> (i32, i32) {
    %c0_i32 = arith.constant 0 : i32
    %c0_i32_0 = arith.constant 0 : i32
    %c0_i32_1 = arith.constant 0 : i32
    return %c0_i32, %c0_i32_0 : i32, i32
  }
  func.func @transform_3(%arg0: i32) -> (i32, i32) {
    %c0_i32 = arith.constant 0 : i32
    %c0_i32_0 = arith.constant 0 : i32
    %c0_i32_1 = arith.constant 0 : i32
    return %c0_i32, %c0_i32_0 : i32, i32
  }
  func.func @transform_4(%arg0: i32) -> (i32, i32) {
    %c0_i32 = arith.constant 0 : i32
    %c0_i32_0 = arith.constant 0 : i32
    %c0_i32_1 = arith.constant 0 : i32
    return %c0_i32, %c0_i32_0 : i32, i32
  }
  func.func @transform_5(%arg0: i32) -> (i32, i32) {
    %c0_i32 = arith.constant 0 : i32
    %c0_i32_0 = arith.constant 0 : i32
    %c0_i32_1 = arith.constant 0 : i32
    return %c0_i32, %c0_i32_0 : i32, i32
  }
  func.func @transform_6(%arg0: i32) -> (i32, i32) {
    %c0_i32 = arith.constant 0 : i32
    %c0_i32_0 = arith.constant 0 : i32
    %c0_i32_1 = arith.constant 0 : i32
    return %c0_i32, %c0_i32_0 : i32, i32
  }
  func.func @transform_7(%arg0: i32) -> (i32, i32) {
    %c0_i32 = arith.constant 0 : i32
    %c0_i32_0 = arith.constant 0 : i32
    %c0_i32_1 = arith.constant 0 : i32
    return %c0_i32, %c0_i32_0 : i32, i32
  }
  func.func @transform_8(%arg0: i32) -> (i32, i32) {
    %c0_i32 = arith.constant 0 : i32
    %c0_i32_0 = arith.constant 0 : i32
    %c0_i32_1 = arith.constant 0 : i32
    return %c0_i32, %c0_i32_0 : i32, i32
  }
  func.func @transform_9(%arg0: i32) -> (i32, i32) {
    %c0_i32 = arith.constant 0 : i32
    %c0_i32_0 = arith.constant 0 : i32
    %c0_i32_1 = arith.constant 0 : i32
    return %c0_i32, %c0_i32_0 : i32, i32
  }
  func.func @transform_10(%arg0: i32) -> (i32, i32) {
    %c0_i32 = arith.constant 0 : i32
    %c0_i32_0 = arith.constant 0 : i32
    %c0_i32_1 = arith.constant 0 : i32
    return %c0_i32, %c0_i32_0 : i32, i32
  }
  func.func @transform_11(%arg0: i32) -> (i32, i32) {
    %c0_i32 = arith.constant 0 : i32
    %c0_i32_0 = arith.constant 0 : i32
    %c0_i32_1 = arith.constant 0 : i32
    return %c0_i32, %c0_i32_0 : i32, i32
  }
  func.func @transform_12(%arg0: i32) -> (i32, i32) {
    %c0_i32 = arith.constant 0 : i32
    %c0_i32_0 = arith.constant 0 : i32
    %c0_i32_1 = arith.constant 0 : i32
    return %c0_i32, %c0_i32_0 : i32, i32
  }
  func.func @transform_13(%arg0: i32) -> (i32, i32) {
    %c0_i32 = arith.constant 0 : i32
    %c0_i32_0 = arith.constant 0 : i32
    %c0_i32_1 = arith.constant 0 : i32
    return %c0_i32, %c0_i32_0 : i32, i32
  }
  func.func @transform_14(%arg0: i32) -> (i32, i32) {
    %c0_i32 = arith.constant 0 : i32
    %c0_i32_0 = arith.constant 0 : i32
    %c0_i32_1 = arith.constant 0 : i32
    return %c0_i32, %c0_i32_0 : i32, i32
  }
  func.func @transform_15(%arg0: i32) -> (i32, i32) {
    %c0_i32 = arith.constant 0 : i32
    %c0_i32_0 = arith.constant 0 : i32
    %c0_i32_1 = arith.constant 0 : i32
    return %c0_i32, %c0_i32_0 : i32, i32
  }
  func.func @transform_16(%arg0: i32) -> (i32, i32) {
    %c0_i32 = arith.constant 0 : i32
    %c0_i32_0 = arith.constant 0 : i32
    %c0_i32_1 = arith.constant 0 : i32
    return %c0_i32, %c0_i32_0 : i32, i32
  }
  func.func @transform_17(%arg0: i32) -> (i32, i32) {
    %c0_i32 = arith.constant 0 : i32
    %c0_i32_0 = arith.constant 0 : i32
    %c0_i32_1 = arith.constant 0 : i32
    return %c0_i32, %c0_i32_0 : i32, i32
  }
  func.func @transform_18(%arg0: i32) -> (i32, i32) {
    %c0_i32 = arith.constant 0 : i32
    %c0_i32_0 = arith.constant 0 : i32
    %c0_i32_1 = arith.constant 0 : i32
    return %c0_i32, %c0_i32_0 : i32, i32
  }
  func.func @transform_19(%arg0: i32) -> (i32, i32) {
    %c0_i32 = arith.constant 0 : i32
    %c0_i32_0 = arith.constant 0 : i32
    %c0_i32_1 = arith.constant 0 : i32
    return %c0_i32, %c0_i32_0 : i32, i32
  }
  func.func @transform_20(%arg0: i32) -> (i32, i32) {
    %c0_i32 = arith.constant 0 : i32
    %c0_i32_0 = arith.constant 0 : i32
    %c0_i32_1 = arith.constant 0 : i32
    return %c0_i32, %c0_i32_0 : i32, i32
  }
  func.func @transform_21(%arg0: i32) -> (i32, i32) {
    %c0_i32 = arith.constant 0 : i32
    %c0_i32_0 = arith.constant 0 : i32
    %c0_i32_1 = arith.constant 0 : i32
    return %c0_i32, %c0_i32_0 : i32, i32
  }
  func.func @transform_22(%arg0: i32) -> (i32, i32, i32) {
    %c0_i32 = arith.constant 0 : i32
    %c0_i32_0 = arith.constant 0 : i32
    %c0_i32_1 = arith.constant 0 : i32
    return %arg0, %c0_i32, %c0_i32_0 : i32, i32, i32
  }
}

</mosaic_0001>

<llo_original>
// kernel: tpu_custom_call.1
$region0: #{tpu_custom_call.1}
  #allocation0 [shape = 'u32[]', space=smem, size = 0x4, offset = 0x4, fixed_abs, tag = 'smem constant byte address 0x4 - core index']
  #allocation1 [shape = 'u32[144,128]{1,0:T(1,128)}', space=vmem, size = 0x12000, scoped, tag = 'internal scratch']
  #allocation2 [shape = 'f32[64,512]{1,0:T(8,128)}', space=vmem, size = 0x20000, scoped, tag = 'scratch operand']
  #allocation3 [shape = 'f32[64,512]{1,0:T(8,128)}', space=vmem, size = 0x20000, scoped, tag = 'scratch operand']
  %s0 = inlined_call_operand.vmem [shape: f32[1,64,64], index: 0, kind: input, shape index: {}]
  %s1 = inlined_call_operand.hbm [shape: f32[64,64], index: 1, kind: input, shape index: {}]
  %s2 = inlined_call_operand.hbm [shape: f32[1,64], index: 2, kind: input, shape index: {}]
  %s3 = inlined_call_operand.hbm [shape: f32[1,64], index: 3, kind: input, shape index: {}]
  %s4 = inlined_call_operand.vmem [shape: bf16[64,320], index: 4, kind: input, shape index: {}]
  %s5 = inlined_call_operand.hbm [shape: f32[1,64], index: 5, kind: input, shape index: {}]
  %s6 = inlined_call_operand.hbm [shape: f32[4,128], index: 6, kind: input, shape index: {}]
  %s7 = inlined_call_operand.hbm [shape: f32[1,128], index: 7, kind: input, shape index: {}]
  %s8 = inlined_call_operand.hbm [shape: f32[1,128], index: 8, kind: input, shape index: {}]
  %s9 = inlined_call_operand.hbm [shape: bf16[128,1152], index: 9, kind: input, shape index: {}]
  %s10 = inlined_call_operand.hbm [shape: f32[128,512], index: 10, kind: input, shape index: {}]
  %s11 = inlined_call_operand.hbm [shape: f32[1,512], index: 11, kind: input, shape index: {}]
  %s12 = inlined_call_operand.hbm [shape: f32[512,128], index: 12, kind: input, shape index: {}]
  %s13 = inlined_call_operand.hbm [shape: f32[1,128], index: 13, kind: input, shape index: {}]
  %s14 = inlined_call_operand.vmem [shape: bf16[128,64], index: 14, kind: input, shape index: {}]
  %s15 = inlined_call_operand.vmem [shape: bf16[64,64], index: 15, kind: input, shape index: {}]
  %s16 = inlined_call_operand.hbm [shape: f32[1,64], index: 16, kind: input, shape index: {}]
  %s17 = inlined_call_operand.vmem [shape: f32[9,64], index: 17, kind: input, shape index: {}]
  %s18 = inlined_call_operand.vmem [shape: f32[1,64], index: 18, kind: input, shape index: {}]
  %s19 = inlined_call_operand.hbm [shape: f32[9,64], index: 19, kind: input, shape index: {}]
  %s20 = inlined_call_operand.vmem [shape: f32[1,64], index: 20, kind: input, shape index: {}]
  %s21 = inlined_call_operand.vmem [shape: f32[64,16], index: 21, kind: input, shape index: {}]
  %s22 = inlined_call_operand.hbm [shape: f32[1,64,64], index: 22, kind: output, shape index: {}]
  %s23 = sld [smem:[#allocation0]]
  $region161: #{tpu_custom_call.1} parent=0
    _
  %s25 = ssub.s32 1, %s23
  %s26 = scalar_select 0, %s25, %s23
  $region1: #{tpu_custom_call.1} parent=0
    #allocation4 [shape = 'u8[32768]{0}', space=vmem, size = 0x8000, scoped, tag = 'input window, operand 1, single buffered']
    #allocation5 [shape = 's32[1]{0}', space=sflag, size = 0x4, scoped, tag = 'scoped memory for tpu_custom_call.1']
    #allocation6 [shape = 's32[1]{0}', space=sflag, size = 0x4, scoped, tag = 'scoped memory for tpu_custom_call.1']
    #allocation7 [shape = 'u8[512]{0}', space=vmem, size = 0x400, scoped, tag = 'input window, operand 2, single buffered']
    #allocation8 [shape = 's32[1]{0}', space=sflag, size = 0x4, scoped, tag = 'scoped memory for tpu_custom_call.1']
    #allocation9 [shape = 'u8[512]{0}', space=vmem, size = 0x400, scoped, tag = 'input window, operand 3, single buffered']
    #allocation10 [shape = 'u8[512]{0}', space=vmem, size = 0x400, scoped, tag = 'input window, operand 5, single buffered']
    #allocation11 [shape = 's32[1]{0}', space=sflag, size = 0x4, scoped, tag = 'scoped memory for tpu_custom_call.1']
    #allocation12 [shape = 'u8[2048]{0}', space=vmem, size = 0x800, scoped, tag = 'input window, operand 6, single buffered']
    #allocation13 [shape = 'u8[512]{0}', space=vmem, size = 0x400, scoped, tag = 'input window, operand 7, single buffered']
    #allocation14 [shape = 's32[1]{0}', space=sflag, size = 0x4, scoped, tag = 'scoped memory for tpu_custom_call.1']
    #allocation15 [shape = 'u8[512]{0}', space=vmem, size = 0x400, scoped, tag = 'input window, operand 8, single buffered']
    #allocation16 [shape = 'u8[294912]{0}', space=vmem, size = 0x48000, scoped, tag = 'input window, operand 9, single buffered']
    #allocation17 [shape = 's32[1]{0}', space=sflag, size = 0x4, scoped, tag = 'scoped memory for tpu_custom_call.1']
    #allocation18 [shape = 'u8[262144]{0}', space=vmem, size = 0x40000, scoped, tag = 'input window, operand 10, single buffered']
    #allocation19 [shape = 'u8[2048]{0}', space=vmem, size = 0x800, scoped, tag = 'input window, operand 11, single buffered']
    #allocation20 [shape = 's32[1]{0}', space=sflag, size = 0x4, scoped, tag = 'scoped memory for tpu_custom_call.1']
    #allocation21 [shape = 'u8[262144]{0}', space=vmem, size = 0x40000, scoped, tag = 'input window, operand 12, single buffered']
    #allocation22 [shape = 'u8[512]{0}', space=vmem, size = 0x400, scoped, tag = 'input window, operand 13, single buffered']
    #allocation23 [shape = 's32[1]{0}', space=sflag, size = 0x4, scoped, tag = 'scoped memory for tpu_custom_call.1']
    #allocation24 [shape = 'u8[512]{0}', space=vmem, size = 0x400, scoped, tag = 'input window, operand 16, single buffered']
    #allocation25 [shape = 'u8[8192]{0}', space=vmem, size = 0x2000, scoped, tag = 'input window, operand 19, single buffered']
    #allocation26 [shape = 's32[1]{0}', space=sflag, size = 0x4, scoped, tag = 'scoped memory for tpu_custom_call.1']
    #allocation27 [shape = 'u8[32768]{0}', space=vmem, size = 0x8000, scoped, tag = 'output window, operand 0, single buffered']
    %27 = vsyncpa [#allocation5], 0
    %28 = vsyncpa [#allocation8], 0
    %29 = vsyncpa [#allocation11], 0
    %30 = vsyncpa [#allocation14], 0
    %31 = vsyncpa [#allocation17], 0
    %32 = vsyncpa [#allocation20], 0
    %33 = vsyncpa [#allocation23], 0
    %34 = vsyncpa [#allocation26], 0
    %35 = vsyncpa [#allocation6], 0
    // Predicated region
    $region2: #{tpu_custom_call.1} parent=1 // pred_check
      _
    $region3: #{tpu_custom_call.1} parent=1 // pred_check_branch
      %37 = sbr.rel (0) target = $region5
    $region4: #{tpu_custom_call.1} parent=1 // pred_region
      _
    $region5: #{tpu_custom_call.1} parent=1 // pred_fallthru
      _
    // Predicated region
    $region6: #{tpu_custom_call.1} parent=1 // pred_check
      _
    $region7: #{tpu_custom_call.1} parent=1 // pred_check_branch
      %39 = sbr.rel (0) target = $region9
    $region8: #{tpu_custom_call.1} parent=1 // pred_region
      %s41 = ssub.s32 1024, 1024
      %42 = vsyncadd [#allocation5], %s41
      %s43 = sshll.u32 [#allocation4], 4
      %s44 = int_to_ptr.vmem [resolvable:$true] %s43
      %49 = dma.hbm_to_vmem [thread:$0]  %s1, 1024, %s44, [#allocation5], 128, 128, 8
    $region9: #{tpu_custom_call.1} parent=1 // pred_fallthru
      _
    // Predicated region
    $region10: #{tpu_custom_call.1} parent=1 // pred_check
      _
    $region11: #{tpu_custom_call.1} parent=1 // pred_check_branch
      %51 = sbr.rel (0) target = $region13
    $region12: #{tpu_custom_call.1} parent=1 // pred_region
      %s53 = ssub.s32 16, 16
      %54 = vsyncadd [#allocation8], %s53
      %s56 = sshll.u32 [#allocation7], 4
      %s57 = int_to_ptr.vmem [resolvable:$true] %s56
      %59 = dma.hbm_to_vmem [thread:$0]  %s2, 16, %s57, [#allocation8]
    $region13: #{tpu_custom_call.1} parent=1 // pred_fallthru
      _
    // Predicated region
    $region14: #{tpu_custom_call.1} parent=1 // pred_check
      _
    $region15: #{tpu_custom_call.1} parent=1 // pred_check_branch
      %61 = sbr.rel (0) target = $region17
    $region16: #{tpu_custom_call.1} parent=1 // pred_region
      %s63 = ssub.s32 16, 16
      %64 = vsyncadd [#allocation8], %s63
      %s66 = sshll.u32 [#allocation9], 4
      %s67 = int_to_ptr.vmem [resolvable:$true] %s66
      %69 = dma.hbm_to_vmem [thread:$0]  %s3, 16, %s67, [#allocation8]
    $region17: #{tpu_custom_call.1} parent=1 // pred_fallthru
      _
    // Predicated region
    $region18: #{tpu_custom_call.1} parent=1 // pred_check
      _
    $region19: #{tpu_custom_call.1} parent=1 // pred_check_branch
      %71 = sbr.rel (0) target = $region21
    $region20: #{tpu_custom_call.1} parent=1 // pred_region
      _
    $region21: #{tpu_custom_call.1} parent=1 // pred_fallthru
      _
    // Predicated region
    $region22: #{tpu_custom_call.1} parent=1 // pred_check
      _
    $region23: #{tpu_custom_call.1} parent=1 // pred_check_branch
      %73 = sbr.rel (0) target = $region25
    $region24: #{tpu_custom_call.1} parent=1 // pred_region
      %s75 = ssub.s32 16, 16
      %76 = vsyncadd [#allocation11], %s75
      %s78 = sshll.u32 [#allocation10], 4
      %s79 = int_to_ptr.vmem [resolvable:$true] %s78
      %81 = dma.hbm_to_vmem [thread:$0]  %s5, 16, %s79, [#allocation11]
    $region25: #{tpu_custom_call.1} parent=1 // pred_fallthru
      _
    // Predicated region
    $region26: #{tpu_custom_call.1} parent=1 // pred_check
      _
    $region27: #{tpu_custom_call.1} parent=1 // pred_check_branch
      %83 = sbr.rel (0) target = $region29
    $region28: #{tpu_custom_call.1} parent=1 // pred_region
      %s85 = ssub.s32 64, 64
      %86 = vsyncadd [#allocation11], %s85
      %s88 = sshll.u32 [#allocation12], 4
      %s89 = int_to_ptr.vmem [resolvable:$true] %s88
      %91 = dma.hbm_to_vmem [thread:$0]  %s6, 64, %s89, [#allocation11]
    $region29: #{tpu_custom_call.1} parent=1 // pred_fallthru
      _
    // Predicated region
    $region30: #{tpu_custom_call.1} parent=1 // pred_check
      _
    $region31: #{tpu_custom_call.1} parent=1 // pred_check_branch
      %93 = sbr.rel (0) target = $region33
    $region32: #{tpu_custom_call.1} parent=1 // pred_region
      %s95 = ssub.s32 16, 16
      %96 = vsyncadd [#allocation14], %s95
      %s98 = sshll.u32 [#allocation13], 4
      %s99 = int_to_ptr.vmem [resolvable:$true] %s98
      %101 = dma.hbm_to_vmem [thread:$0]  %s7, 16, %s99, [#allocation14]
    $region33: #{tpu_custom_call.1} parent=1 // pred_fallthru
      _
    // Predicated region
    $region34: #{tpu_custom_call.1} parent=1 // pred_check
      _
    $region35: #{tpu_custom_call.1} parent=1 // pred_check_branch
      %103 = sbr.rel (0) target = $region37
    $region36: #{tpu_custom_call.1} parent=1 // pred_region
      %s105 = ssub.s32 16, 16
      %106 = vsyncadd [#allocation14], %s105
      %s108 = sshll.u32 [#allocation15], 4
      %s109 = int_to_ptr.vmem [resolvable:$true] %s108
      %111 = dma.hbm_to_vmem [thread:$0]  %s8, 16, %s109, [#allocation14]
    $region37: #{tpu_custom_call.1} parent=1 // pred_fallthru
      _
    // Predicated region
    $region38: #{tpu_custom_call.1} parent=1 // pred_check
      _
    $region39: #{tpu_custom_call.1} parent=1 // pred_check_branch
      %113 = sbr.rel (0) target = $region41
    $region40: #{tpu_custom_call.1} parent=1 // pred_region
      %s115 = ssub.s32 9216, 9216
      %116 = vsyncadd [#allocation17], %s115
      %s117 = sshll.u32 [#allocation16], 4
      %s118 = int_to_ptr.vmem [resolvable:$true] %s117
      %123 = dma.hbm_to_vmem [thread:$0]  %s9, 9216, %s118, [#allocation17], 576, 576, 36
    $region41: #{tpu_custom_call.1} parent=1 // pred_fallthru
      _
    // Predicated region
    $region42: #{tpu_custom_call.1} parent=1 // pred_check
      _
    $region43: #{tpu_custom_call.1} parent=1 // pred_check_branch
      %125 = sbr.rel (0) target = $region45
    $region44: #{tpu_custom_call.1} parent=1 // pred_region
      %s127 = ssub.s32 8192, 8192
      %128 = vsyncadd [#allocation17], %s127
      %s129 = sshll.u32 [#allocation18], 4
      %s130 = int_to_ptr.vmem [resolvable:$true] %s129
      %135 = dma.hbm_to_vmem [thread:$0]  %s10, 8192, %s130, [#allocation17], 512, 512, 32
    $region45: #{tpu_custom_call.1} parent=1 // pred_fallthru
      _
    // Predicated region
    $region46: #{tpu_custom_call.1} parent=1 // pred_check
      _
    $region47: #{tpu_custom_call.1} parent=1 // pred_check_branch
      %137 = sbr.rel (0) target = $region49
    $region48: #{tpu_custom_call.1} parent=1 // pred_region
      %s139 = ssub.s32 64, 64
      %140 = vsyncadd [#allocation20], %s139
      %s142 = sshll.u32 [#allocation19], 4
      %s143 = int_to_ptr.vmem [resolvable:$true] %s142
      %145 = dma.hbm_to_vmem [thread:$0]  %s11, 64, %s143, [#allocation20]
    $region49: #{tpu_custom_call.1} parent=1 // pred_fallthru
      _
    // Predicated region
    $region50: #{tpu_custom_call.1} parent=1 // pred_check
      _
    $region51: #{tpu_custom_call.1} parent=1 // pred_check_branch
      %147 = sbr.rel (0) target = $region53
    $region52: #{tpu_custom_call.1} parent=1 // pred_region
      %s149 = ssub.s32 8192, 8192
      %150 = vsyncadd [#allocation20], %s149
      %s151 = sshll.u32 [#allocation21], 4
      %s152 = int_to_ptr.vmem [resolvable:$true] %s151
      %157 = dma.hbm_to_vmem [thread:$0]  %s12, 8192, %s152, [#allocation20], 128, 128, 8
    $region53: #{tpu_custom_call.1} parent=1 // pred_fallthru
      _
    // Predicated region
    $region54: #{tpu_custom_call.1} parent=1 // pred_check
      _
    $region55: #{tpu_custom_call.1} parent=1 // pred_check_branch
      %159 = sbr.rel (0) target = $region57
    $region56: #{tpu_custom_call.1} parent=1 // pred_region
      %s161 = ssub.s32 16, 16
      %162 = vsyncadd [#allocation23], %s161
      %s164 = sshll.u32 [#allocation22], 4
      %s165 = int_to_ptr.vmem [resolvable:$true] %s164
      %167 = dma.hbm_to_vmem [thread:$0]  %s13, 16, %s165, [#allocation23]
    $region57: #{tpu_custom_call.1} parent=1 // pred_fallthru
      _
    // Predicated region
    $region58: #{tpu_custom_call.1} parent=1 // pred_check
      _
    $region59: #{tpu_custom_call.1} parent=1 // pred_check_branch
      %169 = sbr.rel (0) target = $region61
    $region60: #{tpu_custom_call.1} parent=1 // pred_region
      _
    $region61: #{tpu_custom_call.1} parent=1 // pred_fallthru
      _
    // Predicated region
    $region62: #{tpu_custom_call.1} parent=1 // pred_check
      _
    $region63: #{tpu_custom_call.1} parent=1 // pred_check_branch
      %171 = sbr.rel (0) target = $region65
    $region64: #{tpu_custom_call.1} parent=1 // pred_region
      _
    $region65: #{tpu_custom_call.1} parent=1 // pred_fallthru
      _
    // Predicated region
    $region66: #{tpu_custom_call.1} parent=1 // pred_check
      _
    $region67: #{tpu_custom_call.1} parent=1 // pred_check_branch
      %173 = sbr.rel (0) target = $region69
    $region68: #{tpu_custom_call.1} parent=1 // pred_region
      %s175 = ssub.s32 16, 16
      %176 = vsyncadd [#allocation23], %s175
      %s178 = sshll.u32 [#allocation24], 4
      %s179 = int_to_ptr.vmem [resolvable:$true] %s178
      %181 = dma.hbm_to_vmem [thread:$0]  %s16, 16, %s179, [#allocation23]
    $region69: #{tpu_custom_call.1} parent=1 // pred_fallthru
      _
    // Predicated region
    $region70: #{tpu_custom_call.1} parent=1 // pred_check
      _
    $region71: #{tpu_custom_call.1} parent=1 // pred_check_branch
      %183 = sbr.rel (0) target = $region73
    $region72: #{tpu_custom_call.1} parent=1 // pred_region
      _
    $region73: #{tpu_custom_call.1} parent=1 // pred_fallthru
      _
    // Predicated region
    $region74: #{tpu_custom_call.1} parent=1 // pred_check
      _
    $region75: #{tpu_custom_call.1} parent=1 // pred_check_branch
      %185 = sbr.rel (0) target = $region77
    $region76: #{tpu_custom_call.1} parent=1 // pred_region
      _
    $region77: #{tpu_custom_call.1} parent=1 // pred_fallthru
      _
    // Predicated region
    $region78: #{tpu_custom_call.1} parent=1 // pred_check
      _
    $region79: #{tpu_custom_call.1} parent=1 // pred_check_branch
      %187 = sbr.rel (0) target = $region81
    $region80: #{tpu_custom_call.1} parent=1 // pred_region
      %s189 = ssub.s32 256, 256
      %190 = vsyncadd [#allocation26], %s189
      %s191 = sshll.u32 [#allocation25], 4
      %s192 = int_to_ptr.vmem [resolvable:$true] %s191
      %197 = dma.hbm_to_vmem [thread:$0]  %s19, 256, %s192, [#allocation26], 128, 128, 8
    $region81: #{tpu_custom_call.1} parent=1 // pred_fallthru
      _
    // Predicated region
    $region82: #{tpu_custom_call.1} parent=1 // pred_check
      _
    $region83: #{tpu_custom_call.1} parent=1 // pred_check_branch
      %199 = sbr.rel (0) target = $region85
    $region84: #{tpu_custom_call.1} parent=1 // pred_region
      _
    $region85: #{tpu_custom_call.1} parent=1 // pred_fallthru
      _
    // Predicated region
    $region86: #{tpu_custom_call.1} parent=1 // pred_check
      _
    $region87: #{tpu_custom_call.1} parent=1 // pred_check_branch
      %201 = sbr.rel (0) target = $region89
    $region88: #{tpu_custom_call.1} parent=1 // pred_region
      _
    $region89: #{tpu_custom_call.1} parent=1 // pred_fallthru
      _
    // Predicated region
    $region90: #{tpu_custom_call.1} parent=1 // pred_check
      _
    $region91: #{tpu_custom_call.1} parent=1 // pred_check_branch
      %203 = sbr.rel (0) target = $region93
    $region92: #{tpu_custom_call.1} parent=1 // pred_region
      %204 = dma.done [#allocation5], 1024
    $region93: #{tpu_custom_call.1} parent=1 // pred_fallthru
      _
    // Predicated region
    $region94: #{tpu_custom_call.1} parent=1 // pred_check
      _
    $region95: #{tpu_custom_call.1} parent=1 // pred_check_branch
      %206 = sbr.rel (0) target = $region97
    $region96: #{tpu_custom_call.1} parent=1 // pred_region
      %207 = dma.done [#allocation8], 16
    $region97: #{tpu_custom_call.1} parent=1 // pred_fallthru
      _
    // Predicated region
    $region98: #{tpu_custom_call.1} parent=1 // pred_check
      _
    $region99: #{tpu_custom_call.1} parent=1 // pred_check_branch
      %209 = sbr.rel (0) target = $region101
    $region100: #{tpu_custom_call.1} parent=1 // pred_region
      %210 = dma.done [#allocation8], 16
    $region101: #{tpu_custom_call.1} parent=1 // pred_fallthru
      _
    // Predicated region
    $region102: #{tpu_custom_call.1} parent=1 // pred_check
      _
    $region103: #{tpu_custom_call.1} parent=1 // pred_check_branch
      %212 = sbr.rel (0) target = $region105
    $region104: #{tpu_custom_call.1} parent=1 // pred_region
      %213 = dma.done [#allocation11], 16
    $region105: #{tpu_custom_call.1} parent=1 // pred_fallthru
      _
    // Predicated region
    $region106: #{tpu_custom_call.1} parent=1 // pred_check
      _
    $region107: #{tpu_custom_call.1} parent=1 // pred_check_branch
      %215 = sbr.rel (0) target = $region109
    $region108: #{tpu_custom_call.1} parent=1 // pred_region
      %216 = dma.done [#allocation11], 64
    $region109: #{tpu_custom_call.1} parent=1 // pred_fallthru
      _
    // Predicated region
    $region110: #{tpu_custom_call.1} parent=1 // pred_check
      _
    $region111: #{tpu_custom_call.1} parent=1 // pred_check_branch
      %218 = sbr.rel (0) target = $region113
    $region112: #{tpu_custom_call.1} parent=1 // pred_region
      %219 = dma.done [#allocation14], 16
    $region113: #{tpu_custom_call.1} parent=1 // pred_fallthru
      _
    // Predicated region
    $region114: #{tpu_custom_call.1} parent=1 // pred_check
      _
    $region115: #{tpu_custom_call.1} parent=1 // pred_check_branch
      %221 = sbr.rel (0) target = $region117
    $region116: #{tpu_custom_call.1} parent=1 // pred_region
      %222 = dma.done [#allocation14], 16
    $region117: #{tpu_custom_call.1} parent=1 // pred_fallthru
      _
    // Predicated region
    $region118: #{tpu_custom_call.1} parent=1 // pred_check
      _
    $region119: #{tpu_custom_call.1} parent=1 // pred_check_branch
      %224 = sbr.rel (0) target = $region121
    $region120: #{tpu_custom_call.1} parent=1 // pred_region
      %225 = dma.done [#allocation17], 9216
    $region121: #{tpu_custom_call.1} parent=1 // pred_fallthru
      _
    // Predicated region
    $region122: #{tpu_custom_call.1} parent=1 // pred_check
      _
    $region123: #{tpu_custom_call.1} parent=1 // pred_check_branch
      %227 = sbr.rel (0) target = $region125
    $region124: #{tpu_custom_call.1} parent=1 // pred_region
      %228 = dma.done [#allocation17], 8192
    $region125: #{tpu_custom_call.1} parent=1 // pred_fallthru
      _
    // Predicated region
    $region126: #{tpu_custom_call.1} parent=1 // pred_check
      _
    $region127: #{tpu_custom_call.1} parent=1 // pred_check_branch
      %230 = sbr.rel (0) target = $region129
    $region128: #{tpu_custom_call.1} parent=1 // pred_region
      %231 = dma.done [#allocation20], 64
    $region129: #{tpu_custom_call.1} parent=1 // pred_fallthru
      _
    // Predicated region
    $region130: #{tpu_custom_call.1} parent=1 // pred_check
      _
    $region131: #{tpu_custom_call.1} parent=1 // pred_check_branch
      %233 = sbr.rel (0) target = $region133
    $region132: #{tpu_custom_call.1} parent=1 // pred_region
      %234 = dma.done [#allocation20], 8192
    $region133: #{tpu_custom_call.1} parent=1 // pred_fallthru
      _
    // Predicated region
    $region134: #{tpu_custom_call.1} parent=1 // pred_check
      _
    $region135: #{tpu_custom_call.1} parent=1 // pred_check_branch
      %236 = sbr.rel (0) target = $region137
    $region136: #{tpu_custom_call.1} parent=1 // pred_region
      %237 = dma.done [#allocation23], 16
    $region137: #{tpu_custom_call.1} parent=1 // pred_fallthru
      _
    // Predicated region
    $region138: #{tpu_custom_call.1} parent=1 // pred_check
      _
    $region139: #{tpu_custom_call.1} parent=1 // pred_check_branch
      %239 = sbr.rel (0) target = $region141
    $region140: #{tpu_custom_call.1} parent=1 // pred_region
      %240 = dma.done [#allocation23], 16
    $region141: #{tpu_custom_call.1} parent=1 // pred_fallthru
      _
    // Predicated region
    $region142: #{tpu_custom_call.1} parent=1 // pred_check
      _
    $region143: #{tpu_custom_call.1} parent=1 // pred_check_branch
      %242 = sbr.rel (0) target = $region145
    $region144: #{tpu_custom_call.1} parent=1 // pred_region
      %243 = dma.done [#allocation26], 256
    $region145: #{tpu_custom_call.1} parent=1 // pred_fallthru
      _
    %v245 = vld [vmem:[%s21] sm:$0xff]
    %v246 = vld [vmem:[%s21 + $0x8] sm:$0xff]
    %v247 = vld [vmem:[%s21 + $0x10] sm:$0xff]
    %v248 = vld [vmem:[%s21 + $0x18] sm:$0xff]
    %v249 = vld [vmem:[%s21 + $0x20] sm:$0xff]
    %v250 = vld [vmem:[%s21 + $0x28] sm:$0xff]
    %v251 = vld [vmem:[%s21 + $0x30] sm:$0xff]
    %v252 = vld [vmem:[%s21 + $0x38] sm:$0xff]
    %v253 = vld [vmem:[%s0] sm:$0xff]
    %v254 = vld [vmem:[%s0 + $0x8] sm:$0xff]
    %v255 = vld [vmem:[%s0 + $0x10] sm:$0xff]
    %v256 = vld [vmem:[%s0 + $0x18] sm:$0xff]
    %v257 = vld [vmem:[%s0 + $0x20] sm:$0xff]
    %v258 = vld [vmem:[%s0 + $0x28] sm:$0xff]
    %v259 = vld [vmem:[%s0 + $0x30] sm:$0xff]
    %v260 = vld [vmem:[%s0 + $0x38] sm:$0xff]
    %v261 = vld [vmem:[#allocation4] sm:$0xff]
    %v262 = vld [vmem:[#allocation4 + $0x8] sm:$0xff]
    %v263 = vld [vmem:[#allocation4 + $0x10] sm:$0xff]
    %v264 = vld [vmem:[#allocation4 + $0x18] sm:$0xff]
    %v265 = vld [vmem:[#allocation4 + $0x20] sm:$0xff]
    %v266 = vld [vmem:[#allocation4 + $0x28] sm:$0xff]
    %v267 = vld [vmem:[#allocation4 + $0x30] sm:$0xff]
    %v268 = vld [vmem:[#allocation4 + $0x38] sm:$0xff]
    %vm269 = vcmask 523264
    %v271 = vsel %vm269, %v253, 0
    %v274 = vsel %vm269, %v254, 0
    %v277 = vsel %vm269, %v255, 0
    %v280 = vsel %vm269, %v256, 0
    %v283 = vsel %vm269, %v257, 0
    %v286 = vsel %vm269, %v258, 0
    %v289 = vsel %vm269, %v259, 0
    %v292 = vsel %vm269, %v260, 0
    %294 = vmatprep.subr.mxu0 0.0
    %295 = vmatpush1.msra.mxu0 %v261
    %296 = vmatprep.subr.mxu0 0.0
    %297 = vmatpush1.msra.mxu0 %v262
    %298 = vmatprep.subr.mxu0 0.0
    %299 = vmatpush1.msra.mxu0 %v263
    %300 = vmatprep.subr.mxu0 0.0
    %301 = vmatpush1.msra.mxu0 %v264
    %302 = vmatprep.subr.mxu0 0.0
    %303 = vmatpush1.msra.mxu0 %v265
    %304 = vmatprep.subr.mxu0 0.0
    %305 = vmatpush1.msra.mxu0 %v266
    %306 = vmatprep.subr.mxu0 0.0
    %307 = vmatpush1.msra.mxu0 %v267
    %308 = vmatprep.subr.mxu0 0.0
    %309 = vmatpush1.msra.mxu0 %v268
    %310 = vmatprep.subr.mxu0 0.0
    %311 = vmatpush1.msra.mxu0 0.0
    %312 = vmatprep.subr.mxu0 0.0
    %313 = vmatpush1.msra.mxu0 0.0
    %314 = vmatprep.subr.mxu0 0.0
    %315 = vmatpush1.msra.mxu0 0.0
    %316 = vmatprep.subr.mxu0 0.0
    %317 = vmatpush1.msra.mxu0 0.0
    %318 = vmatprep.subr.mxu0 0.0
    %319 = vmatpush1.msra.mxu0 0.0
    %320 = vmatprep.subr.mxu0 0.0
    %321 = vmatpush1.msra.mxu0 0.0
    %322 = vmatprep.subr.mxu0 0.0
    %323 = vmatpush1.msra.mxu0 0.0
    %324 = vmatprep.subr.mxu0 0.0
    %325 = vmatpush1.msra.mxu0 0.0
    %326 = vmatprep.subr.mxu0 0.0
    %327 = vmatpush1.msra.mxu0 0.0
    %328 = vmatprep.subr.mxu0 0.0
    %329 = vmatpush1.msra.mxu0 0.0
    %330 = vmatprep.subr.mxu0 0.0
    %331 = vmatpush1.msra.mxu0 0.0
    %332 = vmatprep.subr.mxu0 0.0
    %333 = vmatpush1.msra.mxu0 0.0
    %334 = vmatprep.subr.mxu0 0.0
    %335 = vmatpush1.msra.mxu0 0.0
    %336 = vmatprep.subr.mxu0 0.0
    %337 = vmatpush1.msra.mxu0 0.0
    %338 = vmatprep.subr.mxu0 0.0
    %339 = vmatpush1.msra.mxu0 0.0
    %340 = vmatprep.subr.mxu0 0.0
    %341 = vmatpush1.msra.mxu0 0.0
    %342 = vmatprep.subr.mxu0 0.0
    %343 = vmatpush1.msra.mxu0 0.0
    %344 = vmatprep.subr.mxu0 0.0
    %345 = vmatpush1.msra.mxu0 0.0
    %346 = vmatprep.subr.mxu0 0.0
    %347 = vmatpush1.msra.mxu0 0.0
    %348 = vmatprep.subr.mxu0 0.0
    %349 = vmatpush1.msra.mxu0 0.0
    %350 = vmatprep.subr.mxu0 0.0
    %351 = vmatpush1.msra.mxu0 0.0
    %352 = vmatprep.subr.mxu0 0.0
    %353 = vmatpush1.msra.mxu0 0.0
    %354 = vmatprep.subr.mxu0 0.0
    %355 = vmatpush1.msra.mxu0 0.0
    %356 = vmatprep.subr.mxu0 0.0
    %357 = vmatpush1.msra.mxu0 0.0
    %358 = vmatprep.mubr.f32.mxu0 0.0
    %359 = vmatmul.mubr.f32.gmra.mrb[0].mxu0 %v271
    %v360 = vpop.f32.mrb[0].mxu0
    %v361 = vadd.f32 0.0, %v360
    %v362 = vpop.f32.mrb[0].mxu0
    %363 = vmatprep.mubr.f32.mxu0 0.0
    %364 = vmatmul.mubr.f32.gmra.mrb[0].mxu0 %v274
    %v365 = vpop.f32.mrb[0].mxu0
    %v366 = vadd.f32 0.0, %v365
    %v367 = vpop.f32.mrb[0].mxu0
    %368 = vmatprep.mubr.f32.mxu0 0.0
    %369 = vmatmul.mubr.f32.gmra.mrb[0].mxu0 %v277
    %v370 = vpop.f32.mrb[0].mxu0
    %v371 = vadd.f32 0.0, %v370
    %v372 = vpop.f32.mrb[0].mxu0
    %373 = vmatprep.mubr.f32.mxu0 0.0
    %374 = vmatmul.mubr.f32.gmra.mrb[0].mxu0 %v280
    %v375 = vpop.f32.mrb[0].mxu0
    %v376 = vadd.f32 0.0, %v375
    %v377 = vpop.f32.mrb[0].mxu0
    %378 = vmatprep.mubr.f32.mxu0 0.0
    %379 = vmatmul.mubr.f32.gmra.mrb[0].mxu0 %v283
    %v380 = vpop.f32.mrb[0].mxu0
    %v381 = vadd.f32 0.0, %v380
    %v382 = vpop.f32.mrb[0].mxu0
    %383 = vmatprep.mubr.f32.mxu0 0.0
    %384 = vmatmul.mubr.f32.gmra.mrb[0].mxu0 %v286
    %v385 = vpop.f32.mrb[0].mxu0
    %v386 = vadd.f32 0.0, %v385
    %v387 = vpop.f32.mrb[0].mxu0
    %388 = vmatprep.mubr.f32.mxu0 0.0
    %389 = vmatmul.mubr.f32.gmra.mrb[0].mxu0 %v289
    %v390 = vpop.f32.mrb[0].mxu0
    %v391 = vadd.f32 0.0, %v390
    %v392 = vpop.f32.mrb[0].mxu0
    %393 = vmatprep.mubr.f32.mxu0 0.0
    %394 = vmatmul.mubr.f32.gmra.mrb[0].mxu0 %v292
    %v395 = vpop.f32.mrb[0].mxu0
    %v396 = vadd.f32 0.0, %v395
    %v397 = vpop.f32.mrb[0].mxu0
    %398 = vdwg.mxu0
    %v399 = vmul.f32 %v253, %v253
    %v400 = vmul.f32 %v254, %v254
    %v401 = vmul.f32 %v255, %v255
    %v402 = vmul.f32 %v256, %v256
    %v403 = vmul.f32 %v257, %v257
    %v404 = vmul.f32 %v258, %v258
    %v405 = vmul.f32 %v259, %v259
    %v406 = vmul.f32 %v260, %v260
    %v408 = vsel %vm269, %v399, 0
    %v411 = vsel %vm269, %v400, 0
    %v414 = vsel %vm269, %v401, 0
    %v417 = vsel %vm269, %v402, 0
    %v420 = vsel %vm269, %v403, 0
    %v423 = vsel %vm269, %v404, 0
    %v426 = vsel %vm269, %v405, 0
    %v429 = vsel %vm269, %v406, 0
    %431 = vmatprep.subr.mxu0 0.0
    %432 = vmatpush1.msra.mxu0 %v261
    %433 = vmatprep.subr.mxu0 0.0
    %434 = vmatpush1.msra.mxu0 %v262
    %435 = vmatprep.subr.mxu0 0.0
    %436 = vmatpush1.msra.mxu0 %v263
    %437 = vmatprep.subr.mxu0 0.0
    %438 = vmatpush1.msra.mxu0 %v264
    %439 = vmatprep.subr.mxu0 0.0
    %440 = vmatpush1.msra.mxu0 %v265
    %441 = vmatprep.subr.mxu0 0.0
    %442 = vmatpush1.msra.mxu0 %v266
    %443 = vmatprep.subr.mxu0 0.0
    %444 = vmatpush1.msra.mxu0 %v267
    %445 = vmatprep.subr.mxu0 0.0
    %446 = vmatpush1.msra.mxu0 %v268
    %447 = vmatprep.subr.mxu0 0.0
    %448 = vmatpush1.msra.mxu0 0.0
    %449 = vmatprep.subr.mxu0 0.0
    %450 = vmatpush1.msra.mxu0 0.0
    %451 = vmatprep.subr.mxu0 0.0
    %452 = vmatpush1.msra.mxu0 0.0
    %453 = vmatprep.subr.mxu0 0.0
    %454 = vmatpush1.msra.mxu0 0.0
    %455 = vmatprep.subr.mxu0 0.0
    %456 = vmatpush1.msra.mxu0 0.0
    %457 = vmatprep.subr.mxu0 0.0
    %458 = vmatpush1.msra.mxu0 0.0
    %459 = vmatprep.subr.mxu0 0.0
    %460 = vmatpush1.msra.mxu0 0.0
    %461 = vmatprep.subr.mxu0 0.0
    %462 = vmatpush1.msra.mxu0 0.0
    %463 = vmatprep.subr.mxu0 0.0
    %464 = vmatpush1.msra.mxu0 0.0
    %465 = vmatprep.subr.mxu0 0.0
    %466 = vmatpush1.msra.mxu0 0.0
    %467 = vmatprep.subr.mxu0 0.0
    %468 = vmatpush1.msra.mxu0 0.0
    %469 = vmatprep.subr.mxu0 0.0
    %470 = vmatpush1.msra.mxu0 0.0
    %471 = vmatprep.subr.mxu0 0.0
    %472 = vmatpush1.msra.mxu0 0.0
    %473 = vmatprep.subr.mxu0 0.0
    %474 = vmatpush1.msra.mxu0 0.0
    %475 = vmatprep.subr.mxu0 0.0
    %476 = vmatpush1.msra.mxu0 0.0
    %477 = vmatprep.subr.mxu0 0.0
    %478 = vmatpush1.msra.mxu0 0.0
    %479 = vmatprep.subr.mxu0 0.0
    %480 = vmatpush1.msra.mxu0 0.0
    %481 = vmatprep.subr.mxu0 0.0
    %482 = vmatpush1.msra.mxu0 0.0
    %483 = vmatprep.subr.mxu0 0.0
    %484 = vmatpush1.msra.mxu0 0.0
    %485 = vmatprep.subr.mxu0 0.0
    %486 = vmatpush1.msra.mxu0 0.0
    %487 = vmatprep.subr.mxu0 0.0
    %488 = vmatpush1.msra.mxu0 0.0
    %489 = vmatprep.subr.mxu0 0.0
    %490 = vmatpush1.msra.mxu0 0.0
    %491 = vmatprep.subr.mxu0 0.0
    %492 = vmatpush1.msra.mxu0 0.0
    %493 = vmatprep.subr.mxu0 0.0
    %494 = vmatpush1.msra.mxu0 0.0
    %495 = vmatprep.mubr.f32.mxu0 0.0
    %496 = vmatmul.mubr.f32.gmra.mrb[0].mxu0 %v408
    %v497 = vpop.f32.mrb[0].mxu0
    %v498 = vadd.f32 0.0, %v497
    %v499 = vpop.f32.mrb[0].mxu0
    %500 = vmatprep.mubr.f32.mxu0 0.0
    %501 = vmatmul.mubr.f32.gmra.mrb[0].mxu0 %v411
    %v502 = vpop.f32.mrb[0].mxu0
    %v503 = vadd.f32 0.0, %v502
    %v504 = vpop.f32.mrb[0].mxu0
    %505 = vmatprep.mubr.f32.mxu0 0.0
    %506 = vmatmul.mubr.f32.gmra.mrb[0].mxu0 %v414
    %v507 = vpop.f32.mrb[0].mxu0
    %v508 = vadd.f32 0.0, %v507
    %v509 = vpop.f32.mrb[0].mxu0
    %510 = vmatprep.mubr.f32.mxu0 0.0
    %511 = vmatmul.mubr.f32.gmra.mrb[0].mxu0 %v417
    %v512 = vpop.f32.mrb[0].mxu0
    %v513 = vadd.f32 0.0, %v512
    %v514 = vpop.f32.mrb[0].mxu0
    %515 = vmatprep.mubr.f32.mxu0 0.0
    %516 = vmatmul.mubr.f32.gmra.mrb[0].mxu0 %v420
    %v517 = vpop.f32.mrb[0].mxu0
    %v518 = vadd.f32 0.0, %v517
    %v519 = vpop.f32.mrb[0].mxu0
    %520 = vmatprep.mubr.f32.mxu0 0.0
    %521 = vmatmul.mubr.f32.gmra.mrb[0].mxu0 %v423
    %v522 = vpop.f32.mrb[0].mxu0
    %v523 = vadd.f32 0.0, %v522
    %v524 = vpop.f32.mrb[0].mxu0
    %525 = vmatprep.mubr.f32.mxu0 0.0
    %526 = vmatmul.mubr.f32.gmra.mrb[0].mxu0 %v426
    %v527 = vpop.f32.mrb[0].mxu0
    %v528 = vadd.f32 0.0, %v527
    %v529 = vpop.f32.mrb[0].mxu0
    %530 = vmatprep.mubr.f32.mxu0 0.0
    %531 = vmatmul.mubr.f32.gmra.mrb[0].mxu0 %v429
    %v532 = vpop.f32.mrb[0].mxu0
    %v533 = vadd.f32 0.0, %v532
    %v534 = vpop.f32.mrb[0].mxu0
    %535 = vdwg.mxu0
    %v536 = vmul.f32 %v361, %v361
    %v537 = vmul.f32 %v366, %v366
    %v538 = vmul.f32 %v371, %v371
    %v539 = vmul.f32 %v376, %v376
    %v540 = vmul.f32 %v381, %v381
    %v541 = vmul.f32 %v386, %v386
    %v542 = vmul.f32 %v391, %v391
    %v543 = vmul.f32 %v396, %v396
    %v544 = vsub.f32 %v498, %v536
    %v545 = vsub.f32 %v503, %v537
    %v546 = vsub.f32 %v508, %v538
    %v547 = vsub.f32 %v513, %v539
    %v548 = vsub.f32 %v518, %v540
    %v549 = vsub.f32 %v523, %v541
    %v550 = vsub.f32 %v528, %v542
    %v551 = vsub.f32 %v533, %v543
    %v552 = vmax.f32 %v544, 0.0
    %v553 = vmax.f32 %v545, 0.0
    %v554 = vmax.f32 %v546, 0.0
    %v555 = vmax.f32 %v547, 0.0
    %v556 = vmax.f32 %v548, 0.0
    %v557 = vmax.f32 %v549, 0.0
    %v558 = vmax.f32 %v550, 0.0
    %v559 = vmax.f32 %v551, 0.0
    %v560 = vsub.f32 %v253, %v361
    %v561 = vsub.f32 %v254, %v366
    %v562 = vsub.f32 %v255, %v371
    %v563 = vsub.f32 %v256, %v376
    %v564 = vsub.f32 %v257, %v381
    %v565 = vsub.f32 %v258, %v386
    %v566 = vsub.f32 %v259, %v391
    %v567 = vsub.f32 %v260, %v396
    %v568 = vadd.f32 %v552, 1e-05
    %v569 = vadd.f32 %v553, 1e-05
    %v570 = vadd.f32 %v554, 1e-05
    %v571 = vadd.f32 %v555, 1e-05
    %v572 = vadd.f32 %v556, 1e-05
    %v573 = vadd.f32 %v557, 1e-05
    %v574 = vadd.f32 %v558, 1e-05
    %v575 = vadd.f32 %v559, 1e-05
    %v576 = vrsqrt.pop %v568
    %v577 = vrsqrt.pop %v569
    %v578 = vrsqrt.pop %v570
    %v579 = vrsqrt.pop %v571
    %v580 = vrsqrt.pop %v572
    %v581 = vrsqrt.pop %v573
    %v582 = vrsqrt.pop %v574
    %v583 = vrsqrt.pop %v575
    %v584 = vmul.f32 %v560, %v576
    %v585 = vmul.f32 %v561, %v577
    %v586 = vmul.f32 %v562, %v578
    %v587 = vmul.f32 %v563, %v579
    %v588 = vmul.f32 %v564, %v580
    %v589 = vmul.f32 %v565, %v581
    %v590 = vmul.f32 %v566, %v582
    %v591 = vmul.f32 %v567, %v583
    %v592 = vld [vmem:[#allocation7] sm:$0x1]
    %v594 = vlaneseq
    %v595 = vshrl.u32 %v594, 7
    %v596 = vsub.s32 0, %v595
    %v597 = vrot.slane %v592, %v596
    %v599 = vmul.f32 %v584, %v597
    %v600 = vmul.f32 %v585, %v597
    %v601 = vmul.f32 %v586, %v597
    %v602 = vmul.f32 %v587, %v597
    %v603 = vmul.f32 %v588, %v597
    %v604 = vmul.f32 %v589, %v597
    %v605 = vmul.f32 %v590, %v597
    %v606 = vmul.f32 %v591, %v597
    %v607 = vld [vmem:[#allocation9] sm:$0x1]
    %v609 = vlaneseq
    %v610 = vshrl.u32 %v609, 7
    %v611 = vsub.s32 0, %v610
    %v612 = vrot.slane %v607, %v611
    %v614 = vadd.f32 %v599, %v612
    %v615 = vadd.f32 %v600, %v612
    %v616 = vadd.f32 %v601, %v612
    %v617 = vadd.f32 %v602, %v612
    %v618 = vadd.f32 %v603, %v612
    %v619 = vadd.f32 %v604, %v612
    %v620 = vadd.f32 %v605, %v612
    %v621 = vadd.f32 %v606, %v612
    %v622 = vpack.c.bf16 %v615, %v614
    %v623 = vpack.c.bf16 %v617, %v616
    %v624 = vpack.c.bf16 %v619, %v618
    %v625 = vpack.c.bf16 %v621, %v620
    %v626 = vld [vmem:[%s4] sm:$0xff]
    %v627 = vld [vmem:[%s4 + $0x8] sm:$0xf]
    %v628 = vld [vmem:[%s4 + $0xc] sm:$0xff]
    %v629 = vld [vmem:[%s4 + $0x14] sm:$0xf]
    %v630 = vld [vmem:[%s4 + $0x18] sm:$0xff]
    %v631 = vld [vmem:[%s4 + $0x20] sm:$0xf]
    %v632 = vld [vmem:[%s4 + $0x24] sm:$0xff]
    %v633 = vld [vmem:[%s4 + $0x2c] sm:$0xf]
    %v634 = vld [vmem:[%s4 + $0x30] sm:$0xff]
    %v635 = vld [vmem:[%s4 + $0x38] sm:$0xf]
    %v636 = vld [vmem:[%s4 + $0x3c] sm:$0xff]
    %v637 = vld [vmem:[%s4 + $0x44] sm:$0xf]
    %v638 = vld [vmem:[%s4 + $0x48] sm:$0xff]
    %v639 = vld [vmem:[%s4 + $0x50] sm:$0xf]
    %v640 = vld [vmem:[%s4 + $0x54] sm:$0xff]
    %v641 = vld [vmem:[%s4 + $0x5c] sm:$0xf]
    %v658 = vunpack.c.l.b16 %v626
    %v659 = vunpack.c.h.b16 %v626
    %v660 = vunpack.c.l.b16 %v627
    %v661 = vunpack.c.l.b16 %v628
    %v662 = vunpack.c.h.b16 %v628
    %v663 = vunpack.c.l.b16 %v629
    %v664 = vunpack.c.l.b16 %v630
    %v665 = vunpack.c.h.b16 %v630
    %v666 = vunpack.c.l.b16 %v631
    %v667 = vunpack.c.l.b16 %v632
    %v668 = vunpack.c.h.b16 %v632
    %v669 = vunpack.c.l.b16 %v633
    %v670 = vunpack.c.l.b16 %v634
    %v671 = vunpack.c.h.b16 %v634
    %v672 = vunpack.c.l.b16 %v635
    %v673 = vunpack.c.l.b16 %v636
    %v674 = vunpack.c.h.b16 %v636
    %v675 = vunpack.c.l.b16 %v637
    %v676 = vunpack.c.l.b16 %v638
    %v677 = vunpack.c.h.b16 %v638
    %v678 = vunpack.c.l.b16 %v639
    %v679 = vunpack.c.l.b16 %v640
    %v680 = vunpack.c.h.b16 %v640
    %v681 = vunpack.c.l.b16 %v641
    %v682 = vpack.c.b16 %v661, %v658
    %v683 = vpack.c.b16 %v662, %v659
    %v684 = vpack.c.b16 %v663, %v660
    %v685 = vpack.c.b16 %v667, %v664
    %v686 = vpack.c.b16 %v668, %v665
    %v687 = vpack.c.b16 %v669, %v666
    %v688 = vpack.c.b16 %v673, %v670
    %v689 = vpack.c.b16 %v674, %v671
    %v690 = vpack.c.b16 %v675, %v672
    %v691 = vpack.c.b16 %v679, %v676
    %v692 = vpack.c.b16 %v680, %v677
    %v693 = vpack.c.b16 %v681, %v678
    %v707 = vsel %vm269, %v622, 0
    %v710 = vsel %vm269, %v623, 0
    %v713 = vsel %vm269, %v624, 0
    %v716 = vsel %vm269, %v625, 0
    %718 = vmatprep.subr.bf16.mxu0 %v683
    %719 = vmatpush1.bf16.msra.mxu0 %v682
    %720 = vmatprep.subr.bf16.mxu0 %v686
    %721 = vmatpush1.bf16.msra.mxu0 %v685
    %722 = vmatprep.subr.bf16.mxu0 %v689
    %723 = vmatpush1.bf16.msra.mxu0 %v688
    %724 = vmatprep.subr.bf16.mxu0 %v692
    %725 = vmatpush1.bf16.msra.mxu0 %v691
    %726 = vmatprep.subr.bf16.mxu0 0
    %727 = vmatpush1.bf16.msra.mxu0 0
    %728 = vmatprep.subr.bf16.mxu0 0
    %729 = vmatpush1.bf16.msra.mxu0 0
    %730 = vmatprep.subr.bf16.mxu0 0
    %731 = vmatpush1.bf16.msra.mxu0 0
    %732 = vmatprep.subr.bf16.mxu0 0
    %733 = vmatpush1.bf16.msra.mxu0 0
    %734 = vmatprep.subr.bf16.mxu0 0
    %735 = vmatpush1.bf16.msra.mxu0 0
    %736 = vmatprep.subr.bf16.mxu0 0
    %737 = vmatpush1.bf16.msra.mxu0 0
    %738 = vmatprep.subr.bf16.mxu0 0
    %739 = vmatpush1.bf16.msra.mxu0 0
    %740 = vmatprep.subr.bf16.mxu0 0
    %741 = vmatpush1.bf16.msra.mxu0 0
    %742 = vmatprep.subr.bf16.mxu0 0
    %743 = vmatpush1.bf16.msra.mxu0 0
    %744 = vmatprep.subr.bf16.mxu0 0
    %745 = vmatpush1.bf16.msra.mxu0 0
    %746 = vmatprep.subr.bf16.mxu0 0
    %747 = vmatpush1.bf16.msra.mxu0 0
    %748 = vmatprep.subr.bf16.mxu0 0
    %749 = vmatpush1.bf16.msra.mxu0 0
    %750 = vmatprep.mubr.bf16.mxu0 0
    %751 = vmatmul.mubr.bf16.gmra.mrb[0].mxu0 %v707
    %v752 = vpop.f32.mrb[0].mxu0
    %v753 = vadd.f32 0.0, %v752
    %v754 = vpop.f32.mrb[0].mxu0
    %v755 = vadd.f32 0.0, %v754
    %v756 = vpop.f32.mrb[0].mxu0
    %v757 = vadd.f32 0.0, %v756
    %v758 = vpop.f32.mrb[0].mxu0
    %v759 = vadd.f32 0.0, %v758
    %760 = vmatprep.mubr.bf16.mxu0 0
    %761 = vmatmul.mubr.bf16.gmra.mrb[0].mxu0 %v710
    %v762 = vpop.f32.mrb[0].mxu0
    %v763 = vadd.f32 0.0, %v762
    %v764 = vpop.f32.mrb[0].mxu0
    %v765 = vadd.f32 0.0, %v764
    %v766 = vpop.f32.mrb[0].mxu0
    %v767 = vadd.f32 0.0, %v766
    %v768 = vpop.f32.mrb[0].mxu0
    %v769 = vadd.f32 0.0, %v768
    %770 = vmatprep.mubr.bf16.mxu0 0
    %771 = vmatmul.mubr.bf16.gmra.mrb[0].mxu0 %v713
    %v772 = vpop.f32.mrb[0].mxu0
    %v773 = vadd.f32 0.0, %v772
    %v774 = vpop.f32.mrb[0].mxu0
    %v775 = vadd.f32 0.0, %v774
    %v776 = vpop.f32.mrb[0].mxu0
    %v777 = vadd.f32 0.0, %v776
    %v778 = vpop.f32.mrb[0].mxu0
    %v779 = vadd.f32 0.0, %v778
    %780 = vmatprep.mubr.bf16.mxu0 0
    %781 = vmatmul.mubr.bf16.gmra.mrb[0].mxu0 %v716
    %v782 = vpop.f32.mrb[0].mxu0
    %v783 = vadd.f32 0.0, %v782
    %v784 = vpop.f32.mrb[0].mxu0
    %v785 = vadd.f32 0.0, %v784
    %v786 = vpop.f32.mrb[0].mxu0
    %v787 = vadd.f32 0.0, %v786
    %v788 = vpop.f32.mrb[0].mxu0
    %v789 = vadd.f32 0.0, %v788
    %790 = vdwg.mxu0
    %791 = vmatprep.subr.bf16.mxu0 0
    %792 = vmatpush1.bf16.msra.mxu0 %v684
    %793 = vmatprep.subr.bf16.mxu0 0
    %794 = vmatpush1.bf16.msra.mxu0 %v687
    %795 = vmatprep.subr.bf16.mxu0 0
    %796 = vmatpush1.bf16.msra.mxu0 %v690
    %797 = vmatprep.subr.bf16.mxu0 0
    %798 = vmatpush1.bf16.msra.mxu0 %v693
    %799 = vmatprep.subr.bf16.mxu0 0
    %800 = vmatpush1.bf16.msra.mxu0 0
    %801 = vmatprep.subr.bf16.mxu0 0
    %802 = vmatpush1.bf16.msra.mxu0 0
    %803 = vmatprep.subr.bf16.mxu0 0
    %804 = vmatpush1.bf16.msra.mxu0 0
    %805 = vmatprep.subr.bf16.mxu0 0
    %806 = vmatpush1.bf16.msra.mxu0 0
    %807 = vmatprep.subr.bf16.mxu0 0
    %808 = vmatpush1.bf16.msra.mxu0 0
    %809 = vmatprep.subr.bf16.mxu0 0
    %810 = vmatpush1.bf16.msra.mxu0 0
    %811 = vmatprep.subr.bf16.mxu0 0
    %812 = vmatpush1.bf16.msra.mxu0 0
    %813 = vmatprep.subr.bf16.mxu0 0
    %814 = vmatpush1.bf16.msra.mxu0 0
    %815 = vmatprep.subr.bf16.mxu0 0
    %816 = vmatpush1.bf16.msra.mxu0 0
    %817 = vmatprep.subr.bf16.mxu0 0
    %818 = vmatpush1.bf16.msra.mxu0 0
    %819 = vmatprep.subr.bf16.mxu0 0
    %820 = vmatpush1.bf16.msra.mxu0 0
    %821 = vmatprep.subr.bf16.mxu0 0
    %822 = vmatpush1.bf16.msra.mxu0 0
    %823 = vmatprep.mubr.bf16.mxu0 0
    %824 = vmatmul.mubr.bf16.gmra.mrb[0].mxu0 %v707
    %v825 = vpop.f32.mrb[0].mxu0
    %v826 = vadd.f32 0.0, %v825
    %v827 = vpop.f32.mrb[0].mxu0
    %v828 = vpop.f32.mrb[0].mxu0
    %v829 = vadd.f32 0.0, %v828
    %v830 = vpop.f32.mrb[0].mxu0
    %831 = vmatprep.mubr.bf16.mxu0 0
    %832 = vmatmul.mubr.bf16.gmra.mrb[0].mxu0 %v710
    %v833 = vpop.f32.mrb[0].mxu0
    %v834 = vadd.f32 0.0, %v833
    %v835 = vpop.f32.mrb[0].mxu0
    %v836 = vpop.f32.mrb[0].mxu0
    %v837 = vadd.f32 0.0, %v836
    %v838 = vpop.f32.mrb[0].mxu0
    %839 = vmatprep.mubr.bf16.mxu0 0
    %840 = vmatmul.mubr.bf16.gmra.mrb[0].mxu0 %v713
    %v841 = vpop.f32.mrb[0].mxu0
    %v842 = vadd.f32 0.0, %v841
    %v843 = vpop.f32.mrb[0].mxu0
    %v844 = vpop.f32.mrb[0].mxu0
    %v845 = vadd.f32 0.0, %v844
    %v846 = vpop.f32.mrb[0].mxu0
    %847 = vmatprep.mubr.bf16.mxu0 0
    %848 = vmatmul.mubr.bf16.gmra.mrb[0].mxu0 %v716
    %v849 = vpop.f32.mrb[0].mxu0
    %v850 = vadd.f32 0.0, %v849
    %v851 = vpop.f32.mrb[0].mxu0
    %v852 = vpop.f32.mrb[0].mxu0
    %v853 = vadd.f32 0.0, %v852
    %v854 = vpop.f32.mrb[0].mxu0
    %855 = vdwg.mxu0
    %v856 = vld [vmem:[#allocation10] sm:$0x1]
    %v858 = vlaneseq
    %v859 = vshrl.u32 %v858, 7
    %v860 = vsub.s32 0, %v859
    %v861 = vrot.slane %v856, %v860
    %v863 = vadd.f32 %v826, %v861
    %v864 = vadd.f32 %v829, %v861
    %v865 = vadd.f32 %v834, %v861
    %v866 = vadd.f32 %v837, %v861
    %v867 = vadd.f32 %v842, %v861
    %v868 = vadd.f32 %v845, %v861
    %v869 = vadd.f32 %v850, %v861
    %v870 = vadd.f32 %v853, %v861
    %v871 = vld [vmem:[#allocation12] sm:$0xf]
    %v872 = vld [vmem:[#allocation13] sm:$0x1]
    %v873 = vlaneseq
    %v874 = vshrl.u32 %v873, 7
    %v875 = vsub.s32 3, %v874
    %v876 = vrot.slane %v871, %v875
    %v877 = vmul.f32 %v753, %v876
    %v878 = vmul.f32 %v757, %v876
    %v879 = vmul.f32 %v763, %v876
    %v880 = vmul.f32 %v767, %v876
    %v881 = vmul.f32 %v773, %v876
    %v882 = vmul.f32 %v777, %v876
    %v883 = vmul.f32 %v783, %v876
    %v884 = vmul.f32 %v787, %v876
    %v886 = vlaneseq
    %v887 = vshrl.u32 %v886, 7
    %v888 = vsub.s32 0, %v887
    %v889 = vrot.slane %v872, %v888
    %v891 = vadd.f32 %v889, %v877
    %v892 = vadd.f32 %v889, %v878
    %v893 = vadd.f32 %v889, %v879
    %v894 = vadd.f32 %v889, %v880
    %v895 = vadd.f32 %v889, %v881
    %v896 = vadd.f32 %v889, %v882
    %v897 = vadd.f32 %v889, %v883
    %v898 = vadd.f32 %v889, %v884
    %v899 = vrot.slane %v753, 7
    %v900 = vrot.slane %v757, 7
    %v901 = vrot.slane %v763, 7
    %v902 = vrot.slane %v767, 7
    %v903 = vrot.slane %v773, 7
    %v904 = vrot.slane %v777, 7
    %v905 = vrot.slane %v783, 7
    %v906 = vrot.slane %v787, 7
    %v907 = vlaneseq
    %v908 = vshrl.u32 %v907, 7
    %vm909 = vcmp.lt.s32.totalorder %v908, 1
    %v910 = vsel %vm909, %v905, %v906
    %v911 = vsel %vm909, %v904, %v905
    %v912 = vsel %vm909, %v903, %v904
    %v913 = vsel %vm909, %v902, %v903
    %v914 = vsel %vm909, %v901, %v902
    %v915 = vsel %vm909, %v900, %v901
    %v916 = vsel %vm909, %v899, %v900
    %v917 = vsel %vm909, %v906, %v899
    %919 = vset.pattern.permute.xlu0 9
    %920 = vperm.xlu0 %919, %v245
    %v921 = vpop.permute.xlu0 %920
    %924 = vset.pattern.permute.xlu0 9
    %925 = vperm.xlu0 %924, %v246
    %v926 = vpop.permute.xlu0 %925
    %929 = vset.pattern.permute.xlu0 9
    %930 = vperm.xlu0 %929, %v247
    %v931 = vpop.permute.xlu0 %930
    %934 = vset.pattern.permute.xlu0 9
    %935 = vperm.xlu0 %934, %v248
    %v936 = vpop.permute.xlu0 %935
    %939 = vset.pattern.permute.xlu0 9
    %940 = vperm.xlu0 %939, %v249
    %v941 = vpop.permute.xlu0 %940
    %944 = vset.pattern.permute.xlu0 9
    %945 = vperm.xlu0 %944, %v250
    %v946 = vpop.permute.xlu0 %945
    %949 = vset.pattern.permute.xlu0 9
    %950 = vperm.xlu0 %949, %v251
    %v951 = vpop.permute.xlu0 %950
    %954 = vset.pattern.permute.xlu0 9
    %955 = vperm.xlu0 %954, %v252
    %v956 = vpop.permute.xlu0 %955
    %v958 = vmul.f32 %v917, %v921
    %v959 = vmul.f32 %v916, %v926
    %v960 = vmul.f32 %v915, %v931
    %v961 = vmul.f32 %v914, %v936
    %v962 = vmul.f32 %v913, %v941
    %v963 = vmul.f32 %v912, %v946
    %v964 = vmul.f32 %v911, %v951
    %v965 = vmul.f32 %v910, %v956
    %v966 = vlaneseq
    %v967 = vshrl.u32 %v966, 7
    %v968 = vsub.s32 2, %v967
    %v969 = vrot.slane %v871, %v968
    %v970 = vmul.f32 %v958, %v969
    %v971 = vmul.f32 %v959, %v969
    %v972 = vmul.f32 %v960, %v969
    %v973 = vmul.f32 %v961, %v969
    %v974 = vmul.f32 %v962, %v969
    %v975 = vmul.f32 %v963, %v969
    %v976 = vmul.f32 %v964, %v969
    %v977 = vmul.f32 %v965, %v969
    %v978 = vadd.f32 %v891, %v970
    %v979 = vadd.f32 %v892, %v971
    %v980 = vadd.f32 %v893, %v972
    %v981 = vadd.f32 %v894, %v973
    %v982 = vadd.f32 %v895, %v974
    %v983 = vadd.f32 %v896, %v975
    %v984 = vadd.f32 %v897, %v976
    %v985 = vadd.f32 %v898, %v977
    %v986 = vrot.slane %v753, 6
    %v987 = vrot.slane %v757, 6
    %v988 = vrot.slane %v763, 6
    %v989 = vrot.slane %v767, 6
    %v990 = vrot.slane %v773, 6
    %v991 = vrot.slane %v777, 6
    %v992 = vrot.slane %v783, 6
    %v993 = vrot.slane %v787, 6
    %vm994 = vcmp.lt.s32.totalorder %v908, 2
    %v995 = vsel %vm994, %v992, %v993
    %v996 = vsel %vm994, %v991, %v992
    %v997 = vsel %vm994, %v990, %v991
    %v998 = vsel %vm994, %v989, %v990
    %v999 = vsel %vm994, %v988, %v989
    %v1000 = vsel %vm994, %v987, %v988
    %v1001 = vsel %vm994, %v986, %v987
    %v1002 = vsel %vm994, %v993, %v986
    %1003 = vset.pattern.permute.xlu0 10
    %1004 = vperm.xlu0 %1003, %v245
    %v1005 = vpop.permute.xlu0 %1004
    %1007 = vset.pattern.permute.xlu0 10
    %1008 = vperm.xlu0 %1007, %v246
    %v1009 = vpop.permute.xlu0 %1008
    %1011 = vset.pattern.permute.xlu0 10
    %1012 = vperm.xlu0 %1011, %v247
    %v1013 = vpop.permute.xlu0 %1012
    %1015 = vset.pattern.permute.xlu0 10
    %1016 = vperm.xlu0 %1015, %v248
    %v1017 = vpop.permute.xlu0 %1016
    %1019 = vset.pattern.permute.xlu0 10
    %1020 = vperm.xlu0 %1019, %v249
    %v1021 = vpop.permute.xlu0 %1020
    %1023 = vset.pattern.permute.xlu0 10
    %1024 = vperm.xlu0 %1023, %v250
    %v1025 = vpop.permute.xlu0 %1024
    %1027 = vset.pattern.permute.xlu0 10
    %1028 = vperm.xlu0 %1027, %v251
    %v1029 = vpop.permute.xlu0 %1028
    %1031 = vset.pattern.permute.xlu0 10
    %1032 = vperm.xlu0 %1031, %v252
    %v1033 = vpop.permute.xlu0 %1032
    %v1035 = vmul.f32 %v1002, %v1005
    %v1036 = vmul.f32 %v1001, %v1009
    %v1037 = vmul.f32 %v1000, %v1013
    %v1038 = vmul.f32 %v999, %v1017
    %v1039 = vmul.f32 %v998, %v1021
    %v1040 = vmul.f32 %v997, %v1025
    %v1041 = vmul.f32 %v996, %v1029
    %v1042 = vmul.f32 %v995, %v1033
    %v1043 = vlaneseq
    %v1044 = vshrl.u32 %v1043, 7
    %v1045 = vsub.s32 1, %v1044
    %v1046 = vrot.slane %v871, %v1045
    %v1047 = vmul.f32 %v1035, %v1046
    %v1048 = vmul.f32 %v1036, %v1046
    %v1049 = vmul.f32 %v1037, %v1046
    %v1050 = vmul.f32 %v1038, %v1046
    %v1051 = vmul.f32 %v1039, %v1046
    %v1052 = vmul.f32 %v1040, %v1046
    %v1053 = vmul.f32 %v1041, %v1046
    %v1054 = vmul.f32 %v1042, %v1046
    %v1055 = vadd.f32 %v978, %v1047
    %v1056 = vadd.f32 %v979, %v1048
    %v1057 = vadd.f32 %v980, %v1049
    %v1058 = vadd.f32 %v981, %v1050
    %v1059 = vadd.f32 %v982, %v1051
    %v1060 = vadd.f32 %v983, %v1052
    %v1061 = vadd.f32 %v984, %v1053
    %v1062 = vadd.f32 %v985, %v1054
    %v1063 = vrot.slane %v753, 5
    %v1064 = vrot.slane %v757, 5
    %v1065 = vrot.slane %v763, 5
    %v1066 = vrot.slane %v767, 5
    %v1067 = vrot.slane %v773, 5
    %v1068 = vrot.slane %v777, 5
    %v1069 = vrot.slane %v783, 5
    %v1070 = vrot.slane %v787, 5
    %vm1071 = vcmp.lt.s32.totalorder %v908, 3
    %v1072 = vsel %vm1071, %v1069, %v1070
    %v1073 = vsel %vm1071, %v1068, %v1069
    %v1074 = vsel %vm1071, %v1067, %v1068
    %v1075 = vsel %vm1071, %v1066, %v1067
    %v1076 = vsel %vm1071, %v1065, %v1066
    %v1077 = vsel %vm1071, %v1064, %v1065
    %v1078 = vsel %vm1071, %v1063, %v1064
    %v1079 = vsel %vm1071, %v1070, %v1063
    %1080 = vset.pattern.permute.xlu0 11
    %1081 = vperm.xlu0 %1080, %v245
    %v1082 = vpop.permute.xlu0 %1081
    %1084 = vset.pattern.permute.xlu0 11
    %1085 = vperm.xlu0 %1084, %v246
    %v1086 = vpop.permute.xlu0 %1085
    %1088 = vset.pattern.permute.xlu0 11
    %1089 = vperm.xlu0 %1088, %v247
    %v1090 = vpop.permute.xlu0 %1089
    %1092 = vset.pattern.permute.xlu0 11
    %1093 = vperm.xlu0 %1092, %v248
    %v1094 = vpop.permute.xlu0 %1093
    %1096 = vset.pattern.permute.xlu0 11
    %1097 = vperm.xlu0 %1096, %v249
    %v1098 = vpop.permute.xlu0 %1097
    %1100 = vset.pattern.permute.xlu0 11
    %1101 = vperm.xlu0 %1100, %v250
    %v1102 = vpop.permute.xlu0 %1101
    %1104 = vset.pattern.permute.xlu0 11
    %1105 = vperm.xlu0 %1104, %v251
    %v1106 = vpop.permute.xlu0 %1105
    %1108 = vset.pattern.permute.xlu0 11
    %1109 = vperm.xlu0 %1108, %v252
    %v1110 = vpop.permute.xlu0 %1109
    %v1112 = vmul.f32 %v1079, %v1082
    %v1113 = vmul.f32 %v1078, %v1086
    %v1114 = vmul.f32 %v1077, %v1090
    %v1115 = vmul.f32 %v1076, %v1094
    %v1116 = vmul.f32 %v1075, %v1098
    %v1117 = vmul.f32 %v1074, %v1102
    %v1118 = vmul.f32 %v1073, %v1106
    %v1119 = vmul.f32 %v1072, %v1110
    %v1120 = vlaneseq
    %v1121 = vshrl.u32 %v1120, 7
    %v1122 = vsub.s32 0, %v1121
    %v1123 = vrot.slane %v871, %v1122
    %v1124 = vmul.f32 %v1112, %v1123
    %v1125 = vmul.f32 %v1113, %v1123
    %v1126 = vmul.f32 %v1114, %v1123
    %v1127 = vmul.f32 %v1115, %v1123
    %v1128 = vmul.f32 %v1116, %v1123
    %v1129 = vmul.f32 %v1117, %v1123
    %v1130 = vmul.f32 %v1118, %v1123
    %v1131 = vmul.f32 %v1119, %v1123
    %v1132 = vadd.f32 %v1055, %v1124
    %v1133 = vadd.f32 %v1056, %v1125
    %v1134 = vadd.f32 %v1057, %v1126
    %v1135 = vadd.f32 %v1058, %v1127
    %v1136 = vadd.f32 %v1059, %v1128
    %v1137 = vadd.f32 %v1060, %v1129
    %v1138 = vadd.f32 %v1061, %v1130
    %v1139 = vadd.f32 %v1062, %v1131
    %v1140 = vsub.f32 0.0, %v1132
    %v1141 = vsub.f32 0.0, %v1133
    %v1142 = vsub.f32 0.0, %v1134
    %v1143 = vsub.f32 0.0, %v1135
    %v1144 = vsub.f32 0.0, %v1136
    %v1145 = vsub.f32 0.0, %v1137
    %v1146 = vsub.f32 0.0, %v1138
    %v1147 = vsub.f32 0.0, %v1139
    %v1148 = vmul.f32 %v1140, 1.442695
    %v1149 = vpow.pop %v1148
    %v1150 = vmul.f32 %v1141, 1.442695
    %v1151 = vpow.pop %v1150
    %v1152 = vmul.f32 %v1142, 1.442695
    %v1153 = vpow.pop %v1152
    %v1154 = vmul.f32 %v1143, 1.442695
    %v1155 = vpow.pop %v1154
    %v1156 = vmul.f32 %v1144, 1.442695
    %v1157 = vpow.pop %v1156
    %v1158 = vmul.f32 %v1145, 1.442695
    %v1159 = vpow.pop %v1158
    %v1160 = vmul.f32 %v1146, 1.442695
    %v1161 = vpow.pop %v1160
    %v1162 = vmul.f32 %v1147, 1.442695
    %v1163 = vpow.pop %v1162
    %v1164 = vadd.f32 %v1149, 1.0
    %v1165 = vadd.f32 %v1151, 1.0
    %v1166 = vadd.f32 %v1153, 1.0
    %v1167 = vadd.f32 %v1155, 1.0
    %v1168 = vadd.f32 %v1157, 1.0
    %v1169 = vadd.f32 %v1159, 1.0
    %v1170 = vadd.f32 %v1161, 1.0
    %v1171 = vadd.f32 %v1163, 1.0
    %v1172 = vrcp.pop %v1164
    %v1173 = vrcp.pop %v1165
    %v1174 = vrcp.pop %v1166
    %v1175 = vrcp.pop %v1167
    %v1176 = vrcp.pop %v1168
    %v1177 = vrcp.pop %v1169
    %v1178 = vrcp.pop %v1170
    %v1179 = vrcp.pop %v1171
    %v1180 = vmul.f32 %v1132, %v1172
    %v1181 = vmul.f32 %v1133, %v1173
    %v1182 = vmul.f32 %v1134, %v1174
    %v1183 = vmul.f32 %v1135, %v1175
    %v1184 = vmul.f32 %v1136, %v1176
    %v1185 = vmul.f32 %v1137, %v1177
    %v1186 = vmul.f32 %v1138, %v1178
    %v1187 = vmul.f32 %v1139, %v1179
    %v1188 = vpack.c.bf16 %v1181, %v1180
    %v1189 = vpack.c.bf16 %v1183, %v1182
    %v1190 = vpack.c.bf16 %v1185, %v1184
    %v1191 = vpack.c.bf16 %v1187, %v1186
    %v1192 = vld [vmem:[#allocation16] sm:$0xff]
    %v1193 = vld [vmem:[#allocation16 + $0x8] sm:$0xff]
    %v1194 = vld [vmem:[#allocation16 + $0x10] sm:$0xff]
    %v1195 = vld [vmem:[#allocation16 + $0x18] sm:$0xff]
    %v1196 = vld [vmem:[#allocation16 + $0x20] sm:$0xf]
    %v1197 = vld [vmem:[#allocation16 + $0x24] sm:$0xff]
    %v1198 = vld [vmem:[#allocation16 + $0x2c] sm:$0xff]
    %v1199 = vld [vmem:[#allocation16 + $0x34] sm:$0xff]
    %v1200 = vld [vmem:[#allocation16 + $0x3c] sm:$0xff]
    %v1201 = vld [vmem:[#allocation16 + $0x44] sm:$0xf]
    %v1202 = vld [vmem:[#allocation16 + $0x48] sm:$0xff]
    %v1203 = vld [vmem:[#allocation16 + $0x50] sm:$0xff]
    %v1204 = vld [vmem:[#allocation16 + $0x58] sm:$0xff]
    %v1205 = vld [vmem:[#allocation16 + $0x60] sm:$0xff]
    %v1206 = vld [vmem:[#allocation16 + $0x68] sm:$0xf]
    %v1207 = vld [vmem:[#allocation16 + $0x6c] sm:$0xff]
    %v1208 = vld [vmem:[#allocation16 + $0x74] sm:$0xff]
    %v1209 = vld [vmem:[#allocation16 + $0x7c] sm:$0xff]
    %v1210 = vld [vmem:[#allocation16 + $0x84] sm:$0xff]
    %v1211 = vld [vmem:[#allocation16 + $0x8c] sm:$0xf]
    %v1212 = vld [vmem:[#allocation16 + $0x90] sm:$0xff]
    %v1213 = vld [vmem:[#allocation16 + $0x98] sm:$0xff]
    %v1214 = vld [vmem:[#allocation16 + $0xa0] sm:$0xff]
    %v1215 = vld [vmem:[#allocation16 + $0xa8] sm:$0xff]
    %v1216 = vld [vmem:[#allocation16 + $0xb0] sm:$0xf]
    %v1217 = vld [vmem:[#allocation16 + $0xb4] sm:$0xff]
    %v1218 = vld [vmem:[#allocation16 + $0xbc] sm:$0xff]
    %v1219 = vld [vmem:[#allocation16 + $0xc4] sm:$0xff]
    %v1220 = vld [vmem:[#allocation16 + $0xcc] sm:$0xff]
    %v1221 = vld [vmem:[#allocation16 + $0xd4] sm:$0xf]
    %v1222 = vld [vmem:[#allocation16 + $0xd8] sm:$0xff]
    %v1223 = vld [vmem:[#allocation16 + $0xe0] sm:$0xff]
    %v1224 = vld [vmem:[#allocation16 + $0xe8] sm:$0xff]
    %v1225 = vld [vmem:[#allocation16 + $0xf0] sm:$0xff]
    %v1226 = vld [vmem:[#allocation16 + $0xf8] sm:$0xf]
    %v1227 = vld [vmem:[#allocation16 + $0xfc] sm:$0xff]
    %v1228 = vld [vmem:[#allocation16 + $0x104] sm:$0xff]
    %v1229 = vld [vmem:[#allocation16 + $0x10c] sm:$0xff]
    %v1230 = vld [vmem:[#allocation16 + $0x114] sm:$0xff]
    %v1231 = vld [vmem:[#allocation16 + $0x11c] sm:$0xf]
    %v1232 = vld [vmem:[#allocation16 + $0x120] sm:$0xff]
    %v1233 = vld [vmem:[#allocation16 + $0x128] sm:$0xff]
    %v1234 = vld [vmem:[#allocation16 + $0x130] sm:$0xff]
    %v1235 = vld [vmem:[#allocation16 + $0x138] sm:$0xff]
    %v1236 = vld [vmem:[#allocation16 + $0x140] sm:$0xf]
    %v1237 = vld [vmem:[#allocation16 + $0x144] sm:$0xff]
    %v1238 = vld [vmem:[#allocation16 + $0x14c] sm:$0xff]
    %v1239 = vld [vmem:[#allocation16 + $0x154] sm:$0xff]
    %v1240 = vld [vmem:[#allocation16 + $0x15c] sm:$0xff]
    %v1241 = vld [vmem:[#allocation16 + $0x164] sm:$0xf]
    %v1242 = vld [vmem:[#allocation16 + $0x168] sm:$0xff]
    %v1243 = vld [vmem:[#allocation16 + $0x170] sm:$0xff]
    %v1244 = vld [vmem:[#allocation16 + $0x178] sm:$0xff]
    %v1245 = vld [vmem:[#allocation16 + $0x180] sm:$0xff]
    %v1246 = vld [vmem:[#allocation16 + $0x188] sm:$0xf]
    %v1247 = vld [vmem:[#allocation16 + $0x18c] sm:$0xff]
    %v1248 = vld [vmem:[#allocation16 + $0x194] sm:$0xff]
    %v1249 = vld [vmem:[#allocation16 + $0x19c] sm:$0xff]
    %v1250 = vld [vmem:[#allocation16 + $0x1a4] sm:$0xff]
    %v1251 = vld [vmem:[#allocation16 + $0x1ac] sm:$0xf]
    %v1252 = vld [vmem:[#allocation16 + $0x1b0] sm:$0xff]
    %v1253 = vld [vmem:[#allocation16 + $0x1b8] sm:$0xff]
    %v1254 = vld [vmem:[#allocation16 + $0x1c0] sm:$0xff]
    %v1255 = vld [vmem:[#allocation16 + $0x1c8] sm:$0xff]
    %v1256 = vld [vmem:[#allocation16 + $0x1d0] sm:$0xf]
    %v1257 = vld [vmem:[#allocation16 + $0x1d4] sm:$0xff]
    %v1258 = vld [vmem:[#allocation16 + $0x1dc] sm:$0xff]
    %v1259 = vld [vmem:[#allocation16 + $0x1e4] sm:$0xff]
    %v1260 = vld [vmem:[#allocation16 + $0x1ec] sm:$0xff]
    %v1261 = vld [vmem:[#allocation16 + $0x1f4] sm:$0xf]
    %v1262 = vld [vmem:[#allocation16 + $0x1f8] sm:$0xff]
    %v1263 = vld [vmem:[#allocation16 + $0x200] sm:$0xff]
    %v1264 = vld [vmem:[#allocation16 + $0x208] sm:$0xff]
    %v1265 = vld [vmem:[#allocation16 + $0x210] sm:$0xff]
    %v1266 = vld [vmem:[#allocation16 + $0x218] sm:$0xf]
    %v1267 = vld [vmem:[#allocation16 + $0x21c] sm:$0xff]
    %v1268 = vld [vmem:[#allocation16 + $0x224] sm:$0xff]
    %v1269 = vld [vmem:[#allocation16 + $0x22c] sm:$0xff]
    %v1270 = vld [vmem:[#allocation16 + $0x234] sm:$0xff]
    %v1271 = vld [vmem:[#allocation16 + $0x23c] sm:$0xf]
    %v1352 = vunpack.c.l.b16 %v1192
    %v1353 = vunpack.c.h.b16 %v1192
    %v1354 = vunpack.c.l.b16 %v1193
    %v1355 = vunpack.c.h.b16 %v1193
    %v1356 = vunpack.c.l.b16 %v1194
    %v1357 = vunpack.c.h.b16 %v1194
    %v1358 = vunpack.c.l.b16 %v1195
    %v1359 = vunpack.c.h.b16 %v1195
    %v1360 = vunpack.c.l.b16 %v1196
    %v1361 = vunpack.c.l.b16 %v1197
    %v1362 = vunpack.c.h.b16 %v1197
    %v1363 = vunpack.c.l.b16 %v1198
    %v1364 = vunpack.c.h.b16 %v1198
    %v1365 = vunpack.c.l.b16 %v1199
    %v1366 = vunpack.c.h.b16 %v1199
    %v1367 = vunpack.c.l.b16 %v1200
    %v1368 = vunpack.c.h.b16 %v1200
    %v1369 = vunpack.c.l.b16 %v1201
    %v1370 = vunpack.c.l.b16 %v1202
    %v1371 = vunpack.c.h.b16 %v1202
    %v1372 = vunpack.c.l.b16 %v1203
    %v1373 = vunpack.c.h.b16 %v1203
    %v1374 = vunpack.c.l.b16 %v1204
    %v1375 = vunpack.c.h.b16 %v1204
    %v1376 = vunpack.c.l.b16 %v1205
    %v1377 = vunpack.c.h.b16 %v1205
    %v1378 = vunpack.c.l.b16 %v1206
    %v1379 = vunpack.c.l.b16 %v1207
    %v1380 = vunpack.c.h.b16 %v1207
    %v1381 = vunpack.c.l.b16 %v1208
    %v1382 = vunpack.c.h.b16 %v1208
    %v1383 = vunpack.c.l.b16 %v1209
    %v1384 = vunpack.c.h.b16 %v1209
    %v1385 = vunpack.c.l.b16 %v1210
    %v1386 = vunpack.c.h.b16 %v1210
    %v1387 = vunpack.c.l.b16 %v1211
    %v1388 = vunpack.c.l.b16 %v1212
    %v1389 = vunpack.c.h.b16 %v1212
    %v1390 = vunpack.c.l.b16 %v1213
    %v1391 = vunpack.c.h.b16 %v1213
    %v1392 = vunpack.c.l.b16 %v1214
    %v1393 = vunpack.c.h.b16 %v1214
    %v1394 = vunpack.c.l.b16 %v1215
    %v1395 = vunpack.c.h.b16 %v1215
    %v1396 = vunpack.c.l.b16 %v1216
    %v1397 = vunpack.c.l.b16 %v1217
    %v1398 = vunpack.c.h.b16 %v1217
    %v1399 = vunpack.c.l.b16 %v1218
    %v1400 = vunpack.c.h.b16 %v1218
    %v1401 = vunpack.c.l.b16 %v1219
    %v1402 = vunpack.c.h.b16 %v1219
    %v1403 = vunpack.c.l.b16 %v1220
    %v1404 = vunpack.c.h.b16 %v1220
    %v1405 = vunpack.c.l.b16 %v1221
    %v1406 = vunpack.c.l.b16 %v1222
    %v1407 = vunpack.c.h.b16 %v1222
    %v1408 = vunpack.c.l.b16 %v1223
    %v1409 = vunpack.c.h.b16 %v1223
    %v1410 = vunpack.c.l.b16 %v1224
    %v1411 = vunpack.c.h.b16 %v1224
    %v1412 = vunpack.c.l.b16 %v1225
    %v1413 = vunpack.c.h.b16 %v1225
    %v1414 = vunpack.c.l.b16 %v1226
    %v1415 = vunpack.c.l.b16 %v1227
    %v1416 = vunpack.c.h.b16 %v1227
    %v1417 = vunpack.c.l.b16 %v1228
    %v1418 = vunpack.c.h.b16 %v1228
    %v1419 = vunpack.c.l.b16 %v1229
    %v1420 = vunpack.c.h.b16 %v1229
    %v1421 = vunpack.c.l.b16 %v1230
    %v1422 = vunpack.c.h.b16 %v1230
    %v1423 = vunpack.c.l.b16 %v1231
    %v1424 = vunpack.c.l.b16 %v1232
    %v1425 = vunpack.c.h.b16 %v1232
    %v1426 = vunpack.c.l.b16 %v1233
    %v1427 = vunpack.c.h.b16 %v1233
    %v1428 = vunpack.c.l.b16 %v1234
    %v1429 = vunpack.c.h.b16 %v1234
    %v1430 = vunpack.c.l.b16 %v1235
    %v1431 = vunpack.c.h.b16 %v1235
    %v1432 = vunpack.c.l.b16 %v1236
    %v1433 = vunpack.c.l.b16 %v1237
    %v1434 = vunpack.c.h.b16 %v1237
    %v1435 = vunpack.c.l.b16 %v1238
    %v1436 = vunpack.c.h.b16 %v1238
    %v1437 = vunpack.c.l.b16 %v1239
    %v1438 = vunpack.c.h.b16 %v1239
    %v1439 = vunpack.c.l.b16 %v1240
    %v1440 = vunpack.c.h.b16 %v1240
    %v1441 = vunpack.c.l.b16 %v1241
    %v1442 = vunpack.c.l.b16 %v1242
    %v1443 = vunpack.c.h.b16 %v1242
    %v1444 = vunpack.c.l.b16 %v1243
    %v1445 = vunpack.c.h.b16 %v1243
    %v1446 = vunpack.c.l.b16 %v1244
    %v1447 = vunpack.c.h.b16 %v1244
    %v1448 = vunpack.c.l.b16 %v1245
    %v1449 = vunpack.c.h.b16 %v1245
    %v1450 = vunpack.c.l.b16 %v1246
    %v1451 = vunpack.c.l.b16 %v1247
    %v1452 = vunpack.c.h.b16 %v1247
    %v1453 = vunpack.c.l.b16 %v1248
    %v1454 = vunpack.c.h.b16 %v1248
    %v1455 = vunpack.c.l.b16 %v1249
    %v1456 = vunpack.c.h.b16 %v1249
    %v1457 = vunpack.c.l.b16 %v1250
    %v1458 = vunpack.c.h.b16 %v1250
    %v1459 = vunpack.c.l.b16 %v1251
    %v1460 = vunpack.c.l.b16 %v1252
    %v1461 = vunpack.c.h.b16 %v1252
    %v1462 = vunpack.c.l.b16 %v1253
    %v1463 = vunpack.c.h.b16 %v1253
    %v1464 = vunpack.c.l.b16 %v1254
    %v1465 = vunpack.c.h.b16 %v1254
    %v1466 = vunpack.c.l.b16 %v1255
    %v1467 = vunpack.c.h.b16 %v1255
    %v1468 = vunpack.c.l.b16 %v1256
    %v1469 = vunpack.c.l.b16 %v1257
    %v1470 = vunpack.c.h.b16 %v1257
    %v1471 = vunpack.c.l.b16 %v1258
    %v1472 = vunpack.c.h.b16 %v1258
    %v1473 = vunpack.c.l.b16 %v1259
    %v1474 = vunpack.c.h.b16 %v1259
    %v1475 = vunpack.c.l.b16 %v1260
    %v1476 = vunpack.c.h.b16 %v1260
    %v1477 = vunpack.c.l.b16 %v1261
    %v1478 = vunpack.c.l.b16 %v1262
    %v1479 = vunpack.c.h.b16 %v1262
    %v1480 = vunpack.c.l.b16 %v1263
    %v1481 = vunpack.c.h.b16 %v1263
    %v1482 = vunpack.c.l.b16 %v1264
    %v1483 = vunpack.c.h.b16 %v1264
    %v1484 = vunpack.c.l.b16 %v1265
    %v1485 = vunpack.c.h.b16 %v1265
    %v1486 = vunpack.c.l.b16 %v1266
    %v1487 = vunpack.c.l.b16 %v1267
    %v1488 = vunpack.c.h.b16 %v1267
    %v1489 = vunpack.c.l.b16 %v1268
    %v1490 = vunpack.c.h.b16 %v1268
    %v1491 = vunpack.c.l.b16 %v1269
    %v1492 = vunpack.c.h.b16 %v1269
    %v1493 = vunpack.c.l.b16 %v1270
    %v1494 = vunpack.c.h.b16 %v1270
    %v1495 = vunpack.c.l.b16 %v1271
    %v1496 = vpack.c.b16 %v1361, %v1352
    %v1497 = vpack.c.b16 %v1362, %v1353
    %v1498 = vpack.c.b16 %v1363, %v1354
    %v1499 = vpack.c.b16 %v1364, %v1355
    %v1500 = vpack.c.b16 %v1365, %v1356
    %v1501 = vpack.c.b16 %v1366, %v1357
    %v1502 = vpack.c.b16 %v1367, %v1358
    %v1503 = vpack.c.b16 %v1368, %v1359
    %v1504 = vpack.c.b16 %v1369, %v1360
    %v1505 = vpack.c.b16 %v1379, %v1370
    %v1506 = vpack.c.b16 %v1380, %v1371
    %v1507 = vpack.c.b16 %v1381, %v1372
    %v1508 = vpack.c.b16 %v1382, %v1373
    %v1509 = vpack.c.b16 %v1383, %v1374
    %v1510 = vpack.c.b16 %v1384, %v1375
    %v1511 = vpack.c.b16 %v1385, %v1376
    %v1512 = vpack.c.b16 %v1386, %v1377
    %v1513 = vpack.c.b16 %v1387, %v1378
    %v1514 = vpack.c.b16 %v1397, %v1388
    %v1515 = vpack.c.b16 %v1398, %v1389
    %v1516 = vpack.c.b16 %v1399, %v1390
    %v1517 = vpack.c.b16 %v1400, %v1391
    %v1518 = vpack.c.b16 %v1401, %v1392
    %v1519 = vpack.c.b16 %v1402, %v1393
    %v1520 = vpack.c.b16 %v1403, %v1394
    %v1521 = vpack.c.b16 %v1404, %v1395
    %v1522 = vpack.c.b16 %v1405, %v1396
    %v1523 = vpack.c.b16 %v1415, %v1406
    %v1524 = vpack.c.b16 %v1416, %v1407
    %v1525 = vpack.c.b16 %v1417, %v1408
    %v1526 = vpack.c.b16 %v1418, %v1409
    %v1527 = vpack.c.b16 %v1419, %v1410
    %v1528 = vpack.c.b16 %v1420, %v1411
    %v1529 = vpack.c.b16 %v1421, %v1412
    %v1530 = vpack.c.b16 %v1422, %v1413
    %v1531 = vpack.c.b16 %v1423, %v1414
    %v1532 = vpack.c.b16 %v1433, %v1424
    %v1533 = vpack.c.b16 %v1434, %v1425
    %v1534 = vpack.c.b16 %v1435, %v1426
    %v1535 = vpack.c.b16 %v1436, %v1427
    %v1536 = vpack.c.b16 %v1437, %v1428
    %v1537 = vpack.c.b16 %v1438, %v1429
    %v1538 = vpack.c.b16 %v1439, %v1430
    %v1539 = vpack.c.b16 %v1440, %v1431
    %v1540 = vpack.c.b16 %v1441, %v1432
    %v1541 = vpack.c.b16 %v1451, %v1442
    %v1542 = vpack.c.b16 %v1452, %v1443
    %v1543 = vpack.c.b16 %v1453, %v1444
    %v1544 = vpack.c.b16 %v1454, %v1445
    %v1545 = vpack.c.b16 %v1455, %v1446
    %v1546 = vpack.c.b16 %v1456, %v1447
    %v1547 = vpack.c.b16 %v1457, %v1448
    %v1548 = vpack.c.b16 %v1458, %v1449
    %v1549 = vpack.c.b16 %v1459, %v1450
    %v1550 = vpack.c.b16 %v1469, %v1460
    %v1551 = vpack.c.b16 %v1470, %v1461
    %v1552 = vpack.c.b16 %v1471, %v1462
    %v1553 = vpack.c.b16 %v1472, %v1463
    %v1554 = vpack.c.b16 %v1473, %v1464
    %v1555 = vpack.c.b16 %v1474, %v1465
    %v1556 = vpack.c.b16 %v1475, %v1466
    %v1557 = vpack.c.b16 %v1476, %v1467
    %v1558 = vpack.c.b16 %v1477, %v1468
    %v1559 = vpack.c.b16 %v1487, %v1478
    %v1560 = vpack.c.b16 %v1488, %v1479
    %v1561 = vpack.c.b16 %v1489, %v1480
    %v1562 = vpack.c.b16 %v1490, %v1481
    %v1563 = vpack.c.b16 %v1491, %v1482
    %v1564 = vpack.c.b16 %v1492, %v1483
    %v1565 = vpack.c.b16 %v1493, %v1484
    %v1566 = vpack.c.b16 %v1494, %v1485
    %v1567 = vpack.c.b16 %v1495, %v1486
    %1640 = vmatprep.subr.bf16.mxu0 %v1497
    %1641 = vmatpush1.bf16.msra.mxu0 %v1496
    %1642 = vmatprep.subr.bf16.mxu0 %v1506
    %1643 = vmatpush1.bf16.msra.mxu0 %v1505
    %1644 = vmatprep.subr.bf16.mxu0 %v1515
    %1645 = vmatpush1.bf16.msra.mxu0 %v1514
    %1646 = vmatprep.subr.bf16.mxu0 %v1524
    %1647 = vmatpush1.bf16.msra.mxu0 %v1523
    %1648 = vmatprep.subr.bf16.mxu0 %v1533
    %1649 = vmatpush1.bf16.msra.mxu0 %v1532
    %1650 = vmatprep.subr.bf16.mxu0 %v1542
    %1651 = vmatpush1.bf16.msra.mxu0 %v1541
    %1652 = vmatprep.subr.bf16.mxu0 %v1551
    %1653 = vmatpush1.bf16.msra.mxu0 %v1550
    %1654 = vmatprep.subr.bf16.mxu0 %v1560
    %1655 = vmatpush1.bf16.msra.mxu0 %v1559
    %1656 = vmatprep.subr.bf16.mxu0 0
    %1657 = vmatpush1.bf16.msra.mxu0 0
    %1658 = vmatprep.subr.bf16.mxu0 0
    %1659 = vmatpush1.bf16.msra.mxu0 0
    %1660 = vmatprep.subr.bf16.mxu0 0
    %1661 = vmatpush1.bf16.msra.mxu0 0
    %1662 = vmatprep.subr.bf16.mxu0 0
    %1663 = vmatpush1.bf16.msra.mxu0 0
    %1664 = vmatprep.subr.bf16.mxu0 0
    %1665 = vmatpush1.bf16.msra.mxu0 0
    %1666 = vmatprep.subr.bf16.mxu0 0
    %1667 = vmatpush1.bf16.msra.mxu0 0
    %1668 = vmatprep.subr.bf16.mxu0 0
    %1669 = vmatpush1.bf16.msra.mxu0 0
    %1670 = vmatprep.subr.bf16.mxu0 0
    %1671 = vmatpush1.bf16.msra.mxu0 0
    %1672 = vmatprep.mubr.bf16.mxu0 0
    %1673 = vmatmul.mubr.bf16.gmra.mrb[0].mxu0 %v1188
    %v1674 = vpop.f32.mrb[0].mxu0
    %v1675 = vadd.f32 0.0, %v1674
    %v1676 = vpop.f32.mrb[0].mxu0
    %v1677 = vadd.f32 0.0, %v1676
    %v1678 = vpop.f32.mrb[0].mxu0
    %v1679 = vadd.f32 0.0, %v1678
    %v1680 = vpop.f32.mrb[0].mxu0
    %v1681 = vadd.f32 0.0, %v1680
    %1682 = vmatprep.mubr.bf16.mxu0 0
    %1683 = vmatmul.mubr.bf16.gmra.mrb[0].mxu0 %v1189
    %v1684 = vpop.f32.mrb[0].mxu0
    %v1685 = vadd.f32 0.0, %v1684
    %v1686 = vpop.f32.mrb[0].mxu0
    %v1687 = vadd.f32 0.0, %v1686
    %v1688 = vpop.f32.mrb[0].mxu0
    %v1689 = vadd.f32 0.0, %v1688
    %v1690 = vpop.f32.mrb[0].mxu0
    %v1691 = vadd.f32 0.0, %v1690
    %1692 = vmatprep.mubr.bf16.mxu0 0
    %1693 = vmatmul.mubr.bf16.gmra.mrb[0].mxu0 %v1190
    %v1694 = vpop.f32.mrb[0].mxu0
    %v1695 = vadd.f32 0.0, %v1694
    %v1696 = vpop.f32.mrb[0].mxu0
    %v1697 = vadd.f32 0.0, %v1696
    %v1698 = vpop.f32.mrb[0].mxu0
    %v1699 = vadd.f32 0.0, %v1698
    %v1700 = vpop.f32.mrb[0].mxu0
    %v1701 = vadd.f32 0.0, %v1700
    %1702 = vmatprep.mubr.bf16.mxu0 0
    %1703 = vmatmul.mubr.bf16.gmra.mrb[0].mxu0 %v1191
    %v1704 = vpop.f32.mrb[0].mxu0
    %v1705 = vadd.f32 0.0, %v1704
    %v1706 = vpop.f32.mrb[0].mxu0
    %v1707 = vadd.f32 0.0, %v1706
    %v1708 = vpop.f32.mrb[0].mxu0
    %v1709 = vadd.f32 0.0, %v1708
    %v1710 = vpop.f32.mrb[0].mxu0
    %v1711 = vadd.f32 0.0, %v1710
    %1712 = vdwg.mxu0
    %1713 = vmatprep.subr.bf16.mxu0 %v1499
    %1714 = vmatpush1.bf16.msra.mxu0 %v1498
    %1715 = vmatprep.subr.bf16.mxu0 %v1508
    %1716 = vmatpush1.bf16.msra.mxu0 %v1507
    %1717 = vmatprep.subr.bf16.mxu0 %v1517
    %1718 = vmatpush1.bf16.msra.mxu0 %v1516
    %1719 = vmatprep.subr.bf16.mxu0 %v1526
    %1720 = vmatpush1.bf16.msra.mxu0 %v1525
    %1721 = vmatprep.subr.bf16.mxu0 %v1535
    %1722 = vmatpush1.bf16.msra.mxu0 %v1534
    %1723 = vmatprep.subr.bf16.mxu0 %v1544
    %1724 = vmatpush1.bf16.msra.mxu0 %v1543
    %1725 = vmatprep.subr.bf16.mxu0 %v1553
    %1726 = vmatpush1.bf16.msra.mxu0 %v1552
    %1727 = vmatprep.subr.bf16.mxu0 %v1562
    %1728 = vmatpush1.bf16.msra.mxu0 %v1561
    %1729 = vmatprep.subr.bf16.mxu0 0
    %1730 = vmatpush1.bf16.msra.mxu0 0
    %1731 = vmatprep.subr.bf16.mxu0 0
    %1732 = vmatpush1.bf16.msra.mxu0 0
    %1733 = vmatprep.subr.bf16.mxu0 0
    %1734 = vmatpush1.bf16.msra.mxu0 0
    %1735 = vmatprep.subr.bf16.mxu0 0
    %1736 = vmatpush1.bf16.msra.mxu0 0
    %1737 = vmatprep.subr.bf16.mxu0 0
    %1738 = vmatpush1.bf16.msra.mxu0 0
    %1739 = vmatprep.subr.bf16.mxu0 0
    %1740 = vmatpush1.bf16.msra.mxu0 0
    %1741 = vmatprep.subr.bf16.mxu0 0
    %1742 = vmatpush1.bf16.msra.mxu0 0
    %1743 = vmatprep.subr.bf16.mxu0 0
    %1744 = vmatpush1.bf16.msra.mxu0 0
    %1745 = vmatprep.mubr.bf16.mxu0 0
    %1746 = vmatmul.mubr.bf16.gmra.mrb[0].mxu0 %v1188
    %v1747 = vpop.f32.mrb[0].mxu0
    %v1748 = vadd.f32 0.0, %v1747
    %v1749 = vpop.f32.mrb[0].mxu0
    %v1750 = vadd.f32 0.0, %v1749
    %v1751 = vpop.f32.mrb[0].mxu0
    %v1752 = vadd.f32 0.0, %v1751
    %v1753 = vpop.f32.mrb[0].mxu0
    %v1754 = vadd.f32 0.0, %v1753
    %1755 = vmatprep.mubr.bf16.mxu0 0
    %1756 = vmatmul.mubr.bf16.gmra.mrb[0].mxu0 %v1189
    %v1757 = vpop.f32.mrb[0].mxu0
    %v1758 = vadd.f32 0.0, %v1757
    %v1759 = vpop.f32.mrb[0].mxu0
    %v1760 = vadd.f32 0.0, %v1759
    %v1761 = vpop.f32.mrb[0].mxu0
    %v1762 = vadd.f32 0.0, %v1761
    %v1763 = vpop.f32.mrb[0].mxu0
    %v1764 = vadd.f32 0.0, %v1763
    %1765 = vmatprep.mubr.bf16.mxu0 0
    %1766 = vmatmul.mubr.bf16.gmra.mrb[0].mxu0 %v1190
    %v1767 = vpop.f32.mrb[0].mxu0
    %v1768 = vadd.f32 0.0, %v1767
    %v1769 = vpop.f32.mrb[0].mxu0
    %v1770 = vadd.f32 0.0, %v1769
    %v1771 = vpop.f32.mrb[0].mxu0
    %v1772 = vadd.f32 0.0, %v1771
    %v1773 = vpop.f32.mrb[0].mxu0
    %v1774 = vadd.f32 0.0, %v1773
    %1775 = vmatprep.mubr.bf16.mxu0 0
    %1776 = vmatmul.mubr.bf16.gmra.mrb[0].mxu0 %v1191
    %v1777 = vpop.f32.mrb[0].mxu0
    %v1778 = vadd.f32 0.0, %v1777
    %v1779 = vpop.f32.mrb[0].mxu0
    %v1780 = vadd.f32 0.0, %v1779
    %v1781 = vpop.f32.mrb[0].mxu0
    %v1782 = vadd.f32 0.0, %v1781
    %v1783 = vpop.f32.mrb[0].mxu0
    %v1784 = vadd.f32 0.0, %v1783
    %1785 = vdwg.mxu0
    %1786 = vmatprep.subr.bf16.mxu0 %v1501
    %1787 = vmatpush1.bf16.msra.mxu0 %v1500
    %1788 = vmatprep.subr.bf16.mxu0 %v1510
    %1789 = vmatpush1.bf16.msra.mxu0 %v1509
    %1790 = vmatprep.subr.bf16.mxu0 %v1519
    %1791 = vmatpush1.bf16.msra.mxu0 %v1518
    %1792 = vmatprep.subr.bf16.mxu0 %v1528
    %1793 = vmatpush1.bf16.msra.mxu0 %v1527
    %1794 = vmatprep.subr.bf16.mxu0 %v1537
    %1795 = vmatpush1.bf16.msra.mxu0 %v1536
    %1796 = vmatprep.subr.bf16.mxu0 %v1546
    %1797 = vmatpush1.bf16.msra.mxu0 %v1545
    %1798 = vmatprep.subr.bf16.mxu0 %v1555
    %1799 = vmatpush1.bf16.msra.mxu0 %v1554
    %1800 = vmatprep.subr.bf16.mxu0 %v1564
    %1801 = vmatpush1.bf16.msra.mxu0 %v1563
    %1802 = vmatprep.subr.bf16.mxu0 0
    %1803 = vmatpush1.bf16.msra.mxu0 0
    %1804 = vmatprep.subr.bf16.mxu0 0
    %1805 = vmatpush1.bf16.msra.mxu0 0
    %1806 = vmatprep.subr.bf16.mxu0 0
    %1807 = vmatpush1.bf16.msra.mxu0 0
    %1808 = vmatprep.subr.bf16.mxu0 0
    %1809 = vmatpush1.bf16.msra.mxu0 0
    %1810 = vmatprep.subr.bf16.mxu0 0
    %1811 = vmatpush1.bf16.msra.mxu0 0
    %1812 = vmatprep.subr.bf16.mxu0 0
    %1813 = vmatpush1.bf16.msra.mxu0 0
    %1814 = vmatprep.subr.bf16.mxu0 0
    %1815 = vmatpush1.bf16.msra.mxu0 0
    %1816 = vmatprep.subr.bf16.mxu0 0
    %1817 = vmatpush1.bf16.msra.mxu0 0
    %1818 = vmatprep.mubr.bf16.mxu0 0
    %1819 = vmatmul.mubr.bf16.gmra.mrb[0].mxu0 %v1188
    %v1820 = vpop.f32.mrb[0].mxu0
    %v1821 = vadd.f32 0.0, %v1820
    %v1822 = vpop.f32.mrb[0].mxu0
    %v1823 = vadd.f32 0.0, %v1822
    %v1824 = vpop.f32.mrb[0].mxu0
    %v1825 = vadd.f32 0.0, %v1824
    %v1826 = vpop.f32.mrb[0].mxu0
    %v1827 = vadd.f32 0.0, %v1826
    %1828 = vmatprep.mubr.bf16.mxu0 0
    %1829 = vmatmul.mubr.bf16.gmra.mrb[0].mxu0 %v1189
    %v1830 = vpop.f32.mrb[0].mxu0
    %v1831 = vadd.f32 0.0, %v1830
    %v1832 = vpop.f32.mrb[0].mxu0
    %v1833 = vadd.f32 0.0, %v1832
    %v1834 = vpop.f32.mrb[0].mxu0
    %v1835 = vadd.f32 0.0, %v1834
    %v1836 = vpop.f32.mrb[0].mxu0
    %v1837 = vadd.f32 0.0, %v1836
    %1838 = vmatprep.mubr.bf16.mxu0 0
    %1839 = vmatmul.mubr.bf16.gmra.mrb[0].mxu0 %v1190
    %v1840 = vpop.f32.mrb[0].mxu0
    %v1841 = vadd.f32 0.0, %v1840
    %v1842 = vpop.f32.mrb[0].mxu0
    %v1843 = vadd.f32 0.0, %v1842
    %v1844 = vpop.f32.mrb[0].mxu0
    %v1845 = vadd.f32 0.0, %v1844
    %v1846 = vpop.f32.mrb[0].mxu0
    %v1847 = vadd.f32 0.0, %v1846
    %1848 = vmatprep.mubr.bf16.mxu0 0
    %1849 = vmatmul.mubr.bf16.gmra.mrb[0].mxu0 %v1191
    %v1850 = vpop.f32.mrb[0].mxu0
    %v1851 = vadd.f32 0.0, %v1850
    %v1852 = vpop.f32.mrb[0].mxu0
    %v1853 = vadd.f32 0.0, %v1852
    %v1854 = vpop.f32.mrb[0].mxu0
    %v1855 = vadd.f32 0.0, %v1854
    %v1856 = vpop.f32.mrb[0].mxu0
    %v1857 = vadd.f32 0.0, %v1856
    %1858 = vdwg.mxu0
    %1859 = vmatprep.subr.bf16.mxu0 %v1503
    %1860 = vmatpush1.bf16.msra.mxu0 %v1502
    %1861 = vmatprep.subr.bf16.mxu0 %v1512
    %1862 = vmatpush1.bf16.msra.mxu0 %v1511
    %1863 = vmatprep.subr.bf16.mxu0 %v1521
    %1864 = vmatpush1.bf16.msra.mxu0 %v1520
    %1865 = vmatprep.subr.bf16.mxu0 %v1530
    %1866 = vmatpush1.bf16.msra.mxu0 %v1529
    %1867 = vmatprep.subr.bf16.mxu0 %v1539
    %1868 = vmatpush1.bf16.msra.mxu0 %v1538
    %1869 = vmatprep.subr.bf16.mxu0 %v1548
    %1870 = vmatpush1.bf16.msra.mxu0 %v1547
    %1871 = vmatprep.subr.bf16.mxu0 %v1557
    %1872 = vmatpush1.bf16.msra.mxu0 %v1556
    %1873 = vmatprep.subr.bf16.mxu0 %v1566
    %1874 = vmatpush1.bf16.msra.mxu0 %v1565
    %1875 = vmatprep.subr.bf16.mxu0 0
    %1876 = vmatpush1.bf16.msra.mxu0 0
    %1877 = vmatprep.subr.bf16.mxu0 0
    %1878 = vmatpush1.bf16.msra.mxu0 0
    %1879 = vmatprep.subr.bf16.mxu0 0
    %1880 = vmatpush1.bf16.msra.mxu0 0
    %1881 = vmatprep.subr.bf16.mxu0 0
    %1882 = vmatpush1.bf16.msra.mxu0 0
    %1883 = vmatprep.subr.bf16.mxu0 0
    %1884 = vmatpush1.bf16.msra.mxu0 0
    %1885 = vmatprep.subr.bf16.mxu0 0
    %1886 = vmatpush1.bf16.msra.mxu0 0
    %1887 = vmatprep.subr.bf16.mxu0 0
    %1888 = vmatpush1.bf16.msra.mxu0 0
    %1889 = vmatprep.subr.bf16.mxu0 0
    %1890 = vmatpush1.bf16.msra.mxu0 0
    %1891 = vmatprep.mubr.bf16.mxu0 0
    %1892 = vmatmul.mubr.bf16.gmra.mrb[0].mxu0 %v1188
    %v1893 = vpop.f32.mrb[0].mxu0
    %v1894 = vadd.f32 0.0, %v1893
    %v1895 = vpop.f32.mrb[0].mxu0
    %v1896 = vadd.f32 0.0, %v1895
    %v1897 = vpop.f32.mrb[0].mxu0
    %v1898 = vadd.f32 0.0, %v1897
    %v1899 = vpop.f32.mrb[0].mxu0
    %v1900 = vadd.f32 0.0, %v1899
    %1901 = vmatprep.mubr.bf16.mxu0 0
    %1902 = vmatmul.mubr.bf16.gmra.mrb[0].mxu0 %v1189
    %v1903 = vpop.f32.mrb[0].mxu0
    %v1904 = vadd.f32 0.0, %v1903
    %v1905 = vpop.f32.mrb[0].mxu0
    %v1906 = vadd.f32 0.0, %v1905
    %v1907 = vpop.f32.mrb[0].mxu0
    %v1908 = vadd.f32 0.0, %v1907
    %v1909 = vpop.f32.mrb[0].mxu0
    %v1910 = vadd.f32 0.0, %v1909
    %1911 = vmatprep.mubr.bf16.mxu0 0
    %1912 = vmatmul.mubr.bf16.gmra.mrb[0].mxu0 %v1190
    %v1913 = vpop.f32.mrb[0].mxu0
    %v1914 = vadd.f32 0.0, %v1913
    %v1915 = vpop.f32.mrb[0].mxu0
    %v1916 = vadd.f32 0.0, %v1915
    %v1917 = vpop.f32.mrb[0].mxu0
    %v1918 = vadd.f32 0.0, %v1917
    %v1919 = vpop.f32.mrb[0].mxu0
    %v1920 = vadd.f32 0.0, %v1919
    %1921 = vmatprep.mubr.bf16.mxu0 0
    %1922 = vmatmul.mubr.bf16.gmra.mrb[0].mxu0 %v1191
    %v1923 = vpop.f32.mrb[0].mxu0
    %v1924 = vadd.f32 0.0, %v1923
    %v1925 = vpop.f32.mrb[0].mxu0
    %v1926 = vadd.f32 0.0, %v1925
    %v1927 = vpop.f32.mrb[0].mxu0
    %v1928 = vadd.f32 0.0, %v1927
    %v1929 = vpop.f32.mrb[0].mxu0
    %v1930 = vadd.f32 0.0, %v1929
    %1931 = vdwg.mxu0
    %1932 = vmatprep.subr.bf16.mxu0 0
    %1933 = vmatpush1.bf16.msra.mxu0 %v1504
    %1934 = vmatprep.subr.bf16.mxu0 0
    %1935 = vmatpush1.bf16.msra.mxu0 %v1513
    %1936 = vmatprep.subr.bf16.mxu0 0
    %1937 = vmatpush1.bf16.msra.mxu0 %v1522
    %1938 = vmatprep.subr.bf16.mxu0 0
    %1939 = vmatpush1.bf16.msra.mxu0 %v1531
    %1940 = vmatprep.subr.bf16.mxu0 0
    %1941 = vmatpush1.bf16.msra.mxu0 %v1540
    %1942 = vmatprep.subr.bf16.mxu0 0
    %1943 = vmatpush1.bf16.msra.mxu0 %v1549
    %1944 = vmatprep.subr.bf16.mxu0 0
    %1945 = vmatpush1.bf16.msra.mxu0 %v1558
    %1946 = vmatprep.subr.bf16.mxu0 0
    %1947 = vmatpush1.bf16.msra.mxu0 %v1567
    %1948 = vmatprep.subr.bf16.mxu0 0
    %1949 = vmatpush1.bf16.msra.mxu0 0
    %1950 = vmatprep.subr.bf16.mxu0 0
    %1951 = vmatpush1.bf16.msra.mxu0 0
    %1952 = vmatprep.subr.bf16.mxu0 0
    %1953 = vmatpush1.bf16.msra.mxu0 0
    %1954 = vmatprep.subr.bf16.mxu0 0
    %1955 = vmatpush1.bf16.msra.mxu0 0
    %1956 = vmatprep.subr.bf16.mxu0 0
    %1957 = vmatpush1.bf16.msra.mxu0 0
    %1958 = vmatprep.subr.bf16.mxu0 0
    %1959 = vmatpush1.bf16.msra.mxu0 0
    %1960 = vmatprep.subr.bf16.mxu0 0
    %1961 = vmatpush1.bf16.msra.mxu0 0
    %1962 = vmatprep.subr.bf16.mxu0 0
    %1963 = vmatpush1.bf16.msra.mxu0 0
    %1964 = vmatprep.mubr.bf16.mxu0 0
    %1965 = vmatmul.mubr.bf16.gmra.mrb[0].mxu0 %v1188
    %v1966 = vpop.f32.mrb[0].mxu0
    %v1967 = vadd.f32 0.0, %v1966
    %v1968 = vpop.f32.mrb[0].mxu0
    %v1969 = vpop.f32.mrb[0].mxu0
    %v1970 = vadd.f32 0.0, %v1969
    %v1971 = vpop.f32.mrb[0].mxu0
    %1972 = vmatprep.mubr.bf16.mxu0 0
    %1973 = vmatmul.mubr.bf16.gmra.mrb[0].mxu0 %v1189
    %v1974 = vpop.f32.mrb[0].mxu0
    %v1975 = vadd.f32 0.0, %v1974
    %v1976 = vpop.f32.mrb[0].mxu0
    %v1977 = vpop.f32.mrb[0].mxu0
    %v1978 = vadd.f32 0.0, %v1977
    %v1979 = vpop.f32.mrb[0].mxu0
    %1980 = vmatprep.mubr.bf16.mxu0 0
    %1981 = vmatmul.mubr.bf16.gmra.mrb[0].mxu0 %v1190
    %v1982 = vpop.f32.mrb[0].mxu0
    %v1983 = vadd.f32 0.0, %v1982
    %v1984 = vpop.f32.mrb[0].mxu0
    %v1985 = vpop.f32.mrb[0].mxu0
    %v1986 = vadd.f32 0.0, %v1985
    %v1987 = vpop.f32.mrb[0].mxu0
    %1988 = vmatprep.mubr.bf16.mxu0 0
    %1989 = vmatmul.mubr.bf16.gmra.mrb[0].mxu0 %v1191
    %v1990 = vpop.f32.mrb[0].mxu0
    %v1991 = vadd.f32 0.0, %v1990
    %v1992 = vpop.f32.mrb[0].mxu0
    %v1993 = vpop.f32.mrb[0].mxu0
    %v1994 = vadd.f32 0.0, %v1993
    %v1995 = vpop.f32.mrb[0].mxu0
    %1996 = vdwg.mxu0
    %v1997 = vld [vmem:[#allocation15] sm:$0x1]
    %v1999 = vlaneseq
    %v2000 = vshrl.u32 %v1999, 7
    %v2001 = vsub.s32 0, %v2000
    %v2002 = vrot.slane %v1997, %v2001
    %v2004 = vadd.f32 %v1675, %v2002
    %v2005 = vadd.f32 %v1679, %v2002
    %v2006 = vadd.f32 %v1685, %v2002
    %v2007 = vadd.f32 %v1689, %v2002
    %v2008 = vadd.f32 %v1695, %v2002
    %v2009 = vadd.f32 %v1699, %v2002
    %v2010 = vadd.f32 %v1705, %v2002
    %v2011 = vadd.f32 %v1709, %v2002
    %v2012 = vmax.f32 %v2004, 0.0
    %v2013 = vmax.f32 %v2005, 0.0
    %v2014 = vmax.f32 %v2006, 0.0
    %v2015 = vmax.f32 %v2007, 0.0
    %v2016 = vmax.f32 %v2008, 0.0
    %v2017 = vmax.f32 %v2009, 0.0
    %v2018 = vmax.f32 %v2010, 0.0
    %v2019 = vmax.f32 %v2011, 0.0
    %v2020 = vand.u32 2147483647, %v2004
    %v2021 = vand.u32 2147483647, %v2005
    %v2022 = vand.u32 2147483647, %v2006
    %v2023 = vand.u32 2147483647, %v2007
    %v2024 = vand.u32 2147483647, %v2008
    %v2025 = vand.u32 2147483647, %v2009
    %v2026 = vand.u32 2147483647, %v2010
    %v2027 = vand.u32 2147483647, %v2011
    %v2028 = vsub.f32 0.0, %v2020
    %v2029 = vsub.f32 0.0, %v2021
    %v2030 = vsub.f32 0.0, %v2022
    %v2031 = vsub.f32 0.0, %v2023
    %v2032 = vsub.f32 0.0, %v2024
    %v2033 = vsub.f32 0.0, %v2025
    %v2034 = vsub.f32 0.0, %v2026
    %v2035 = vsub.f32 0.0, %v2027
    %v2036 = vmul.f32 %v2028, 1.442695
    %v2037 = vpow.pop %v2036
    %v2038 = vmul.f32 %v2029, 1.442695
    %v2039 = vpow.pop %v2038
    %v2040 = vmul.f32 %v2030, 1.442695
    %v2041 = vpow.pop %v2040
    %v2042 = vmul.f32 %v2031, 1.442695
    %v2043 = vpow.pop %v2042
    %v2044 = vmul.f32 %v2032, 1.442695
    %v2045 = vpow.pop %v2044
    %v2046 = vmul.f32 %v2033, 1.442695
    %v2047 = vpow.pop %v2046
    %v2048 = vmul.f32 %v2034, 1.442695
    %v2049 = vpow.pop %v2048
    %v2050 = vmul.f32 %v2035, 1.442695
    %v2051 = vpow.pop %v2050
    %v2052 = vadd.f32 %v2037, 1.0
    %v2053 = vadd.f32 %v2039, 1.0
    %v2054 = vadd.f32 %v2041, 1.0
    %v2055 = vadd.f32 %v2043, 1.0
    %v2056 = vadd.f32 %v2045, 1.0
    %v2057 = vadd.f32 %v2047, 1.0
    %v2058 = vadd.f32 %v2049, 1.0
    %v2059 = vadd.f32 %v2051, 1.0
    %v2060 = vlog2.pop %v2052
    %v2061 = vmul.f32 %v2060, 0.6931472
    %v2062 = vlog2.pop %v2053
    %v2063 = vmul.f32 %v2062, 0.6931472
    %v2064 = vlog2.pop %v2054
    %v2065 = vmul.f32 %v2064, 0.6931472
    %v2066 = vlog2.pop %v2055
    %v2067 = vmul.f32 %v2066, 0.6931472
    %v2068 = vlog2.pop %v2056
    %v2069 = vmul.f32 %v2068, 0.6931472
    %v2070 = vlog2.pop %v2057
    %v2071 = vmul.f32 %v2070, 0.6931472
    %v2072 = vlog2.pop %v2058
    %v2073 = vmul.f32 %v2072, 0.6931472
    %v2074 = vlog2.pop %v2059
    %v2075 = vmul.f32 %v2074, 0.6931472
    %v2076 = vadd.f32 %v2012, %v2061
    %v2077 = vadd.f32 %v2013, %v2063
    %v2078 = vadd.f32 %v2014, %v2065
    %v2079 = vadd.f32 %v2015, %v2067
    %v2080 = vadd.f32 %v2016, %v2069
    %v2081 = vadd.f32 %v2017, %v2071
    %v2082 = vadd.f32 %v2018, %v2073
    %v2083 = vadd.f32 %v2019, %v2075
    %v2084 = vmul.f32 %v2076, %v1180
    %v2085 = vmul.f32 %v2077, %v1181
    %v2086 = vmul.f32 %v2078, %v1182
    %v2087 = vmul.f32 %v2079, %v1183
    %v2088 = vmul.f32 %v2080, %v1184
    %v2089 = vmul.f32 %v2081, %v1185
    %v2090 = vmul.f32 %v2082, %v1186
    %v2091 = vmul.f32 %v2083, %v1187
    %v2092 = vld [vmem:[#allocation18] sm:$0xff]
    %v2093 = vld [vmem:[#allocation18 + $0x8] sm:$0xff]
    %v2094 = vld [vmem:[#allocation18 + $0x10] sm:$0xff]
    %v2095 = vld [vmem:[#allocation18 + $0x18] sm:$0xff]
    %v2096 = vld [vmem:[#allocation18 + $0x20] sm:$0xff]
    %v2097 = vld [vmem:[#allocation18 + $0x28] sm:$0xff]
    %v2098 = vld [vmem:[#allocation18 + $0x30] sm:$0xff]
    %v2099 = vld [vmem:[#allocation18 + $0x38] sm:$0xff]
    %v2100 = vld [vmem:[#allocation18 + $0x40] sm:$0xff]
    %v2101 = vld [vmem:[#allocation18 + $0x48] sm:$0xff]
    %v2102 = vld [vmem:[#allocation18 + $0x50] sm:$0xff]
    %v2103 = vld [vmem:[#allocation18 + $0x58] sm:$0xff]
    %v2104 = vld [vmem:[#allocation18 + $0x60] sm:$0xff]
    %v2105 = vld [vmem:[#allocation18 + $0x68] sm:$0xff]
    %v2106 = vld [vmem:[#allocation18 + $0x70] sm:$0xff]
    %v2107 = vld [vmem:[#allocation18 + $0x78] sm:$0xff]
    %v2108 = vld [vmem:[#allocation18 + $0x80] sm:$0xff]
    %v2109 = vld [vmem:[#allocation18 + $0x88] sm:$0xff]
    %v2110 = vld [vmem:[#allocation18 + $0x90] sm:$0xff]
    %v2111 = vld [vmem:[#allocation18 + $0x98] sm:$0xff]
    %v2112 = vld [vmem:[#allocation18 + $0xa0] sm:$0xff]
    %v2113 = vld [vmem:[#allocation18 + $0xa8] sm:$0xff]
    %v2114 = vld [vmem:[#allocation18 + $0xb0] sm:$0xff]
    %v2115 = vld [vmem:[#allocation18 + $0xb8] sm:$0xff]
    %v2116 = vld [vmem:[#allocation18 + $0xc0] sm:$0xff]
    %v2117 = vld [vmem:[#allocation18 + $0xc8] sm:$0xff]
    %v2118 = vld [vmem:[#allocation18 + $0xd0] sm:$0xff]
    %v2119 = vld [vmem:[#allocation18 + $0xd8] sm:$0xff]
    %v2120 = vld [vmem:[#allocation18 + $0xe0] sm:$0xff]
    %v2121 = vld [vmem:[#allocation18 + $0xe8] sm:$0xff]
    %v2122 = vld [vmem:[#allocation18 + $0xf0] sm:$0xff]
    %v2123 = vld [vmem:[#allocation18 + $0xf8] sm:$0xff]
    %v2124 = vld [vmem:[#allocation18 + $0x100] sm:$0xff]
    %v2125 = vld [vmem:[#allocation18 + $0x108] sm:$0xff]
    %v2126 = vld [vmem:[#allocation18 + $0x110] sm:$0xff]
    %v2127 = vld [vmem:[#allocation18 + $0x118] sm:$0xff]
    %v2128 = vld [vmem:[#allocation18 + $0x120] sm:$0xff]
    %v2129 = vld [vmem:[#allocation18 + $0x128] sm:$0xff]
    %v2130 = vld [vmem:[#allocation18 + $0x130] sm:$0xff]
    %v2131 = vld [vmem:[#allocation18 + $0x138] sm:$0xff]
    %v2132 = vld [vmem:[#allocation18 + $0x140] sm:$0xff]
    %v2133 = vld [vmem:[#allocation18 + $0x148] sm:$0xff]
    %v2134 = vld [vmem:[#allocation18 + $0x150] sm:$0xff]
    %v2135 = vld [vmem:[#allocation18 + $0x158] sm:$0xff]
    %v2136 = vld [vmem:[#allocation18 + $0x160] sm:$0xff]
    %v2137 = vld [vmem:[#allocation18 + $0x168] sm:$0xff]
    %v2138 = vld [vmem:[#allocation18 + $0x170] sm:$0xff]
    %v2139 = vld [vmem:[#allocation18 + $0x178] sm:$0xff]
    %v2140 = vld [vmem:[#allocation18 + $0x180] sm:$0xff]
    %v2141 = vld [vmem:[#allocation18 + $0x188] sm:$0xff]
    %v2142 = vld [vmem:[#allocation18 + $0x190] sm:$0xff]
    %v2143 = vld [vmem:[#allocation18 + $0x198] sm:$0xff]
    %v2144 = vld [vmem:[#allocation18 + $0x1a0] sm:$0xff]
    %v2145 = vld [vmem:[#allocation18 + $0x1a8] sm:$0xff]
    %v2146 = vld [vmem:[#allocation18 + $0x1b0] sm:$0xff]
    %v2147 = vld [vmem:[#allocation18 + $0x1b8] sm:$0xff]
    %v2148 = vld [vmem:[#allocation18 + $0x1c0] sm:$0xff]
    %v2149 = vld [vmem:[#allocation18 + $0x1c8] sm:$0xff]
    %v2150 = vld [vmem:[#allocation18 + $0x1d0] sm:$0xff]
    %v2151 = vld [vmem:[#allocation18 + $0x1d8] sm:$0xff]
    %v2152 = vld [vmem:[#allocation18 + $0x1e0] sm:$0xff]
    %v2153 = vld [vmem:[#allocation18 + $0x1e8] sm:$0xff]
    %v2154 = vld [vmem:[#allocation18 + $0x1f0] sm:$0xff]
    %v2155 = vld [vmem:[#allocation18 + $0x1f8] sm:$0xff]
    %2156 = vmatprep.subr.mxu0 %v2093
    %2157 = vmatpush1.msra.mxu0 %v2092
    %2158 = vmatprep.subr.mxu0 %v2097
    %2159 = vmatpush1.msra.mxu0 %v2096
    %2160 = vmatprep.subr.mxu0 %v2101
    %2161 = vmatpush1.msra.mxu0 %v2100
    %2162 = vmatprep.subr.mxu0 %v2105
    %2163 = vmatpush1.msra.mxu0 %v2104
    %2164 = vmatprep.subr.mxu0 %v2109
    %2165 = vmatpush1.msra.mxu0 %v2108
    %2166 = vmatprep.subr.mxu0 %v2113
    %2167 = vmatpush1.msra.mxu0 %v2112
    %2168 = vmatprep.subr.mxu0 %v2117
    %2169 = vmatpush1.msra.mxu0 %v2116
    %2170 = vmatprep.subr.mxu0 %v2121
    %2171 = vmatpush1.msra.mxu0 %v2120
    %2172 = vmatprep.subr.mxu0 %v2125
    %2173 = vmatpush1.msra.mxu0 %v2124
    %2174 = vmatprep.subr.mxu0 %v2129
    %2175 = vmatpush1.msra.mxu0 %v2128
    %2176 = vmatprep.subr.mxu0 %v2133
    %2177 = vmatpush1.msra.mxu0 %v2132
    %2178 = vmatprep.subr.mxu0 %v2137
    %2179 = vmatpush1.msra.mxu0 %v2136
    %2180 = vmatprep.subr.mxu0 %v2141
    %2181 = vmatpush1.msra.mxu0 %v2140
    %2182 = vmatprep.subr.mxu0 %v2145
    %2183 = vmatpush1.msra.mxu0 %v2144
    %2184 = vmatprep.subr.mxu0 %v2149
    %2185 = vmatpush1.msra.mxu0 %v2148
    %2186 = vmatprep.subr.mxu0 %v2153
    %2187 = vmatpush1.msra.mxu0 %v2152
    %2188 = vmatprep.subr.mxu0 0.0
    %2189 = vmatpush1.msra.mxu0 0.0
    %2190 = vmatprep.subr.mxu0 0.0
    %2191 = vmatpush1.msra.mxu0 0.0
    %2192 = vmatprep.subr.mxu0 0.0
    %2193 = vmatpush1.msra.mxu0 0.0
    %2194 = vmatprep.subr.mxu0 0.0
    %2195 = vmatpush1.msra.mxu0 0.0
    %2196 = vmatprep.subr.mxu0 0.0
    %2197 = vmatpush1.msra.mxu0 0.0
    %2198 = vmatprep.subr.mxu0 0.0
    %2199 = vmatpush1.msra.mxu0 0.0
    %2200 = vmatprep.subr.mxu0 0.0
    %2201 = vmatpush1.msra.mxu0 0.0
    %2202 = vmatprep.subr.mxu0 0.0
    %2203 = vmatpush1.msra.mxu0 0.0
    %2204 = vmatprep.subr.mxu0 0.0
    %2205 = vmatpush1.msra.mxu0 0.0
    %2206 = vmatprep.subr.mxu0 0.0
    %2207 = vmatpush1.msra.mxu0 0.0
    %2208 = vmatprep.subr.mxu0 0.0
    %2209 = vmatpush1.msra.mxu0 0.0
    %2210 = vmatprep.subr.mxu0 0.0
    %2211 = vmatpush1.msra.mxu0 0.0
    %2212 = vmatprep.subr.mxu0 0.0
    %2213 = vmatpush1.msra.mxu0 0.0
    %2214 = vmatprep.subr.mxu0 0.0
    %2215 = vmatpush1.msra.mxu0 0.0
    %2216 = vmatprep.subr.mxu0 0.0
    %2217 = vmatpush1.msra.mxu0 0.0
    %2218 = vmatprep.subr.mxu0 0.0
    %2219 = vmatpush1.msra.mxu0 0.0
    %2220 = vmatprep.mubr.f32.mxu0 0.0
    %2221 = vmatmul.mubr.f32.gmra.mrb[0].mxu0 %v2076
    %v2222 = vpop.f32.mrb[0].mxu0
    %v2223 = vadd.f32 0.0, %v2222
    %v2224 = vpop.f32.mrb[0].mxu0
    %v2225 = vadd.f32 0.0, %v2224
    %2226 = vmatprep.mubr.f32.mxu0 0.0
    %2227 = vmatmul.mubr.f32.gmra.mrb[0].mxu0 %v2077
    %v2228 = vpop.f32.mrb[0].mxu0
    %v2229 = vadd.f32 0.0, %v2228
    %v2230 = vpop.f32.mrb[0].mxu0
    %v2231 = vadd.f32 0.0, %v2230
    %2232 = vmatprep.mubr.f32.mxu0 0.0
    %2233 = vmatmul.mubr.f32.gmra.mrb[0].mxu0 %v2078
    %v2234 = vpop.f32.mrb[0].mxu0
    %v2235 = vadd.f32 0.0, %v2234
    %v2236 = vpop.f32.mrb[0].mxu0
    %v2237 = vadd.f32 0.0, %v2236
    %2238 = vmatprep.mubr.f32.mxu0 0.0
    %2239 = vmatmul.mubr.f32.gmra.mrb[0].mxu0 %v2079
    %v2240 = vpop.f32.mrb[0].mxu0
    %v2241 = vadd.f32 0.0, %v2240
    %v2242 = vpop.f32.mrb[0].mxu0
    %v2243 = vadd.f32 0.0, %v2242
    %2244 = vmatprep.mubr.f32.mxu0 0.0
    %2245 = vmatmul.mubr.f32.gmra.mrb[0].mxu0 %v2080
    %v2246 = vpop.f32.mrb[0].mxu0
    %v2247 = vadd.f32 0.0, %v2246
    %v2248 = vpop.f32.mrb[0].mxu0
    %v2249 = vadd.f32 0.0, %v2248
    %2250 = vmatprep.mubr.f32.mxu0 0.0
    %2251 = vmatmul.mubr.f32.gmra.mrb[0].mxu0 %v2081
    %v2252 = vpop.f32.mrb[0].mxu0
    %v2253 = vadd.f32 0.0, %v2252
    %v2254 = vpop.f32.mrb[0].mxu0
    %v2255 = vadd.f32 0.0, %v2254
    %2256 = vmatprep.mubr.f32.mxu0 0.0
    %2257 = vmatmul.mubr.f32.gmra.mrb[0].mxu0 %v2082
    %v2258 = vpop.f32.mrb[0].mxu0
    %v2259 = vadd.f32 0.0, %v2258
    %v2260 = vpop.f32.mrb[0].mxu0
    %v2261 = vadd.f32 0.0, %v2260
    %2262 = vmatprep.mubr.f32.mxu0 0.0
    %2263 = vmatmul.mubr.f32.gmra.mrb[0].mxu0 %v2083
    %v2264 = vpop.f32.mrb[0].mxu0
    %v2265 = vadd.f32 0.0, %v2264
    %v2266 = vpop.f32.mrb[0].mxu0
    %v2267 = vadd.f32 0.0, %v2266
    %2268 = vmatprep.mubr.f32.mxu0 0.0
    %2269 = vmatmul.mubr.f32.gmra.mrb[0].mxu0 %v2084
    %v2270 = vpop.f32.mrb[0].mxu0
    %v2271 = vadd.f32 0.0, %v2270
    %v2272 = vpop.f32.mrb[0].mxu0
    %v2273 = vadd.f32 0.0, %v2272
    %2274 = vmatprep.mubr.f32.mxu0 0.0
    %2275 = vmatmul.mubr.f32.gmra.mrb[0].mxu0 %v2085
    %v2276 = vpop.f32.mrb[0].mxu0
    %v2277 = vadd.f32 0.0, %v2276
    %v2278 = vpop.f32.mrb[0].mxu0
    %v2279 = vadd.f32 0.0, %v2278
    %2280 = vmatprep.mubr.f32.mxu0 0.0
    %2281 = vmatmul.mubr.f32.gmra.mrb[0].mxu0 %v2086
    %v2282 = vpop.f32.mrb[0].mxu0
    %v2283 = vadd.f32 0.0, %v2282
    %v2284 = vpop.f32.mrb[0].mxu0
    %v2285 = vadd.f32 0.0, %v2284
    %2286 = vmatprep.mubr.f32.mxu0 0.0
    %2287 = vmatmul.mubr.f32.gmra.mrb[0].mxu0 %v2087
    %v2288 = vpop.f32.mrb[0].mxu0
    %v2289 = vadd.f32 0.0, %v2288
    %v2290 = vpop.f32.mrb[0].mxu0
    %v2291 = vadd.f32 0.0, %v2290
    %2292 = vmatprep.mubr.f32.mxu0 0.0
    %2293 = vmatmul.mubr.f32.gmra.mrb[0].mxu0 %v2088
    %v2294 = vpop.f32.mrb[0].mxu0
    %v2295 = vadd.f32 0.0, %v2294
    %v2296 = vpop.f32.mrb[0].mxu0
    %v2297 = vadd.f32 0.0, %v2296
    %2298 = vmatprep.mubr.f32.mxu0 0.0
    %2299 = vmatmul.mubr.f32.gmra.mrb[0].mxu0 %v2089
    %v2300 = vpop.f32.mrb[0].mxu0
    %v2301 = vadd.f32 0.0, %v2300
    %v2302 = vpop.f32.mrb[0].mxu0
    %v2303 = vadd.f32 0.0, %v2302
    %2304 = vmatprep.mubr.f32.mxu0 0.0
    %2305 = vmatmul.mubr.f32.gmra.mrb[0].mxu0 %v2090
    %v2306 = vpop.f32.mrb[0].mxu0
    %v2307 = vadd.f32 0.0, %v2306
    %v2308 = vpop.f32.mrb[0].mxu0
    %v2309 = vadd.f32 0.0, %v2308
    %2310 = vmatprep.mubr.f32.mxu0 0.0
    %2311 = vmatmul.mubr.f32.gmra.mrb[0].mxu0 %v2091
    %v2312 = vpop.f32.mrb[0].mxu0
    %v2313 = vadd.f32 0.0, %v2312
    %v2314 = vpop.f32.mrb[0].mxu0
    %v2315 = vadd.f32 0.0, %v2314
    %2316 = vdwg.mxu0
    %2317 = vmatprep.subr.mxu0 %v2095
    %2318 = vmatpush1.msra.mxu0 %v2094
    %2319 = vmatprep.subr.mxu0 %v2099
    %2320 = vmatpush1.msra.mxu0 %v2098
    %2321 = vmatprep.subr.mxu0 %v2103
    %2322 = vmatpush1.msra.mxu0 %v2102
    %2323 = vmatprep.subr.mxu0 %v2107
    %2324 = vmatpush1.msra.mxu0 %v2106
    %2325 = vmatprep.subr.mxu0 %v2111
    %2326 = vmatpush1.msra.mxu0 %v2110
    %2327 = vmatprep.subr.mxu0 %v2115
    %2328 = vmatpush1.msra.mxu0 %v2114
    %2329 = vmatprep.subr.mxu0 %v2119
    %2330 = vmatpush1.msra.mxu0 %v2118
    %2331 = vmatprep.subr.mxu0 %v2123
    %2332 = vmatpush1.msra.mxu0 %v2122
    %2333 = vmatprep.subr.mxu0 %v2127
    %2334 = vmatpush1.msra.mxu0 %v2126
    %2335 = vmatprep.subr.mxu0 %v2131
    %2336 = vmatpush1.msra.mxu0 %v2130
    %2337 = vmatprep.subr.mxu0 %v2135
    %2338 = vmatpush1.msra.mxu0 %v2134
    %2339 = vmatprep.subr.mxu0 %v2139
    %2340 = vmatpush1.msra.mxu0 %v2138
    %2341 = vmatprep.subr.mxu0 %v2143
    %2342 = vmatpush1.msra.mxu0 %v2142
    %2343 = vmatprep.subr.mxu0 %v2147
    %2344 = vmatpush1.msra.mxu0 %v2146
    %2345 = vmatprep.subr.mxu0 %v2151
    %2346 = vmatpush1.msra.mxu0 %v2150
    %2347 = vmatprep.subr.mxu0 %v2155
    %2348 = vmatpush1.msra.mxu0 %v2154
    %2349 = vmatprep.subr.mxu0 0.0
    %2350 = vmatpush1.msra.mxu0 0.0
    %2351 = vmatprep.subr.mxu0 0.0
    %2352 = vmatpush1.msra.mxu0 0.0
    %2353 = vmatprep.subr.mxu0 0.0
    %2354 = vmatpush1.msra.mxu0 0.0
    %2355 = vmatprep.subr.mxu0 0.0
    %2356 = vmatpush1.msra.mxu0 0.0
    %2357 = vmatprep.subr.mxu0 0.0
    %2358 = vmatpush1.msra.mxu0 0.0
    %2359 = vmatprep.subr.mxu0 0.0
    %2360 = vmatpush1.msra.mxu0 0.0
    %2361 = vmatprep.subr.mxu0 0.0
    %2362 = vmatpush1.msra.mxu0 0.0
    %2363 = vmatprep.subr.mxu0 0.0
    %2364 = vmatpush1.msra.mxu0 0.0
    %2365 = vmatprep.subr.mxu0 0.0
    %2366 = vmatpush1.msra.mxu0 0.0
    %2367 = vmatprep.subr.mxu0 0.0
    %2368 = vmatpush1.msra.mxu0 0.0
    %2369 = vmatprep.subr.mxu0 0.0
    %2370 = vmatpush1.msra.mxu0 0.0
    %2371 = vmatprep.subr.mxu0 0.0
    %2372 = vmatpush1.msra.mxu0 0.0
    %2373 = vmatprep.subr.mxu0 0.0
    %2374 = vmatpush1.msra.mxu0 0.0
    %2375 = vmatprep.subr.mxu0 0.0
    %2376 = vmatpush1.msra.mxu0 0.0
    %2377 = vmatprep.subr.mxu0 0.0
    %2378 = vmatpush1.msra.mxu0 0.0
    %2379 = vmatprep.subr.mxu0 0.0
    %2380 = vmatpush1.msra.mxu0 0.0
    %2381 = vmatprep.mubr.f32.mxu0 0.0
    %2382 = vmatmul.mubr.f32.gmra.mrb[0].mxu0 %v2076
    %v2383 = vpop.f32.mrb[0].mxu0
    %v2384 = vadd.f32 0.0, %v2383
    %v2385 = vpop.f32.mrb[0].mxu0
    %v2386 = vadd.f32 0.0, %v2385
    %2387 = vmatprep.mubr.f32.mxu0 0.0
    %2388 = vmatmul.mubr.f32.gmra.mrb[0].mxu0 %v2077
    %v2389 = vpop.f32.mrb[0].mxu0
    %v2390 = vadd.f32 0.0, %v2389
    %v2391 = vpop.f32.mrb[0].mxu0
    %v2392 = vadd.f32 0.0, %v2391
    %2393 = vmatprep.mubr.f32.mxu0 0.0
    %2394 = vmatmul.mubr.f32.gmra.mrb[0].mxu0 %v2078
    %v2395 = vpop.f32.mrb[0].mxu0
    %v2396 = vadd.f32 0.0, %v2395
    %v2397 = vpop.f32.mrb[0].mxu0
    %v2398 = vadd.f32 0.0, %v2397
    %2399 = vmatprep.mubr.f32.mxu0 0.0
    %2400 = vmatmul.mubr.f32.gmra.mrb[0].mxu0 %v2079
    %v2401 = vpop.f32.mrb[0].mxu0
    %v2402 = vadd.f32 0.0, %v2401
    %v2403 = vpop.f32.mrb[0].mxu0
    %v2404 = vadd.f32 0.0, %v2403
    %2405 = vmatprep.mubr.f32.mxu0 0.0
    %2406 = vmatmul.mubr.f32.gmra.mrb[0].mxu0 %v2080
    %v2407 = vpop.f32.mrb[0].mxu0
    %v2408 = vadd.f32 0.0, %v2407
    %v2409 = vpop.f32.mrb[0].mxu0
    %v2410 = vadd.f32 0.0, %v2409
    %2411 = vmatprep.mubr.f32.mxu0 0.0
    %2412 = vmatmul.mubr.f32.gmra.mrb[0].mxu0 %v2081
    %v2413 = vpop.f32.mrb[0].mxu0
    %v2414 = vadd.f32 0.0, %v2413
    %v2415 = vpop.f32.mrb[0].mxu0
    %v2416 = vadd.f32 0.0, %v2415
    %2417 = vmatprep.mubr.f32.mxu0 0.0
    %2418 = vmatmul.mubr.f32.gmra.mrb[0].mxu0 %v2082
    %v2419 = vpop.f32.mrb[0].mxu0
    %v2420 = vadd.f32 0.0, %v2419
    %v2421 = vpop.f32.mrb[0].mxu0
    %v2422 = vadd.f32 0.0, %v2421
    %2423 = vmatprep.mubr.f32.mxu0 0.0
    %2424 = vmatmul.mubr.f32.gmra.mrb[0].mxu0 %v2083
    %v2425 = vpop.f32.mrb[0].mxu0
    %v2426 = vadd.f32 0.0, %v2425
    %v2427 = vpop.f32.mrb[0].mxu0
    %v2428 = vadd.f32 0.0, %v2427
    %2429 = vmatprep.mubr.f32.mxu0 0.0
    %2430 = vmatmul.mubr.f32.gmra.mrb[0].mxu0 %v2084
    %v2431 = vpop.f32.mrb[0].mxu0
    %v2432 = vadd.f32 0.0, %v2431
    %v2433 = vpop.f32.mrb[0].mxu0
    %v2434 = vadd.f32 0.0, %v2433
    %2435 = vmatprep.mubr.f32.mxu0 0.0
    %2436 = vmatmul.mubr.f32.gmra.mrb[0].mxu0 %v2085
    %v2437 = vpop.f32.mrb[0].mxu0
    %v2438 = vadd.f32 0.0, %v2437
    %v2439 = vpop.f32.mrb[0].mxu0
    %v2440 = vadd.f32 0.0, %v2439
    %2441 = vmatprep.mubr.f32.mxu0 0.0
    %2442 = vmatmul.mubr.f32.gmra.mrb[0].mxu0 %v2086
    %v2443 = vpop.f32.mrb[0].mxu0
    %v2444 = vadd.f32 0.0, %v2443
    %v2445 = vpop.f32.mrb[0].mxu0
    %v2446 = vadd.f32 0.0, %v2445
    %2447 = vmatprep.mubr.f32.mxu0 0.0
    %2448 = vmatmul.mubr.f32.gmra.mrb[0].mxu0 %v2087
    %v2449 = vpop.f32.mrb[0].mxu0
    %v2450 = vadd.f32 0.0, %v2449
    %v2451 = vpop.f32.mrb[0].mxu0
    %v2452 = vadd.f32 0.0, %v2451
    %2453 = vmatprep.mubr.f32.mxu0 0.0
    %2454 = vmatmul.mubr.f32.gmra.mrb[0].mxu0 %v2088
    %v2455 = vpop.f32.mrb[0].mxu0
    %v2456 = vadd.f32 0.0, %v2455
    %v2457 = vpop.f32.mrb[0].mxu0
    %v2458 = vadd.f32 0.0, %v2457
    %2459 = vmatprep.mubr.f32.mxu0 0.0
    %2460 = vmatmul.mubr.f32.gmra.mrb[0].mxu0 %v2089
    %v2461 = vpop.f32.mrb[0].mxu0
    %v2462 = vadd.f32 0.0, %v2461
    %v2463 = vpop.f32.mrb[0].mxu0
    %v2464 = vadd.f32 0.0, %v2463
    %2465 = vmatprep.mubr.f32.mxu0 0.0
    %2466 = vmatmul.mubr.f32.gmra.mrb[0].mxu0 %v2090
    %v2467 = vpop.f32.mrb[0].mxu0
    %v2468 = vadd.f32 0.0, %v2467
    %v2469 = vpop.f32.mrb[0].mxu0
    %v2470 = vadd.f32 0.0, %v2469
    %2471 = vmatprep.mubr.f32.mxu0 0.0
    %2472 = vmatmul.mubr.f32.gmra.mrb[0].mxu0 %v2091
    %v2473 = vpop.f32.mrb[0].mxu0
    %v2474 = vadd.f32 0.0, %v2473
    %v2475 = vpop.f32.mrb[0].mxu0
    %v2476 = vadd.f32 0.0, %v2475
    %2477 = vdwg.mxu0
    %v2478 = vld [vmem:[#allocation19] sm:$0xf]
    %v2480 = vlaneseq
    %v2481 = vshrl.u32 %v2480, 7
    %v2482 = vsub.s32 0, %v2481
    %v2483 = vrot.slane %v2478, %v2482
    %v2484 = vlaneseq
    %v2485 = vshrl.u32 %v2484, 7
    %v2486 = vsub.s32 1, %v2485
    %v2487 = vrot.slane %v2478, %v2486
    %v2488 = vlaneseq
    %v2489 = vshrl.u32 %v2488, 7
    %v2490 = vsub.s32 2, %v2489
    %v2491 = vrot.slane %v2478, %v2490
    %v2492 = vlaneseq
    %v2493 = vshrl.u32 %v2492, 7
    %v2494 = vsub.s32 3, %v2493
    %v2495 = vrot.slane %v2478, %v2494
    %v2500 = vmul.f32 %v2223, %v2483
    %v2501 = vmul.f32 %v2225, %v2487
    %v2502 = vmul.f32 %v2384, %v2491
    %v2503 = vmul.f32 %v2386, %v2495
    %v2504 = vmul.f32 %v2229, %v2483
    %v2505 = vmul.f32 %v2231, %v2487
    %v2506 = vmul.f32 %v2390, %v2491
    %v2507 = vmul.f32 %v2392, %v2495
    %v2508 = vmul.f32 %v2235, %v2483
    %v2509 = vmul.f32 %v2237, %v2487
    %v2510 = vmul.f32 %v2396, %v2491
    %v2511 = vmul.f32 %v2398, %v2495
    %v2512 = vmul.f32 %v2241, %v2483
    %v2513 = vmul.f32 %v2243, %v2487
    %v2514 = vmul.f32 %v2402, %v2491
    %v2515 = vmul.f32 %v2404, %v2495
    %v2516 = vmul.f32 %v2247, %v2483
    %v2517 = vmul.f32 %v2249, %v2487
    %v2518 = vmul.f32 %v2408, %v2491
    %v2519 = vmul.f32 %v2410, %v2495
    %v2520 = vmul.f32 %v2253, %v2483
    %v2521 = vmul.f32 %v2255, %v2487
    %v2522 = vmul.f32 %v2414, %v2491
    %v2523 = vmul.f32 %v2416, %v2495
    %v2524 = vmul.f32 %v2259, %v2483
    %v2525 = vmul.f32 %v2261, %v2487
    %v2526 = vmul.f32 %v2420, %v2491
    %v2527 = vmul.f32 %v2422, %v2495
    %v2528 = vmul.f32 %v2265, %v2483
    %v2529 = vmul.f32 %v2267, %v2487
    %v2530 = vmul.f32 %v2426, %v2491
    %v2531 = vmul.f32 %v2428, %v2495
    %v2532 = vmul.f32 %v2500, 1.442695
    %v2533 = vpow.pop %v2532
    %v2534 = vmul.f32 %v2501, 1.442695
    %v2535 = vpow.pop %v2534
    %v2536 = vmul.f32 %v2502, 1.442695
    %v2537 = vpow.pop %v2536
    %v2538 = vmul.f32 %v2503, 1.442695
    %v2539 = vpow.pop %v2538
    %v2540 = vmul.f32 %v2504, 1.442695
    %v2541 = vpow.pop %v2540
    %v2542 = vmul.f32 %v2505, 1.442695
    %v2543 = vpow.pop %v2542
    %v2544 = vmul.f32 %v2506, 1.442695
    %v2545 = vpow.pop %v2544
    %v2546 = vmul.f32 %v2507, 1.442695
    %v2547 = vpow.pop %v2546
    %v2548 = vmul.f32 %v2508, 1.442695
    %v2549 = vpow.pop %v2548
    %v2550 = vmul.f32 %v2509, 1.442695
    %v2551 = vpow.pop %v2550
    %v2552 = vmul.f32 %v2510, 1.442695
    %v2553 = vpow.pop %v2552
    %v2554 = vmul.f32 %v2511, 1.442695
    %v2555 = vpow.pop %v2554
    %v2556 = vmul.f32 %v2512, 1.442695
    %v2557 = vpow.pop %v2556
    %v2558 = vmul.f32 %v2513, 1.442695
    %v2559 = vpow.pop %v2558
    %v2560 = vmul.f32 %v2514, 1.442695
    %v2561 = vpow.pop %v2560
    %v2562 = vmul.f32 %v2515, 1.442695
    %v2563 = vpow.pop %v2562
    %v2564 = vmul.f32 %v2516, 1.442695
    %v2565 = vpow.pop %v2564
    %v2566 = vmul.f32 %v2517, 1.442695
    %v2567 = vpow.pop %v2566
    %v2568 = vmul.f32 %v2518, 1.442695
    %v2569 = vpow.pop %v2568
    %v2570 = vmul.f32 %v2519, 1.442695
    %v2571 = vpow.pop %v2570
    %v2572 = vmul.f32 %v2520, 1.442695
    %v2573 = vpow.pop %v2572
    %v2574 = vmul.f32 %v2521, 1.442695
    %v2575 = vpow.pop %v2574
    %v2576 = vmul.f32 %v2522, 1.442695
    %v2577 = vpow.pop %v2576
    %v2578 = vmul.f32 %v2523, 1.442695
    %v2579 = vpow.pop %v2578
    %v2580 = vmul.f32 %v2524, 1.442695
    %v2581 = vpow.pop %v2580
    %v2582 = vmul.f32 %v2525, 1.442695
    %v2583 = vpow.pop %v2582
    %v2584 = vmul.f32 %v2526, 1.442695
    %v2585 = vpow.pop %v2584
    %v2586 = vmul.f32 %v2527, 1.442695
    %v2587 = vpow.pop %v2586
    %v2588 = vmul.f32 %v2528, 1.442695
    %v2589 = vpow.pop %v2588
    %v2590 = vmul.f32 %v2529, 1.442695
    %v2591 = vpow.pop %v2590
    %v2592 = vmul.f32 %v2530, 1.442695
    %v2593 = vpow.pop %v2592
    %v2594 = vmul.f32 %v2531, 1.442695
    %v2595 = vpow.pop %v2594
    %2596 = vst [vmem:[#allocation2] sm:$0xff] %v2533
    %2597 = vst [vmem:[#allocation2 + $0x8] sm:$0xff] %v2535
    %2598 = vst [vmem:[#allocation2 + $0x10] sm:$0xff] %v2537
    %2599 = vst [vmem:[#allocation2 + $0x18] sm:$0xff] %v2539
    %2600 = vst [vmem:[#allocation2 + $0x20] sm:$0xff] %v2541
    %2601 = vst [vmem:[#allocation2 + $0x28] sm:$0xff] %v2543
    %2602 = vst [vmem:[#allocation2 + $0x30] sm:$0xff] %v2545
    %2603 = vst [vmem:[#allocation2 + $0x38] sm:$0xff] %v2547
    %2604 = vst [vmem:[#allocation2 + $0x40] sm:$0xff] %v2549
    %2605 = vst [vmem:[#allocation2 + $0x48] sm:$0xff] %v2551
    %2606 = vst [vmem:[#allocation2 + $0x50] sm:$0xff] %v2553
    %2607 = vst [vmem:[#allocation2 + $0x58] sm:$0xff] %v2555
    %2608 = vst [vmem:[#allocation2 + $0x60] sm:$0xff] %v2557
    %2609 = vst [vmem:[#allocation2 + $0x68] sm:$0xff] %v2559
    %2610 = vst [vmem:[#allocation2 + $0x70] sm:$0xff] %v2561
    %2611 = vst [vmem:[#allocation2 + $0x78] sm:$0xff] %v2563
    %2612 = vst [vmem:[#allocation2 + $0x80] sm:$0xff] %v2565
    %2613 = vst [vmem:[#allocation2 + $0x88] sm:$0xff] %v2567
    %2614 = vst [vmem:[#allocation2 + $0x90] sm:$0xff] %v2569
    %2615 = vst [vmem:[#allocation2 + $0x98] sm:$0xff] %v2571
    %2616 = vst [vmem:[#allocation2 + $0xa0] sm:$0xff] %v2573
    %2617 = vst [vmem:[#allocation2 + $0xa8] sm:$0xff] %v2575
    %2618 = vst [vmem:[#allocation2 + $0xb0] sm:$0xff] %v2577
    %2619 = vst [vmem:[#allocation2 + $0xb8] sm:$0xff] %v2579
    %2620 = vst [vmem:[#allocation2 + $0xc0] sm:$0xff] %v2581
    %2621 = vst [vmem:[#allocation2 + $0xc8] sm:$0xff] %v2583
    %2622 = vst [vmem:[#allocation2 + $0xd0] sm:$0xff] %v2585
    %2623 = vst [vmem:[#allocation2 + $0xd8] sm:$0xff] %v2587
    %2624 = vst [vmem:[#allocation2 + $0xe0] sm:$0xff] %v2589
    %2625 = vst [vmem:[#allocation2 + $0xe8] sm:$0xff] %v2591
    %2626 = vst [vmem:[#allocation2 + $0xf0] sm:$0xff] %v2593
    %2627 = vst [vmem:[#allocation2 + $0xf8] sm:$0xff] %v2595
    %v2628 = vmul.f32 %v2271, %v1677
    %v2629 = vmul.f32 %v2273, %v1748
    %v2630 = vmul.f32 %v2432, %v1750
    %v2631 = vmul.f32 %v2434, %v1821
    %v2632 = vmul.f32 %v2277, %v1681
    %v2633 = vmul.f32 %v2279, %v1752
    %v2634 = vmul.f32 %v2438, %v1754
    %v2635 = vmul.f32 %v2440, %v1825
    %v2636 = vmul.f32 %v2283, %v1687
    %v2637 = vmul.f32 %v2285, %v1758
    %v2638 = vmul.f32 %v2444, %v1760
    %v2639 = vmul.f32 %v2446, %v1831
    %v2640 = vmul.f32 %v2289, %v1691
    %v2641 = vmul.f32 %v2291, %v1762
    %v2642 = vmul.f32 %v2450, %v1764
    %v2643 = vmul.f32 %v2452, %v1835
    %v2644 = vmul.f32 %v2295, %v1697
    %v2645 = vmul.f32 %v2297, %v1768
    %v2646 = vmul.f32 %v2456, %v1770
    %v2647 = vmul.f32 %v2458, %v1841
    %v2648 = vmul.f32 %v2301, %v1701
    %v2649 = vmul.f32 %v2303, %v1772
    %v2650 = vmul.f32 %v2462, %v1774
    %v2651 = vmul.f32 %v2464, %v1845
    %v2652 = vmul.f32 %v2307, %v1707
    %v2653 = vmul.f32 %v2309, %v1778
    %v2654 = vmul.f32 %v2468, %v1780
    %v2655 = vmul.f32 %v2470, %v1851
    %v2656 = vmul.f32 %v2313, %v1711
    %v2657 = vmul.f32 %v2315, %v1782
    %v2658 = vmul.f32 %v2474, %v1784
    %v2659 = vmul.f32 %v2476, %v1855
    %2660 = vst [vmem:[#allocation3] sm:$0xff] %v2628
    %2661 = vst [vmem:[#allocation3 + $0x8] sm:$0xff] %v2629
    %2662 = vst [vmem:[#allocation3 + $0x10] sm:$0xff] %v2630
    %2663 = vst [vmem:[#allocation3 + $0x18] sm:$0xff] %v2631
    %2664 = vst [vmem:[#allocation3 + $0x20] sm:$0xff] %v2632
    %2665 = vst [vmem:[#allocation3 + $0x28] sm:$0xff] %v2633
    %2666 = vst [vmem:[#allocation3 + $0x30] sm:$0xff] %v2634
    %2667 = vst [vmem:[#allocation3 + $0x38] sm:$0xff] %v2635
    %2668 = vst [vmem:[#allocation3 + $0x40] sm:$0xff] %v2636
    %2669 = vst [vmem:[#allocation3 + $0x48] sm:$0xff] %v2637
    %2670 = vst [vmem:[#allocation3 + $0x50] sm:$0xff] %v2638
    %2671 = vst [vmem:[#allocation3 + $0x58] sm:$0xff] %v2639
    %2672 = vst [vmem:[#allocation3 + $0x60] sm:$0xff] %v2640
    %2673 = vst [vmem:[#allocation3 + $0x68] sm:$0xff] %v2641
    %2674 = vst [vmem:[#allocation3 + $0x70] sm:$0xff] %v2642
    %2675 = vst [vmem:[#allocation3 + $0x78] sm:$0xff] %v2643
    %2676 = vst [vmem:[#allocation3 + $0x80] sm:$0xff] %v2644
    %2677 = vst [vmem:[#allocation3 + $0x88] sm:$0xff] %v2645
    %2678 = vst [vmem:[#allocation3 + $0x90] sm:$0xff] %v2646
    %2679 = vst [vmem:[#allocation3 + $0x98] sm:$0xff] %v2647
    %2680 = vst [vmem:[#allocation3 + $0xa0] sm:$0xff] %v2648
    %2681 = vst [vmem:[#allocation3 + $0xa8] sm:$0xff] %v2649
    %2682 = vst [vmem:[#allocation3 + $0xb0] sm:$0xff] %v2650
    %2683 = vst [vmem:[#allocation3 + $0xb8] sm:$0xff] %v2651
    %2684 = vst [vmem:[#allocation3 + $0xc0] sm:$0xff] %v2652
    %2685 = vst [vmem:[#allocation3 + $0xc8] sm:$0xff] %v2653
    %2686 = vst [vmem:[#allocation3 + $0xd0] sm:$0xff] %v2654
    %2687 = vst [vmem:[#allocation3 + $0xd8] sm:$0xff] %v2655
    %2688 = vst [vmem:[#allocation3 + $0xe0] sm:$0xff] %v2656
    %2689 = vst [vmem:[#allocation3 + $0xe8] sm:$0xff] %v2657
    %2690 = vst [vmem:[#allocation3 + $0xf0] sm:$0xff] %v2658
    %2691 = vst [vmem:[#allocation3 + $0xf8] sm:$0xff] %v2659
    loop: start=0, step=1, limit=8
    $region146: #{tpu_custom_call.1} parent=1 // loop_pre_header
      _
    $region147: #{tpu_custom_call.1} parent=1 // loop_header
      %s2693 = sphi 0, %s2697
      %p2694 = scmp.ge.s32.totalorder %s2693, 8
      %v2698 = vphi 0.0, %v2808
    $region148: #{tpu_custom_call.1} parent=1 // loop_header_branch
      %2696 = sbr.rel (%p2694) target = $region152
    $region149: #{tpu_custom_call.1} parent=1 // loop_body
      %s2699 = smul.u32 %s2693, 8
      %s2700 = sshra.s32 %s2699, 3
      %s2701 = sand.u32 %s2699, 7
      %s2702 = smul.u32 %s2700, 4
      %s2703 = smul.addr %s2702, 8
      %s2704 = scalar_lea.vmem [#allocation2], %s2703
      %v2705 = vld [vmem:[%s2704] ss:$8 sm:$0xf]
      %v2706 = vmul.f32 %v2705, %v2698
      %s2707 = smul.addr %s2702, 8
      %s2708 = scalar_lea.vmem [#allocation3], %s2707
      %v2709 = vld [vmem:[%s2708] ss:$8 sm:$0xf]
      %v2710 = vadd.f32 %v2706, %v2709
      %s2711 = sadd.s32 %s2699, 1
      %s2712 = sshra.s32 %s2711, 3
      %s2713 = sand.u32 %s2711, 7
      %s2714 = sshra.s32 %s2711, 3
      %s2715 = sand.u32 %s2711, 7
      %s2716 = smul.u32 %s2712, 4
      %s2717 = smul.u32 %s2716, 8
      %s2718 = sadd.s32 %s2717, %s2715
      %s2719 = scalar_lea.vmem [#allocation2], %s2718
      %v2720 = vld [vmem:[%s2719] ss:$8 sm:$0xf]
      %v2721 = vmul.f32 %v2720, %v2710
      %s2722 = scalar_lea.vmem [#allocation3], %s2718
      %v2723 = vld [vmem:[%s2722] ss:$8 sm:$0xf]
      %v2724 = vadd.f32 %v2721, %v2723
      %s2725 = sadd.s32 %s2699, 2
      %s2726 = sshra.s32 %s2725, 3
      %s2727 = sand.u32 %s2725, 7
      %s2728 = sshra.s32 %s2725, 3
      %s2729 = sand.u32 %s2725, 7
      %s2730 = smul.u32 %s2726, 4
      %s2731 = smul.u32 %s2730, 8
      %s2732 = sadd.s32 %s2731, %s2729
      %s2733 = scalar_lea.vmem [#allocation2], %s2732
      %v2734 = vld [vmem:[%s2733] ss:$8 sm:$0xf]
      %v2735 = vmul.f32 %v2734, %v2724
      %s2736 = scalar_lea.vmem [#allocation3], %s2732
      %v2737 = vld [vmem:[%s2736] ss:$8 sm:$0xf]
      %v2738 = vadd.f32 %v2735, %v2737
      %s2739 = sadd.s32 %s2699, 3
      %s2740 = sshra.s32 %s2739, 3
      %s2741 = sand.u32 %s2739, 7
      %s2742 = sshra.s32 %s2739, 3
      %s2743 = sand.u32 %s2739, 7
      %s2744 = smul.u32 %s2740, 4
      %s2745 = smul.u32 %s2744, 8
      %s2746 = sadd.s32 %s2745, %s2743
      %s2747 = scalar_lea.vmem [#allocation2], %s2746
      %v2748 = vld [vmem:[%s2747] ss:$8 sm:$0xf]
      %v2749 = vmul.f32 %v2748, %v2738
      %s2750 = scalar_lea.vmem [#allocation3], %s2746
      %v2751 = vld [vmem:[%s2750] ss:$8 sm:$0xf]
      %v2752 = vadd.f32 %v2749, %v2751
      %s2753 = sadd.s32 %s2699, 4
      %s2754 = sshra.s32 %s2753, 3
      %s2755 = sand.u32 %s2753, 7
      %s2756 = sshra.s32 %s2753, 3
      %s2757 = sand.u32 %s2753, 7
      %s2758 = smul.u32 %s2754, 4
      %s2759 = smul.u32 %s2758, 8
      %s2760 = sadd.s32 %s2759, %s2757
      %s2761 = scalar_lea.vmem [#allocation2], %s2760
      %v2762 = vld [vmem:[%s2761] ss:$8 sm:$0xf]
      %v2763 = vmul.f32 %v2762, %v2752
      %s2764 = scalar_lea.vmem [#allocation3], %s2760
      %v2765 = vld [vmem:[%s2764] ss:$8 sm:$0xf]
      %v2766 = vadd.f32 %v2763, %v2765
      %s2767 = sadd.s32 %s2699, 5
      %s2768 = sshra.s32 %s2767, 3
      %s2769 = sand.u32 %s2767, 7
      %s2770 = sshra.s32 %s2767, 3
      %s2771 = sand.u32 %s2767, 7
      %s2772 = smul.u32 %s2768, 4
      %s2773 = smul.u32 %s2772, 8
      %s2774 = sadd.s32 %s2773, %s2771
      %s2775 = scalar_lea.vmem [#allocation2], %s2774
      %v2776 = vld [vmem:[%s2775] ss:$8 sm:$0xf]
      %v2777 = vmul.f32 %v2776, %v2766
      %s2778 = scalar_lea.vmem [#allocation3], %s2774
      %v2779 = vld [vmem:[%s2778] ss:$8 sm:$0xf]
      %v2780 = vadd.f32 %v2777, %v2779
      %s2781 = sadd.s32 %s2699, 6
      %s2782 = sshra.s32 %s2781, 3
      %s2783 = sand.u32 %s2781, 7
      %s2784 = sshra.s32 %s2781, 3
      %s2785 = sand.u32 %s2781, 7
      %s2786 = smul.u32 %s2782, 4
      %s2787 = smul.u32 %s2786, 8
      %s2788 = sadd.s32 %s2787, %s2785
      %s2789 = scalar_lea.vmem [#allocation2], %s2788
      %v2790 = vld [vmem:[%s2789] ss:$8 sm:$0xf]
      %v2791 = vmul.f32 %v2790, %v2780
      %s2792 = scalar_lea.vmem [#allocation3], %s2788
      %v2793 = vld [vmem:[%s2792] ss:$8 sm:$0xf]
      %v2794 = vadd.f32 %v2791, %v2793
      %s2795 = sadd.s32 %s2699, 7
      %s2796 = sshra.s32 %s2795, 3
      %s2797 = sand.u32 %s2795, 7
      %s2798 = sshra.s32 %s2795, 3
      %s2799 = sand.u32 %s2795, 7
      %s2800 = smul.u32 %s2796, 4
      %s2801 = smul.u32 %s2800, 8
      %s2802 = sadd.s32 %s2801, %s2799
      %s2803 = scalar_lea.vmem [#allocation2], %s2802
      %v2804 = vld [vmem:[%s2803] ss:$8 sm:$0xf]
      %v2805 = vmul.f32 %v2804, %v2794
      %s2806 = scalar_lea.vmem [#allocation3], %s2802
      %v2807 = vld [vmem:[%s2806] ss:$8 sm:$0xf]
      %v2808 = vadd.f32 %v2805, %v2807
      %v2810 = vlaneseq
      %v2811 = vshrl.u32 %v2810, 7
      %v2812 = vsub.s32 0, %v2811
      %v2813 = vrot.slane %v2710, %v2812
      %v2814 = vlaneseq
      %v2815 = vshrl.u32 %v2814, 7
      %v2816 = vsub.s32 1, %v2815
      %v2817 = vrot.slane %v2710, %v2816
      %v2818 = vlaneseq
      %v2819 = vshrl.u32 %v2818, 7
      %v2820 = vsub.s32 2, %v2819
      %v2821 = vrot.slane %v2710, %v2820
      %v2822 = vlaneseq
      %v2823 = vshrl.u32 %v2822, 7
      %v2824 = vsub.s32 3, %v2823
      %v2825 = vrot.slane %v2710, %v2824
      %v2831 = vlaneseq
      %v2832 = vshrl.u32 %v2831, 7
      %v2833 = vsub.s32 0, %v2832
      %v2834 = vrot.slane %v2724, %v2833
      %v2835 = vlaneseq
      %v2836 = vshrl.u32 %v2835, 7
      %v2837 = vsub.s32 1, %v2836
      %v2838 = vrot.slane %v2724, %v2837
      %v2839 = vlaneseq
      %v2840 = vshrl.u32 %v2839, 7
      %v2841 = vsub.s32 2, %v2840
      %v2842 = vrot.slane %v2724, %v2841
      %v2843 = vlaneseq
      %v2844 = vshrl.u32 %v2843, 7
      %v2845 = vsub.s32 3, %v2844
      %v2846 = vrot.slane %v2724, %v2845
      %v2852 = vlaneseq
      %v2853 = vshrl.u32 %v2852, 7
      %v2854 = vsub.s32 0, %v2853
      %v2855 = vrot.slane %v2738, %v2854
      %v2856 = vlaneseq
      %v2857 = vshrl.u32 %v2856, 7
      %v2858 = vsub.s32 1, %v2857
      %v2859 = vrot.slane %v2738, %v2858
      %v2860 = vlaneseq
      %v2861 = vshrl.u32 %v2860, 7
      %v2862 = vsub.s32 2, %v2861
      %v2863 = vrot.slane %v2738, %v2862
      %v2864 = vlaneseq
      %v2865 = vshrl.u32 %v2864, 7
      %v2866 = vsub.s32 3, %v2865
      %v2867 = vrot.slane %v2738, %v2866
      %v2873 = vlaneseq
      %v2874 = vshrl.u32 %v2873, 7
      %v2875 = vsub.s32 0, %v2874
      %v2876 = vrot.slane %v2752, %v2875
      %v2877 = vlaneseq
      %v2878 = vshrl.u32 %v2877, 7
      %v2879 = vsub.s32 1, %v2878
      %v2880 = vrot.slane %v2752, %v2879
      %v2881 = vlaneseq
      %v2882 = vshrl.u32 %v2881, 7
      %v2883 = vsub.s32 2, %v2882
      %v2884 = vrot.slane %v2752, %v2883
      %v2885 = vlaneseq
      %v2886 = vshrl.u32 %v2885, 7
      %v2887 = vsub.s32 3, %v2886
      %v2888 = vrot.slane %v2752, %v2887
      %v2894 = vlaneseq
      %v2895 = vshrl.u32 %v2894, 7
      %v2896 = vsub.s32 0, %v2895
      %v2897 = vrot.slane %v2766, %v2896
      %v2898 = vlaneseq
      %v2899 = vshrl.u32 %v2898, 7
      %v2900 = vsub.s32 1, %v2899
      %v2901 = vrot.slane %v2766, %v2900
      %v2902 = vlaneseq
      %v2903 = vshrl.u32 %v2902, 7
      %v2904 = vsub.s32 2, %v2903
      %v2905 = vrot.slane %v2766, %v2904
      %v2906 = vlaneseq
      %v2907 = vshrl.u32 %v2906, 7
      %v2908 = vsub.s32 3, %v2907
      %v2909 = vrot.slane %v2766, %v2908
      %v2915 = vlaneseq
      %v2916 = vshrl.u32 %v2915, 7
      %v2917 = vsub.s32 0, %v2916
      %v2918 = vrot.slane %v2780, %v2917
      %v2919 = vlaneseq
      %v2920 = vshrl.u32 %v2919, 7
      %v2921 = vsub.s32 1, %v2920
      %v2922 = vrot.slane %v2780, %v2921
      %v2923 = vlaneseq
      %v2924 = vshrl.u32 %v2923, 7
      %v2925 = vsub.s32 2, %v2924
      %v2926 = vrot.slane %v2780, %v2925
      %v2927 = vlaneseq
      %v2928 = vshrl.u32 %v2927, 7
      %v2929 = vsub.s32 3, %v2928
      %v2930 = vrot.slane %v2780, %v2929
      %v2936 = vlaneseq
      %v2937 = vshrl.u32 %v2936, 7
      %v2938 = vsub.s32 0, %v2937
      %v2939 = vrot.slane %v2794, %v2938
      %v2940 = vlaneseq
      %v2941 = vshrl.u32 %v2940, 7
      %v2942 = vsub.s32 1, %v2941
      %v2943 = vrot.slane %v2794, %v2942
      %v2944 = vlaneseq
      %v2945 = vshrl.u32 %v2944, 7
      %v2946 = vsub.s32 2, %v2945
      %v2947 = vrot.slane %v2794, %v2946
      %v2948 = vlaneseq
      %v2949 = vshrl.u32 %v2948, 7
      %v2950 = vsub.s32 3, %v2949
      %v2951 = vrot.slane %v2794, %v2950
      %v2957 = vlaneseq
      %v2958 = vshrl.u32 %v2957, 7
      %v2959 = vsub.s32 0, %v2958
      %v2960 = vrot.slane %v2808, %v2959
      %v2961 = vlaneseq
      %v2962 = vshrl.u32 %v2961, 7
      %v2963 = vsub.s32 1, %v2962
      %v2964 = vrot.slane %v2808, %v2963
      %v2965 = vlaneseq
      %v2966 = vshrl.u32 %v2965, 7
      %v2967 = vsub.s32 2, %v2966
      %v2968 = vrot.slane %v2808, %v2967
      %v2969 = vlaneseq
      %v2970 = vshrl.u32 %v2969, 7
      %v2971 = vsub.s32 3, %v2970
      %v2972 = vrot.slane %v2808, %v2971
      %vm2977 = vcmask 1040384
      %v2978 = vsel %vm2977, %v2813, %v2834
      %v2979 = vsel %vm2977, %v2817, %v2838
      %v2980 = vsel %vm2977, %v2821, %v2842
      %v2981 = vsel %vm2977, %v2825, %v2846
      %vm2982 = vcmask 1041408
      %v2983 = vsel %vm2982, %v2978, %v2855
      %v2984 = vsel %vm2982, %v2979, %v2859
      %v2985 = vsel %vm2982, %v2980, %v2863
      %v2986 = vsel %vm2982, %v2981, %v2867
      %vm2987 = vcmask 1042432
      %v2988 = vsel %vm2987, %v2983, %v2876
      %v2989 = vsel %vm2987, %v2984, %v2880
      %v2990 = vsel %vm2987, %v2985, %v2884
      %v2991 = vsel %vm2987, %v2986, %v2888
      %vm2992 = vcmask 1043456
      %v2993 = vsel %vm2992, %v2988, %v2897
      %v2994 = vsel %vm2992, %v2989, %v2901
      %v2995 = vsel %vm2992, %v2990, %v2905
      %v2996 = vsel %vm2992, %v2991, %v2909
      %vm2997 = vcmask 1044480
      %v2998 = vsel %vm2997, %v2993, %v2918
      %v2999 = vsel %vm2997, %v2994, %v2922
      %v3000 = vsel %vm2997, %v2995, %v2926
      %v3001 = vsel %vm2997, %v2996, %v2930
      %vm3002 = vcmask 1045504
      %v3003 = vsel %vm3002, %v2998, %v2939
      %v3004 = vsel %vm3002, %v2999, %v2943
      %v3005 = vsel %vm3002, %v3000, %v2947
      %v3006 = vsel %vm3002, %v3001, %v2951
      %vm3007 = vcmask 1046528
      %v3008 = vsel %vm3007, %v3003, %v2960
      %v3009 = vsel %vm3007, %v3004, %v2964
      %v3010 = vsel %vm3007, %v3005, %v2968
      %v3011 = vsel %vm3007, %v3006, %v2972
      %3012 = vst [vmem:[%s2704] sm:$0xff] %v3008
      %3013 = vst [vmem:[%s2704 + $0x8] sm:$0xff] %v3009
      %3014 = vst [vmem:[%s2704 + $0x10] sm:$0xff] %v3010
      %3015 = vst [vmem:[%s2704 + $0x18] sm:$0xff] %v3011
    $region150: #{tpu_custom_call.1} parent=1 // loop_footer
      %s2697 = sadd.s32 1, %s2693
    $region151: #{tpu_custom_call.1} parent=1 // loop_footer_branch
      %2692 = sbr.rel target = $region147
    $region152: #{tpu_custom_call.1} parent=1 // loop_exit
      _
    %v3016 = vld [vmem:[#allocation2] sm:$0xff]
    %v3017 = vld [vmem:[#allocation2 + $0x8] sm:$0xff]
    %v3018 = vld [vmem:[#allocation2 + $0x10] sm:$0xff]
    %v3019 = vld [vmem:[#allocation2 + $0x18] sm:$0xff]
    %v3020 = vld [vmem:[#allocation2 + $0x20] sm:$0xff]
    %v3021 = vld [vmem:[#allocation2 + $0x28] sm:$0xff]
    %v3022 = vld [vmem:[#allocation2 + $0x30] sm:$0xff]
    %v3023 = vld [vmem:[#allocation2 + $0x38] sm:$0xff]
    %v3024 = vld [vmem:[#allocation2 + $0x40] sm:$0xff]
    %v3025 = vld [vmem:[#allocation2 + $0x48] sm:$0xff]
    %v3026 = vld [vmem:[#allocation2 + $0x50] sm:$0xff]
    %v3027 = vld [vmem:[#allocation2 + $0x58] sm:$0xff]
    %v3028 = vld [vmem:[#allocation2 + $0x60] sm:$0xff]
    %v3029 = vld [vmem:[#allocation2 + $0x68] sm:$0xff]
    %v3030 = vld [vmem:[#allocation2 + $0x70] sm:$0xff]
    %v3031 = vld [vmem:[#allocation2 + $0x78] sm:$0xff]
    %v3032 = vld [vmem:[#allocation2 + $0x80] sm:$0xff]
    %v3033 = vld [vmem:[#allocation2 + $0x88] sm:$0xff]
    %v3034 = vld [vmem:[#allocation2 + $0x90] sm:$0xff]
    %v3035 = vld [vmem:[#allocation2 + $0x98] sm:$0xff]
    %v3036 = vld [vmem:[#allocation2 + $0xa0] sm:$0xff]
    %v3037 = vld [vmem:[#allocation2 + $0xa8] sm:$0xff]
    %v3038 = vld [vmem:[#allocation2 + $0xb0] sm:$0xff]
    %v3039 = vld [vmem:[#allocation2 + $0xb8] sm:$0xff]
    %v3040 = vld [vmem:[#allocation2 + $0xc0] sm:$0xff]
    %v3041 = vld [vmem:[#allocation2 + $0xc8] sm:$0xff]
    %v3042 = vld [vmem:[#allocation2 + $0xd0] sm:$0xff]
    %v3043 = vld [vmem:[#allocation2 + $0xd8] sm:$0xff]
    %v3044 = vld [vmem:[#allocation2 + $0xe0] sm:$0xff]
    %v3045 = vld [vmem:[#allocation2 + $0xe8] sm:$0xff]
    %v3046 = vld [vmem:[#allocation2 + $0xf0] sm:$0xff]
    %v3047 = vld [vmem:[#allocation2 + $0xf8] sm:$0xff]
    %v3048 = vmul.f32 %v3016, %v1823
    %v3049 = vmul.f32 %v3017, %v1894
    %v3050 = vmul.f32 %v3018, %v1896
    %v3051 = vmul.f32 %v3019, %v1967
    %v3052 = vmul.f32 %v3020, %v1827
    %v3053 = vmul.f32 %v3021, %v1898
    %v3054 = vmul.f32 %v3022, %v1900
    %v3055 = vmul.f32 %v3023, %v1970
    %v3056 = vmul.f32 %v3024, %v1833
    %v3057 = vmul.f32 %v3025, %v1904
    %v3058 = vmul.f32 %v3026, %v1906
    %v3059 = vmul.f32 %v3027, %v1975
    %v3060 = vmul.f32 %v3028, %v1837
    %v3061 = vmul.f32 %v3029, %v1908
    %v3062 = vmul.f32 %v3030, %v1910
    %v3063 = vmul.f32 %v3031, %v1978
    %v3064 = vmul.f32 %v3032, %v1843
    %v3065 = vmul.f32 %v3033, %v1914
    %v3066 = vmul.f32 %v3034, %v1916
    %v3067 = vmul.f32 %v3035, %v1983
    %v3068 = vmul.f32 %v3036, %v1847
    %v3069 = vmul.f32 %v3037, %v1918
    %v3070 = vmul.f32 %v3038, %v1920
    %v3071 = vmul.f32 %v3039, %v1986
    %v3072 = vmul.f32 %v3040, %v1853
    %v3073 = vmul.f32 %v3041, %v1924
    %v3074 = vmul.f32 %v3042, %v1926
    %v3075 = vmul.f32 %v3043, %v1991
    %v3076 = vmul.f32 %v3044, %v1857
    %v3077 = vmul.f32 %v3045, %v1928
    %v3078 = vmul.f32 %v3046, %v1930
    %v3079 = vmul.f32 %v3047, %v1994
    %v3080 = vld [vmem:[#allocation21] sm:$0xff]
    %v3081 = vld [vmem:[#allocation21 + $0x8] sm:$0xff]
    %v3082 = vld [vmem:[#allocation21 + $0x10] sm:$0xff]
    %v3083 = vld [vmem:[#allocation21 + $0x18] sm:$0xff]
    %v3084 = vld [vmem:[#allocation21 + $0x20] sm:$0xff]
    %v3085 = vld [vmem:[#allocation21 + $0x28] sm:$0xff]
    %v3086 = vld [vmem:[#allocation21 + $0x30] sm:$0xff]
    %v3087 = vld [vmem:[#allocation21 + $0x38] sm:$0xff]
    %v3088 = vld [vmem:[#allocation21 + $0x40] sm:$0xff]
    %v3089 = vld [vmem:[#allocation21 + $0x48] sm:$0xff]
    %v3090 = vld [vmem:[#allocation21 + $0x50] sm:$0xff]
    %v3091 = vld [vmem:[#allocation21 + $0x58] sm:$0xff]
    %v3092 = vld [vmem:[#allocation21 + $0x60] sm:$0xff]
    %v3093 = vld [vmem:[#allocation21 + $0x68] sm:$0xff]
    %v3094 = vld [vmem:[#allocation21 + $0x70] sm:$0xff]
    %v3095 = vld [vmem:[#allocation21 + $0x78] sm:$0xff]
    %v3096 = vld [vmem:[#allocation21 + $0x80] sm:$0xff]
    %v3097 = vld [vmem:[#allocation21 + $0x88] sm:$0xff]
    %v3098 = vld [vmem:[#allocation21 + $0x90] sm:$0xff]
    %v3099 = vld [vmem:[#allocation21 + $0x98] sm:$0xff]
    %v3100 = vld [vmem:[#allocation21 + $0xa0] sm:$0xff]
    %v3101 = vld [vmem:[#allocation21 + $0xa8] sm:$0xff]
    %v3102 = vld [vmem:[#allocation21 + $0xb0] sm:$0xff]
    %v3103 = vld [vmem:[#allocation21 + $0xb8] sm:$0xff]
    %v3104 = vld [vmem:[#allocation21 + $0xc0] sm:$0xff]
    %v3105 = vld [vmem:[#allocation21 + $0xc8] sm:$0xff]
    %v3106 = vld [vmem:[#allocation21 + $0xd0] sm:$0xff]
    %v3107 = vld [vmem:[#allocation21 + $0xd8] sm:$0xff]
    %v3108 = vld [vmem:[#allocation21 + $0xe0] sm:$0xff]
    %v3109 = vld [vmem:[#allocation21 + $0xe8] sm:$0xff]
    %v3110 = vld [vmem:[#allocation21 + $0xf0] sm:$0xff]
    %v3111 = vld [vmem:[#allocation21 + $0xf8] sm:$0xff]
    %v3112 = vld [vmem:[#allocation21 + $0x100] sm:$0xff]
    %v3113 = vld [vmem:[#allocation21 + $0x108] sm:$0xff]
    %v3114 = vld [vmem:[#allocation21 + $0x110] sm:$0xff]
    %v3115 = vld [vmem:[#allocation21 + $0x118] sm:$0xff]
    %v3116 = vld [vmem:[#allocation21 + $0x120] sm:$0xff]
    %v3117 = vld [vmem:[#allocation21 + $0x128] sm:$0xff]
    %v3118 = vld [vmem:[#allocation21 + $0x130] sm:$0xff]
    %v3119 = vld [vmem:[#allocation21 + $0x138] sm:$0xff]
    %v3120 = vld [vmem:[#allocation21 + $0x140] sm:$0xff]
    %v3121 = vld [vmem:[#allocation21 + $0x148] sm:$0xff]
    %v3122 = vld [vmem:[#allocation21 + $0x150] sm:$0xff]
    %v3123 = vld [vmem:[#allocation21 + $0x158] sm:$0xff]
    %v3124 = vld [vmem:[#allocation21 + $0x160] sm:$0xff]
    %v3125 = vld [vmem:[#allocation21 + $0x168] sm:$0xff]
    %v3126 = vld [vmem:[#allocation21 + $0x170] sm:$0xff]
    %v3127 = vld [vmem:[#allocation21 + $0x178] sm:$0xff]
    %v3128 = vld [vmem:[#allocation21 + $0x180] sm:$0xff]
    %v3129 = vld [vmem:[#allocation21 + $0x188] sm:$0xff]
    %v3130 = vld [vmem:[#allocation21 + $0x190] sm:$0xff]
    %v3131 = vld [vmem:[#allocation21 + $0x198] sm:$0xff]
    %v3132 = vld [vmem:[#allocation21 + $0x1a0] sm:$0xff]
    %v3133 = vld [vmem:[#allocation21 + $0x1a8] sm:$0xff]
    %v3134 = vld [vmem:[#allocation21 + $0x1b0] sm:$0xff]
    %v3135 = vld [vmem:[#allocation21 + $0x1b8] sm:$0xff]
    %v3136 = vld [vmem:[#allocation21 + $0x1c0] sm:$0xff]
    %v3137 = vld [vmem:[#allocation21 + $0x1c8] sm:$0xff]
    %v3138 = vld [vmem:[#allocation21 + $0x1d0] sm:$0xff]
    %v3139 = vld [vmem:[#allocation21 + $0x1d8] sm:$0xff]
    %v3140 = vld [vmem:[#allocation21 + $0x1e0] sm:$0xff]
    %v3141 = vld [vmem:[#allocation21 + $0x1e8] sm:$0xff]
    %v3142 = vld [vmem:[#allocation21 + $0x1f0] sm:$0xff]
    %v3143 = vld [vmem:[#allocation21 + $0x1f8] sm:$0xff]
    %v3144 = vld [vmem:[#allocation22] sm:$0x1]
    %v3146 = vlaneseq
    %v3147 = vshrl.u32 %v3146, 7
    %v3148 = vsub.s32 0, %v3147
    %v3149 = vrot.slane %v3144, %v3148
    %v3151 = vmul.f32 %v1180, %v3149
    %v3152 = vmul.f32 %v1181, %v3149
    %v3153 = vmul.f32 %v1182, %v3149
    %v3154 = vmul.f32 %v1183, %v3149
    %v3155 = vmul.f32 %v1184, %v3149
    %v3156 = vmul.f32 %v1185, %v3149
    %v3157 = vmul.f32 %v1186, %v3149
    %v3158 = vmul.f32 %v1187, %v3149
    %3159 = vmatprep.subr.mxu0 0.0
    %3160 = vmatpush1.msra.mxu0 %v3080
    %3161 = vmatprep.subr.mxu0 0.0
    %3162 = vmatpush1.msra.mxu0 %v3081
    %3163 = vmatprep.subr.mxu0 0.0
    %3164 = vmatpush1.msra.mxu0 %v3082
    %3165 = vmatprep.subr.mxu0 0.0
    %3166 = vmatpush1.msra.mxu0 %v3083
    %3167 = vmatprep.subr.mxu0 0.0
    %3168 = vmatpush1.msra.mxu0 %v3084
    %3169 = vmatprep.subr.mxu0 0.0
    %3170 = vmatpush1.msra.mxu0 %v3085
    %3171 = vmatprep.subr.mxu0 0.0
    %3172 = vmatpush1.msra.mxu0 %v3086
    %3173 = vmatprep.subr.mxu0 0.0
    %3174 = vmatpush1.msra.mxu0 %v3087
    %3175 = vmatprep.subr.mxu0 0.0
    %3176 = vmatpush1.msra.mxu0 %v3088
    %3177 = vmatprep.subr.mxu0 0.0
    %3178 = vmatpush1.msra.mxu0 %v3089
    %3179 = vmatprep.subr.mxu0 0.0
    %3180 = vmatpush1.msra.mxu0 %v3090
    %3181 = vmatprep.subr.mxu0 0.0
    %3182 = vmatpush1.msra.mxu0 %v3091
    %3183 = vmatprep.subr.mxu0 0.0
    %3184 = vmatpush1.msra.mxu0 %v3092
    %3185 = vmatprep.subr.mxu0 0.0
    %3186 = vmatpush1.msra.mxu0 %v3093
    %3187 = vmatprep.subr.mxu0 0.0
    %3188 = vmatpush1.msra.mxu0 %v3094
    %3189 = vmatprep.subr.mxu0 0.0
    %3190 = vmatpush1.msra.mxu0 %v3095
    %3191 = vmatprep.subr.mxu0 0.0
    %3192 = vmatpush1.msra.mxu0 %v3096
    %3193 = vmatprep.subr.mxu0 0.0
    %3194 = vmatpush1.msra.mxu0 %v3097
    %3195 = vmatprep.subr.mxu0 0.0
    %3196 = vmatpush1.msra.mxu0 %v3098
    %3197 = vmatprep.subr.mxu0 0.0
    %3198 = vmatpush1.msra.mxu0 %v3099
    %3199 = vmatprep.subr.mxu0 0.0
    %3200 = vmatpush1.msra.mxu0 %v3100
    %3201 = vmatprep.subr.mxu0 0.0
    %3202 = vmatpush1.msra.mxu0 %v3101
    %3203 = vmatprep.subr.mxu0 0.0
    %3204 = vmatpush1.msra.mxu0 %v3102
    %3205 = vmatprep.subr.mxu0 0.0
    %3206 = vmatpush1.msra.mxu0 %v3103
    %3207 = vmatprep.subr.mxu0 0.0
    %3208 = vmatpush1.msra.mxu0 %v3104
    %3209 = vmatprep.subr.mxu0 0.0
    %3210 = vmatpush1.msra.mxu0 %v3105
    %3211 = vmatprep.subr.mxu0 0.0
    %3212 = vmatpush1.msra.mxu0 %v3106
    %3213 = vmatprep.subr.mxu0 0.0
    %3214 = vmatpush1.msra.mxu0 %v3107
    %3215 = vmatprep.subr.mxu0 0.0
    %3216 = vmatpush1.msra.mxu0 %v3108
    %3217 = vmatprep.subr.mxu0 0.0
    %3218 = vmatpush1.msra.mxu0 %v3109
    %3219 = vmatprep.subr.mxu0 0.0
    %3220 = vmatpush1.msra.mxu0 %v3110
    %3221 = vmatprep.subr.mxu0 0.0
    %3222 = vmatpush1.msra.mxu0 %v3111
    %3223 = vmatprep.mubr.f32.mxu0 %v3049
    %3224 = vmatmul.mubr.f32.gmra.mrb[0].mxu0 %v3048
    %v3225 = vpop.f32.mrb[0].mxu0
    %v3226 = vadd.f32 %v3151, %v3225
    %v3227 = vpop.f32.mrb[0].mxu0
    %3228 = vmatprep.mubr.f32.mxu0 %v3053
    %3229 = vmatmul.mubr.f32.gmra.mrb[0].mxu0 %v3052
    %v3230 = vpop.f32.mrb[0].mxu0
    %v3231 = vadd.f32 %v3152, %v3230
    %v3232 = vpop.f32.mrb[0].mxu0
    %3233 = vmatprep.mubr.f32.mxu0 %v3057
    %3234 = vmatmul.mubr.f32.gmra.mrb[0].mxu0 %v3056
    %v3235 = vpop.f32.mrb[0].mxu0
    %v3236 = vadd.f32 %v3153, %v3235
    %v3237 = vpop.f32.mrb[0].mxu0
    %3238 = vmatprep.mubr.f32.mxu0 %v3061
    %3239 = vmatmul.mubr.f32.gmra.mrb[0].mxu0 %v3060
    %v3240 = vpop.f32.mrb[0].mxu0
    %v3241 = vadd.f32 %v3154, %v3240
    %v3242 = vpop.f32.mrb[0].mxu0
    %3243 = vmatprep.mubr.f32.mxu0 %v3065
    %3244 = vmatmul.mubr.f32.gmra.mrb[0].mxu0 %v3064
    %v3245 = vpop.f32.mrb[0].mxu0
    %v3246 = vadd.f32 %v3155, %v3245
    %v3247 = vpop.f32.mrb[0].mxu0
    %3248 = vmatprep.mubr.f32.mxu0 %v3069
    %3249 = vmatmul.mubr.f32.gmra.mrb[0].mxu0 %v3068
    %v3250 = vpop.f32.mrb[0].mxu0
    %v3251 = vadd.f32 %v3156, %v3250
    %v3252 = vpop.f32.mrb[0].mxu0
    %3253 = vmatprep.mubr.f32.mxu0 %v3073
    %3254 = vmatmul.mubr.f32.gmra.mrb[0].mxu0 %v3072
    %v3255 = vpop.f32.mrb[0].mxu0
    %v3256 = vadd.f32 %v3157, %v3255
    %v3257 = vpop.f32.mrb[0].mxu0
    %3258 = vmatprep.mubr.f32.mxu0 %v3077
    %3259 = vmatmul.mubr.f32.gmra.mrb[0].mxu0 %v3076
    %v3260 = vpop.f32.mrb[0].mxu0
    %v3261 = vadd.f32 %v3158, %v3260
    %v3262 = vpop.f32.mrb[0].mxu0
    %3263 = vdwg.mxu0
    %3264 = vmatprep.subr.mxu0 0.0
    %3265 = vmatpush1.msra.mxu0 %v3112
    %3266 = vmatprep.subr.mxu0 0.0
    %3267 = vmatpush1.msra.mxu0 %v3113
    %3268 = vmatprep.subr.mxu0 0.0
    %3269 = vmatpush1.msra.mxu0 %v3114
    %3270 = vmatprep.subr.mxu0 0.0
    %3271 = vmatpush1.msra.mxu0 %v3115
    %3272 = vmatprep.subr.mxu0 0.0
    %3273 = vmatpush1.msra.mxu0 %v3116
    %3274 = vmatprep.subr.mxu0 0.0
    %3275 = vmatpush1.msra.mxu0 %v3117
    %3276 = vmatprep.subr.mxu0 0.0
    %3277 = vmatpush1.msra.mxu0 %v3118
    %3278 = vmatprep.subr.mxu0 0.0
    %3279 = vmatpush1.msra.mxu0 %v3119
    %3280 = vmatprep.subr.mxu0 0.0
    %3281 = vmatpush1.msra.mxu0 %v3120
    %3282 = vmatprep.subr.mxu0 0.0
    %3283 = vmatpush1.msra.mxu0 %v3121
    %3284 = vmatprep.subr.mxu0 0.0
    %3285 = vmatpush1.msra.mxu0 %v3122
    %3286 = vmatprep.subr.mxu0 0.0
    %3287 = vmatpush1.msra.mxu0 %v3123
    %3288 = vmatprep.subr.mxu0 0.0
    %3289 = vmatpush1.msra.mxu0 %v3124
    %3290 = vmatprep.subr.mxu0 0.0
    %3291 = vmatpush1.msra.mxu0 %v3125
    %3292 = vmatprep.subr.mxu0 0.0
    %3293 = vmatpush1.msra.mxu0 %v3126
    %3294 = vmatprep.subr.mxu0 0.0
    %3295 = vmatpush1.msra.mxu0 %v3127
    %3296 = vmatprep.subr.mxu0 0.0
    %3297 = vmatpush1.msra.mxu0 %v3128
    %3298 = vmatprep.subr.mxu0 0.0
    %3299 = vmatpush1.msra.mxu0 %v3129
    %3300 = vmatprep.subr.mxu0 0.0
    %3301 = vmatpush1.msra.mxu0 %v3130
    %3302 = vmatprep.subr.mxu0 0.0
    %3303 = vmatpush1.msra.mxu0 %v3131
    %3304 = vmatprep.subr.mxu0 0.0
    %3305 = vmatpush1.msra.mxu0 %v3132
    %3306 = vmatprep.subr.mxu0 0.0
    %3307 = vmatpush1.msra.mxu0 %v3133
    %3308 = vmatprep.subr.mxu0 0.0
    %3309 = vmatpush1.msra.mxu0 %v3134
    %3310 = vmatprep.subr.mxu0 0.0
    %3311 = vmatpush1.msra.mxu0 %v3135
    %3312 = vmatprep.subr.mxu0 0.0
    %3313 = vmatpush1.msra.mxu0 %v3136
    %3314 = vmatprep.subr.mxu0 0.0
    %3315 = vmatpush1.msra.mxu0 %v3137
    %3316 = vmatprep.subr.mxu0 0.0
    %3317 = vmatpush1.msra.mxu0 %v3138
    %3318 = vmatprep.subr.mxu0 0.0
    %3319 = vmatpush1.msra.mxu0 %v3139
    %3320 = vmatprep.subr.mxu0 0.0
    %3321 = vmatpush1.msra.mxu0 %v3140
    %3322 = vmatprep.subr.mxu0 0.0
    %3323 = vmatpush1.msra.mxu0 %v3141
    %3324 = vmatprep.subr.mxu0 0.0
    %3325 = vmatpush1.msra.mxu0 %v3142
    %3326 = vmatprep.subr.mxu0 0.0
    %3327 = vmatpush1.msra.mxu0 %v3143
    %3328 = vmatprep.mubr.f32.mxu0 %v3051
    %3329 = vmatmul.mubr.f32.gmra.mrb[0].mxu0 %v3050
    %v3330 = vpop.f32.mrb[0].mxu0
    %v3331 = vadd.f32 %v3226, %v3330
    %v3332 = vpop.f32.mrb[0].mxu0
    %3333 = vmatprep.mubr.f32.mxu0 %v3055
    %3334 = vmatmul.mubr.f32.gmra.mrb[0].mxu0 %v3054
    %v3335 = vpop.f32.mrb[0].mxu0
    %v3336 = vadd.f32 %v3231, %v3335
    %v3337 = vpop.f32.mrb[0].mxu0
    %3338 = vmatprep.mubr.f32.mxu0 %v3059
    %3339 = vmatmul.mubr.f32.gmra.mrb[0].mxu0 %v3058
    %v3340 = vpop.f32.mrb[0].mxu0
    %v3341 = vadd.f32 %v3236, %v3340
    %v3342 = vpop.f32.mrb[0].mxu0
    %3343 = vmatprep.mubr.f32.mxu0 %v3063
    %3344 = vmatmul.mubr.f32.gmra.mrb[0].mxu0 %v3062
    %v3345 = vpop.f32.mrb[0].mxu0
    %v3346 = vadd.f32 %v3241, %v3345
    %v3347 = vpop.f32.mrb[0].mxu0
    %3348 = vmatprep.mubr.f32.mxu0 %v3067
    %3349 = vmatmul.mubr.f32.gmra.mrb[0].mxu0 %v3066
    %v3350 = vpop.f32.mrb[0].mxu0
    %v3351 = vadd.f32 %v3246, %v3350
    %v3352 = vpop.f32.mrb[0].mxu0
    %3353 = vmatprep.mubr.f32.mxu0 %v3071
    %3354 = vmatmul.mubr.f32.gmra.mrb[0].mxu0 %v3070
    %v3355 = vpop.f32.mrb[0].mxu0
    %v3356 = vadd.f32 %v3251, %v3355
    %v3357 = vpop.f32.mrb[0].mxu0
    %3358 = vmatprep.mubr.f32.mxu0 %v3075
    %3359 = vmatmul.mubr.f32.gmra.mrb[0].mxu0 %v3074
    %v3360 = vpop.f32.mrb[0].mxu0
    %v3361 = vadd.f32 %v3256, %v3360
    %v3362 = vpop.f32.mrb[0].mxu0
    %3363 = vmatprep.mubr.f32.mxu0 %v3079
    %3364 = vmatmul.mubr.f32.gmra.mrb[0].mxu0 %v3078
    %v3365 = vpop.f32.mrb[0].mxu0
    %v3366 = vadd.f32 %v3261, %v3365
    %v3367 = vpop.f32.mrb[0].mxu0
    %3368 = vdwg.mxu0
    %v3369 = vsub.f32 0.0, %v755
    %v3370 = vsub.f32 0.0, %v759
    %v3371 = vsub.f32 0.0, %v765
    %v3372 = vsub.f32 0.0, %v769
    %v3373 = vsub.f32 0.0, %v775
    %v3374 = vsub.f32 0.0, %v779
    %v3375 = vsub.f32 0.0, %v785
    %v3376 = vsub.f32 0.0, %v789
    %v3377 = vmul.f32 %v3369, 1.442695
    %v3378 = vpow.pop %v3377
    %v3379 = vmul.f32 %v3370, 1.442695
    %v3380 = vpow.pop %v3379
    %v3381 = vmul.f32 %v3371, 1.442695
    %v3382 = vpow.pop %v3381
    %v3383 = vmul.f32 %v3372, 1.442695
    %v3384 = vpow.pop %v3383
    %v3385 = vmul.f32 %v3373, 1.442695
    %v3386 = vpow.pop %v3385
    %v3387 = vmul.f32 %v3374, 1.442695
    %v3388 = vpow.pop %v3387
    %v3389 = vmul.f32 %v3375, 1.442695
    %v3390 = vpow.pop %v3389
    %v3391 = vmul.f32 %v3376, 1.442695
    %v3392 = vpow.pop %v3391
    %v3393 = vadd.f32 %v3378, 1.0
    %v3394 = vadd.f32 %v3380, 1.0
    %v3395 = vadd.f32 %v3382, 1.0
    %v3396 = vadd.f32 %v3384, 1.0
    %v3397 = vadd.f32 %v3386, 1.0
    %v3398 = vadd.f32 %v3388, 1.0
    %v3399 = vadd.f32 %v3390, 1.0
    %v3400 = vadd.f32 %v3392, 1.0
    %v3401 = vrcp.pop %v3393
    %v3402 = vrcp.pop %v3394
    %v3403 = vrcp.pop %v3395
    %v3404 = vrcp.pop %v3396
    %v3405 = vrcp.pop %v3397
    %v3406 = vrcp.pop %v3398
    %v3407 = vrcp.pop %v3399
    %v3408 = vrcp.pop %v3400
    %v3409 = vmul.f32 %v755, %v3401
    %v3410 = vmul.f32 %v759, %v3402
    %v3411 = vmul.f32 %v765, %v3403
    %v3412 = vmul.f32 %v769, %v3404
    %v3413 = vmul.f32 %v775, %v3405
    %v3414 = vmul.f32 %v779, %v3406
    %v3415 = vmul.f32 %v785, %v3407
    %v3416 = vmul.f32 %v789, %v3408
    %v3417 = vmul.f32 %v3331, %v3409
    %v3418 = vmul.f32 %v3336, %v3410
    %v3419 = vmul.f32 %v3341, %v3411
    %v3420 = vmul.f32 %v3346, %v3412
    %v3421 = vmul.f32 %v3351, %v3413
    %v3422 = vmul.f32 %v3356, %v3414
    %v3423 = vmul.f32 %v3361, %v3415
    %v3424 = vmul.f32 %v3366, %v3416
    %v3425 = vpack.c.bf16 %v3418, %v3417
    %v3426 = vpack.c.bf16 %v3420, %v3419
    %v3427 = vpack.c.bf16 %v3422, %v3421
    %v3428 = vpack.c.bf16 %v3424, %v3423
    %v3429 = vld [vmem:[%s14] sm:$0xf]
    %v3430 = vld [vmem:[%s14 + $0x4] sm:$0xf]
    %v3431 = vld [vmem:[%s14 + $0x8] sm:$0xf]
    %v3432 = vld [vmem:[%s14 + $0xc] sm:$0xf]
    %v3433 = vld [vmem:[%s14 + $0x10] sm:$0xf]
    %v3434 = vld [vmem:[%s14 + $0x14] sm:$0xf]
    %v3435 = vld [vmem:[%s14 + $0x18] sm:$0xf]
    %v3436 = vld [vmem:[%s14 + $0x1c] sm:$0xf]
    %v3437 = vld [vmem:[%s14 + $0x20] sm:$0xf]
    %v3438 = vld [vmem:[%s14 + $0x24] sm:$0xf]
    %v3439 = vld [vmem:[%s14 + $0x28] sm:$0xf]
    %v3440 = vld [vmem:[%s14 + $0x2c] sm:$0xf]
    %v3441 = vld [vmem:[%s14 + $0x30] sm:$0xf]
    %v3442 = vld [vmem:[%s14 + $0x34] sm:$0xf]
    %v3443 = vld [vmem:[%s14 + $0x38] sm:$0xf]
    %v3444 = vld [vmem:[%s14 + $0x3c] sm:$0xf]
    %v3461 = vunpack.c.l.b16 %v3429
    %v3462 = vunpack.c.l.b16 %v3430
    %v3463 = vunpack.c.l.b16 %v3431
    %v3464 = vunpack.c.l.b16 %v3432
    %v3465 = vunpack.c.l.b16 %v3433
    %v3466 = vunpack.c.l.b16 %v3434
    %v3467 = vunpack.c.l.b16 %v3435
    %v3468 = vunpack.c.l.b16 %v3436
    %v3469 = vunpack.c.l.b16 %v3437
    %v3470 = vunpack.c.l.b16 %v3438
    %v3471 = vunpack.c.l.b16 %v3439
    %v3472 = vunpack.c.l.b16 %v3440
    %v3473 = vunpack.c.l.b16 %v3441
    %v3474 = vunpack.c.l.b16 %v3442
    %v3475 = vunpack.c.l.b16 %v3443
    %v3476 = vunpack.c.l.b16 %v3444
    %v3477 = vpack.c.b16 %v3462, %v3461
    %v3478 = vpack.c.b16 %v3464, %v3463
    %v3479 = vpack.c.b16 %v3466, %v3465
    %v3480 = vpack.c.b16 %v3468, %v3467
    %v3481 = vpack.c.b16 %v3470, %v3469
    %v3482 = vpack.c.b16 %v3472, %v3471
    %v3483 = vpack.c.b16 %v3474, %v3473
    %v3484 = vpack.c.b16 %v3476, %v3475
    %3493 = vmatprep.subr.bf16.mxu0 0
    %3494 = vmatpush1.bf16.msra.mxu0 %v3477
    %3495 = vmatprep.subr.bf16.mxu0 0
    %3496 = vmatpush1.bf16.msra.mxu0 %v3478
    %3497 = vmatprep.subr.bf16.mxu0 0
    %3498 = vmatpush1.bf16.msra.mxu0 %v3479
    %3499 = vmatprep.subr.bf16.mxu0 0
    %3500 = vmatpush1.bf16.msra.mxu0 %v3480
    %3501 = vmatprep.subr.bf16.mxu0 0
    %3502 = vmatpush1.bf16.msra.mxu0 %v3481
    %3503 = vmatprep.subr.bf16.mxu0 0
    %3504 = vmatpush1.bf16.msra.mxu0 %v3482
    %3505 = vmatprep.subr.bf16.mxu0 0
    %3506 = vmatpush1.bf16.msra.mxu0 %v3483
    %3507 = vmatprep.subr.bf16.mxu0 0
    %3508 = vmatpush1.bf16.msra.mxu0 %v3484
    %3509 = vmatprep.subr.bf16.mxu0 0
    %3510 = vmatpush1.bf16.msra.mxu0 0
    %3511 = vmatprep.subr.bf16.mxu0 0
    %3512 = vmatpush1.bf16.msra.mxu0 0
    %3513 = vmatprep.subr.bf16.mxu0 0
    %3514 = vmatpush1.bf16.msra.mxu0 0
    %3515 = vmatprep.subr.bf16.mxu0 0
    %3516 = vmatpush1.bf16.msra.mxu0 0
    %3517 = vmatprep.subr.bf16.mxu0 0
    %3518 = vmatpush1.bf16.msra.mxu0 0
    %3519 = vmatprep.subr.bf16.mxu0 0
    %3520 = vmatpush1.bf16.msra.mxu0 0
    %3521 = vmatprep.subr.bf16.mxu0 0
    %3522 = vmatpush1.bf16.msra.mxu0 0
    %3523 = vmatprep.subr.bf16.mxu0 0
    %3524 = vmatpush1.bf16.msra.mxu0 0
    %3525 = vmatprep.mubr.bf16.mxu0 0
    %3526 = vmatmul.mubr.bf16.gmra.mrb[0].mxu0 %v3425
    %v3527 = vpop.f32.mrb[0].mxu0
    %v3528 = vadd.f32 0.0, %v3527
    %v3529 = vpop.f32.mrb[0].mxu0
    %v3530 = vpop.f32.mrb[0].mxu0
    %v3531 = vadd.f32 0.0, %v3530
    %v3532 = vpop.f32.mrb[0].mxu0
    %3533 = vmatprep.mubr.bf16.mxu0 0
    %3534 = vmatmul.mubr.bf16.gmra.mrb[0].mxu0 %v3426
    %v3535 = vpop.f32.mrb[0].mxu0
    %v3536 = vadd.f32 0.0, %v3535
    %v3537 = vpop.f32.mrb[0].mxu0
    %v3538 = vpop.f32.mrb[0].mxu0
    %v3539 = vadd.f32 0.0, %v3538
    %v3540 = vpop.f32.mrb[0].mxu0
    %3541 = vmatprep.mubr.bf16.mxu0 0
    %3542 = vmatmul.mubr.bf16.gmra.mrb[0].mxu0 %v3427
    %v3543 = vpop.f32.mrb[0].mxu0
    %v3544 = vadd.f32 0.0, %v3543
    %v3545 = vpop.f32.mrb[0].mxu0
    %v3546 = vpop.f32.mrb[0].mxu0
    %v3547 = vadd.f32 0.0, %v3546
    %v3548 = vpop.f32.mrb[0].mxu0
    %3549 = vmatprep.mubr.bf16.mxu0 0
    %3550 = vmatmul.mubr.bf16.gmra.mrb[0].mxu0 %v3428
    %v3551 = vpop.f32.mrb[0].mxu0
    %v3552 = vadd.f32 0.0, %v3551
    %v3553 = vpop.f32.mrb[0].mxu0
    %v3554 = vpop.f32.mrb[0].mxu0
    %v3555 = vadd.f32 0.0, %v3554
    %v3556 = vpop.f32.mrb[0].mxu0
    %3557 = vdwg.mxu0
    %v3558 = vadd.f32 %v614, %v3528
    %v3559 = vadd.f32 %v615, %v3531
    %v3560 = vadd.f32 %v616, %v3536
    %v3561 = vadd.f32 %v617, %v3539
    %v3562 = vadd.f32 %v618, %v3544
    %v3563 = vadd.f32 %v619, %v3547
    %v3564 = vadd.f32 %v620, %v3552
    %v3565 = vadd.f32 %v621, %v3555
    %v3566 = vsel %vm269, %v863, 0.0
    %v3567 = vsel %vm269, %v864, 0.0
    %v3568 = vadd.f32 %v3566, %v3567
    %v3569 = vsel %vm269, %v865, 0.0
    %v3570 = vadd.f32 %v3568, %v3569
    %v3571 = vsel %vm269, %v866, 0.0
    %v3572 = vadd.f32 %v3570, %v3571
    %v3573 = vsel %vm269, %v867, 0.0
    %v3574 = vadd.f32 %v3572, %v3573
    %v3575 = vsel %vm269, %v868, 0.0
    %v3576 = vadd.f32 %v3574, %v3575
    %v3577 = vsel %vm269, %v869, 0.0
    %v3578 = vadd.f32 %v3576, %v3577
    %v3579 = vsel %vm269, %v870, 0.0
    %v3580 = vadd.f32 %v3578, %v3579
    %v3581 = vrot.slane %v3580, 4
    %v3582 = vadd.f32 %v3580, %v3581
    %v3583 = vrot.slane %v3582, 2
    %v3584 = vadd.f32 %v3582, %v3583
    %v3585 = vrot.slane %v3584, 1
    %v3586 = vadd.f32 %v3584, %v3585
    %v3587 = vmul.f32 %v3586, 0.015625
    %v3588 = vmul.f32 %v863, %v863
    %v3589 = vmul.f32 %v864, %v864
    %v3590 = vmul.f32 %v865, %v865
    %v3591 = vmul.f32 %v866, %v866
    %v3592 = vmul.f32 %v867, %v867
    %v3593 = vmul.f32 %v868, %v868
    %v3594 = vmul.f32 %v869, %v869
    %v3595 = vmul.f32 %v870, %v870
    %v3596 = vsel %vm269, %v3588, 0.0
    %v3597 = vsel %vm269, %v3589, 0.0
    %v3598 = vadd.f32 %v3596, %v3597
    %v3599 = vsel %vm269, %v3590, 0.0
    %v3600 = vadd.f32 %v3598, %v3599
    %v3601 = vsel %vm269, %v3591, 0.0
    %v3602 = vadd.f32 %v3600, %v3601
    %v3603 = vsel %vm269, %v3592, 0.0
    %v3604 = vadd.f32 %v3602, %v3603
    %v3605 = vsel %vm269, %v3593, 0.0
    %v3606 = vadd.f32 %v3604, %v3605
    %v3607 = vsel %vm269, %v3594, 0.0
    %v3608 = vadd.f32 %v3606, %v3607
    %v3609 = vsel %vm269, %v3595, 0.0
    %v3610 = vadd.f32 %v3608, %v3609
    %v3611 = vrot.slane %v3610, 4
    %v3612 = vadd.f32 %v3610, %v3611
    %v3613 = vrot.slane %v3612, 2
    %v3614 = vadd.f32 %v3612, %v3613
    %v3615 = vrot.slane %v3614, 1
    %v3616 = vadd.f32 %v3614, %v3615
    %v3617 = vmul.f32 %v3616, 0.015625
    %v3618 = vmul.f32 %v3587, %v3587
    %v3619 = vsub.f32 %v3617, %v3618
    %v3620 = vmax.f32 %v3619, 0.0
    %v3621 = vsub.f32 %v863, %v3587
    %v3622 = vsub.f32 %v864, %v3587
    %v3623 = vsub.f32 %v865, %v3587
    %v3624 = vsub.f32 %v866, %v3587
    %v3625 = vsub.f32 %v867, %v3587
    %v3626 = vsub.f32 %v868, %v3587
    %v3627 = vsub.f32 %v869, %v3587
    %v3628 = vsub.f32 %v870, %v3587
    %v3629 = vadd.f32 %v3620, 1e-05
    %v3630 = vrsqrt.pop %v3629
    %v3631 = vmul.f32 %v3621, %v3630
    %v3632 = vmul.f32 %v3622, %v3630
    %v3633 = vmul.f32 %v3623, %v3630
    %v3634 = vmul.f32 %v3624, %v3630
    %v3635 = vmul.f32 %v3625, %v3630
    %v3636 = vmul.f32 %v3626, %v3630
    %v3637 = vmul.f32 %v3627, %v3630
    %v3638 = vmul.f32 %v3628, %v3630
    %v3639 = vld [vmem:[%s17] sm:$0xff]
    %v3640 = vld [vmem:[%s17 + $0x8] sm:$0x1]
    %v3641 = vld [vmem:[%s18] sm:$0x1]
    %v3642 = vlaneseq
    %v3643 = vshrl.u32 %v3642, 7
    %v3644 = vsub.s32 4, %v3643
    %v3645 = vrot.slane %v3639, %v3644
    %v3646 = vmul.f32 %v3631, %v3645
    %v3647 = vmul.f32 %v3632, %v3645
    %v3648 = vmul.f32 %v3633, %v3645
    %v3649 = vmul.f32 %v3634, %v3645
    %v3650 = vmul.f32 %v3635, %v3645
    %v3651 = vmul.f32 %v3636, %v3645
    %v3652 = vmul.f32 %v3637, %v3645
    %v3653 = vmul.f32 %v3638, %v3645
    %v3655 = vlaneseq
    %v3656 = vshrl.u32 %v3655, 7
    %v3657 = vsub.s32 0, %v3656
    %v3658 = vrot.slane %v3641, %v3657
    %v3660 = vadd.f32 %v3658, %v3646
    %v3661 = vadd.f32 %v3658, %v3647
    %v3662 = vadd.f32 %v3658, %v3648
    %v3663 = vadd.f32 %v3658, %v3649
    %v3664 = vadd.f32 %v3658, %v3650
    %v3665 = vadd.f32 %v3658, %v3651
    %v3666 = vadd.f32 %v3658, %v3652
    %v3667 = vadd.f32 %v3658, %v3653
    %v3668 = vrot.slane %v3631, 7
    %v3669 = vrot.slane %v3632, 7
    %v3670 = vrot.slane %v3633, 7
    %v3671 = vrot.slane %v3634, 7
    %v3672 = vrot.slane %v3635, 7
    %v3673 = vrot.slane %v3636, 7
    %v3674 = vrot.slane %v3637, 7
    %v3675 = vrot.slane %v3638, 7
    %v3676 = vsel %vm909, %v3674, %v3675
    %v3677 = vsel %vm909, %v3673, %v3674
    %v3678 = vsel %vm909, %v3672, %v3673
    %v3679 = vsel %vm909, %v3671, %v3672
    %v3680 = vsel %vm909, %v3670, %v3671
    %v3681 = vsel %vm909, %v3669, %v3670
    %v3682 = vsel %vm909, %v3668, %v3669
    %v3683 = vsel %vm909, %v3675, %v3668
    %3684 = vset.pattern.permute.xlu0 0
    %3685 = vperm.xlu0 %3684, %v245
    %v3686 = vpop.permute.xlu0 %3685
    %3688 = vset.pattern.permute.xlu0 0
    %3689 = vperm.xlu0 %3688, %v246
    %v3690 = vpop.permute.xlu0 %3689
    %3692 = vset.pattern.permute.xlu0 0
    %3693 = vperm.xlu0 %3692, %v247
    %v3694 = vpop.permute.xlu0 %3693
    %3696 = vset.pattern.permute.xlu0 0
    %3697 = vperm.xlu0 %3696, %v248
    %v3698 = vpop.permute.xlu0 %3697
    %3700 = vset.pattern.permute.xlu0 0
    %3701 = vperm.xlu0 %3700, %v249
    %v3702 = vpop.permute.xlu0 %3701
    %3704 = vset.pattern.permute.xlu0 0
    %3705 = vperm.xlu0 %3704, %v250
    %v3706 = vpop.permute.xlu0 %3705
    %3708 = vset.pattern.permute.xlu0 0
    %3709 = vperm.xlu0 %3708, %v251
    %v3710 = vpop.permute.xlu0 %3709
    %3712 = vset.pattern.permute.xlu0 0
    %3713 = vperm.xlu0 %3712, %v252
    %v3714 = vpop.permute.xlu0 %3713
    %v3716 = vmul.f32 %v3676, %v3686
    %v3717 = vmul.f32 %v3683, %v3690
    %v3718 = vmul.f32 %v3682, %v3694
    %v3719 = vmul.f32 %v3681, %v3698
    %v3720 = vmul.f32 %v3680, %v3702
    %v3721 = vmul.f32 %v3679, %v3706
    %v3722 = vmul.f32 %v3678, %v3710
    %v3723 = vmul.f32 %v3677, %v3714
    %v3724 = vlaneseq
    %v3725 = vshrl.u32 %v3724, 7
    %v3726 = vsub.s32 0, %v3725
    %v3727 = vrot.slane %v3639, %v3726
    %v3728 = vmul.f32 %v3716, %v3727
    %v3729 = vmul.f32 %v3717, %v3727
    %v3730 = vmul.f32 %v3718, %v3727
    %v3731 = vmul.f32 %v3719, %v3727
    %v3732 = vmul.f32 %v3720, %v3727
    %v3733 = vmul.f32 %v3721, %v3727
    %v3734 = vmul.f32 %v3722, %v3727
    %v3735 = vmul.f32 %v3723, %v3727
    %v3736 = vadd.f32 %v3660, %v3728
    %v3737 = vadd.f32 %v3661, %v3729
    %v3738 = vadd.f32 %v3662, %v3730
    %v3739 = vadd.f32 %v3663, %v3731
    %v3740 = vadd.f32 %v3664, %v3732
    %v3741 = vadd.f32 %v3665, %v3733
    %v3742 = vadd.f32 %v3666, %v3734
    %v3743 = vadd.f32 %v3667, %v3735
    %3744 = vset.pattern.permute.xlu0 1
    %3745 = vperm.xlu0 %3744, %v245
    %v3746 = vpop.permute.xlu0 %3745
    %3748 = vset.pattern.permute.xlu0 1
    %3749 = vperm.xlu0 %3748, %v246
    %v3750 = vpop.permute.xlu0 %3749
    %3752 = vset.pattern.permute.xlu0 1
    %3753 = vperm.xlu0 %3752, %v247
    %v3754 = vpop.permute.xlu0 %3753
    %3756 = vset.pattern.permute.xlu0 1
    %3757 = vperm.xlu0 %3756, %v248
    %v3758 = vpop.permute.xlu0 %3757
    %3760 = vset.pattern.permute.xlu0 1
    %3761 = vperm.xlu0 %3760, %v249
    %v3762 = vpop.permute.xlu0 %3761
    %3764 = vset.pattern.permute.xlu0 1
    %3765 = vperm.xlu0 %3764, %v250
    %v3766 = vpop.permute.xlu0 %3765
    %3768 = vset.pattern.permute.xlu0 1
    %3769 = vperm.xlu0 %3768, %v251
    %v3770 = vpop.permute.xlu0 %3769
    %3772 = vset.pattern.permute.xlu0 1
    %3773 = vperm.xlu0 %3772, %v252
    %v3774 = vpop.permute.xlu0 %3773
    %v3776 = vmul.f32 %v3638, %v3746
    %v3777 = vmul.f32 %v3631, %v3750
    %v3778 = vmul.f32 %v3632, %v3754
    %v3779 = vmul.f32 %v3633, %v3758
    %v3780 = vmul.f32 %v3634, %v3762
    %v3781 = vmul.f32 %v3635, %v3766
    %v3782 = vmul.f32 %v3636, %v3770
    %v3783 = vmul.f32 %v3637, %v3774
    %v3784 = vlaneseq
    %v3785 = vshrl.u32 %v3784, 7
    %v3786 = vsub.s32 1, %v3785
    %v3787 = vrot.slane %v3639, %v3786
    %v3788 = vmul.f32 %v3776, %v3787
    %v3789 = vmul.f32 %v3777, %v3787
    %v3790 = vmul.f32 %v3778, %v3787
    %v3791 = vmul.f32 %v3779, %v3787
    %v3792 = vmul.f32 %v3780, %v3787
    %v3793 = vmul.f32 %v3781, %v3787
    %v3794 = vmul.f32 %v3782, %v3787
    %v3795 = vmul.f32 %v3783, %v3787
    %v3796 = vadd.f32 %v3736, %v3788
    %v3797 = vadd.f32 %v3737, %v3789
    %v3798 = vadd.f32 %v3738, %v3790
    %v3799 = vadd.f32 %v3739, %v3791
    %v3800 = vadd.f32 %v3740, %v3792
    %v3801 = vadd.f32 %v3741, %v3793
    %v3802 = vadd.f32 %v3742, %v3794
    %v3803 = vadd.f32 %v3743, %v3795
    %v3804 = vrot.slane %v3631, 1
    %v3805 = vrot.slane %v3632, 1
    %v3806 = vrot.slane %v3633, 1
    %v3807 = vrot.slane %v3634, 1
    %v3808 = vrot.slane %v3635, 1
    %v3809 = vrot.slane %v3636, 1
    %v3810 = vrot.slane %v3637, 1
    %v3811 = vrot.slane %v3638, 1
    %vm3812 = vcmp.lt.s32.totalorder %v908, 7
    %v3813 = vsel %vm3812, %v3810, %v3811
    %v3814 = vsel %vm3812, %v3809, %v3810
    %v3815 = vsel %vm3812, %v3808, %v3809
    %v3816 = vsel %vm3812, %v3807, %v3808
    %v3817 = vsel %vm3812, %v3806, %v3807
    %v3818 = vsel %vm3812, %v3805, %v3806
    %v3819 = vsel %vm3812, %v3804, %v3805
    %v3820 = vsel %vm3812, %v3811, %v3804
    %3821 = vset.pattern.permute.xlu0 2
    %3822 = vperm.xlu0 %3821, %v245
    %v3823 = vpop.permute.xlu0 %3822
    %3825 = vset.pattern.permute.xlu0 2
    %3826 = vperm.xlu0 %3825, %v246
    %v3827 = vpop.permute.xlu0 %3826
    %3829 = vset.pattern.permute.xlu0 2
    %3830 = vperm.xlu0 %3829, %v247
    %v3831 = vpop.permute.xlu0 %3830
    %3833 = vset.pattern.permute.xlu0 2
    %3834 = vperm.xlu0 %3833, %v248
    %v3835 = vpop.permute.xlu0 %3834
    %3837 = vset.pattern.permute.xlu0 2
    %3838 = vperm.xlu0 %3837, %v249
    %v3839 = vpop.permute.xlu0 %3838
    %3841 = vset.pattern.permute.xlu0 2
    %3842 = vperm.xlu0 %3841, %v250
    %v3843 = vpop.permute.xlu0 %3842
    %3845 = vset.pattern.permute.xlu0 2
    %3846 = vperm.xlu0 %3845, %v251
    %v3847 = vpop.permute.xlu0 %3846
    %3849 = vset.pattern.permute.xlu0 2
    %3850 = vperm.xlu0 %3849, %v252
    %v3851 = vpop.permute.xlu0 %3850
    %v3853 = vmul.f32 %v3820, %v3823
    %v3854 = vmul.f32 %v3819, %v3827
    %v3855 = vmul.f32 %v3818, %v3831
    %v3856 = vmul.f32 %v3817, %v3835
    %v3857 = vmul.f32 %v3816, %v3839
    %v3858 = vmul.f32 %v3815, %v3843
    %v3859 = vmul.f32 %v3814, %v3847
    %v3860 = vmul.f32 %v3813, %v3851
    %v3861 = vlaneseq
    %v3862 = vshrl.u32 %v3861, 7
    %v3863 = vsub.s32 2, %v3862
    %v3864 = vrot.slane %v3639, %v3863
    %v3865 = vmul.f32 %v3853, %v3864
    %v3866 = vmul.f32 %v3854, %v3864
    %v3867 = vmul.f32 %v3855, %v3864
    %v3868 = vmul.f32 %v3856, %v3864
    %v3869 = vmul.f32 %v3857, %v3864
    %v3870 = vmul.f32 %v3858, %v3864
    %v3871 = vmul.f32 %v3859, %v3864
    %v3872 = vmul.f32 %v3860, %v3864
    %v3873 = vadd.f32 %v3796, %v3865
    %v3874 = vadd.f32 %v3797, %v3866
    %v3875 = vadd.f32 %v3798, %v3867
    %v3876 = vadd.f32 %v3799, %v3868
    %v3877 = vadd.f32 %v3800, %v3869
    %v3878 = vadd.f32 %v3801, %v3870
    %v3879 = vadd.f32 %v3802, %v3871
    %v3880 = vadd.f32 %v3803, %v3872
    %3881 = vset.pattern.permute.xlu0 3
    %3882 = vperm.xlu0 %3881, %v245
    %v3883 = vpop.permute.xlu0 %3882
    %3885 = vset.pattern.permute.xlu0 3
    %3886 = vperm.xlu0 %3885, %v246
    %v3887 = vpop.permute.xlu0 %3886
    %3889 = vset.pattern.permute.xlu0 3
    %3890 = vperm.xlu0 %3889, %v247
    %v3891 = vpop.permute.xlu0 %3890
    %3893 = vset.pattern.permute.xlu0 3
    %3894 = vperm.xlu0 %3893, %v248
    %v3895 = vpop.permute.xlu0 %3894
    %3897 = vset.pattern.permute.xlu0 3
    %3898 = vperm.xlu0 %3897, %v249
    %v3899 = vpop.permute.xlu0 %3898
    %3901 = vset.pattern.permute.xlu0 3
    %3902 = vperm.xlu0 %3901, %v250
    %v3903 = vpop.permute.xlu0 %3902
    %3905 = vset.pattern.permute.xlu0 3
    %3906 = vperm.xlu0 %3905, %v251
    %v3907 = vpop.permute.xlu0 %3906
    %3909 = vset.pattern.permute.xlu0 3
    %3910 = vperm.xlu0 %3909, %v252
    %v3911 = vpop.permute.xlu0 %3910
    %v3913 = vmul.f32 %v3683, %v3883
    %v3914 = vmul.f32 %v3682, %v3887
    %v3915 = vmul.f32 %v3681, %v3891
    %v3916 = vmul.f32 %v3680, %v3895
    %v3917 = vmul.f32 %v3679, %v3899
    %v3918 = vmul.f32 %v3678, %v3903
    %v3919 = vmul.f32 %v3677, %v3907
    %v3920 = vmul.f32 %v3676, %v3911
    %v3921 = vlaneseq
    %v3922 = vshrl.u32 %v3921, 7
    %v3923 = vsub.s32 3, %v3922
    %v3924 = vrot.slane %v3639, %v3923
    %v3925 = vmul.f32 %v3913, %v3924
    %v3926 = vmul.f32 %v3914, %v3924
    %v3927 = vmul.f32 %v3915, %v3924
    %v3928 = vmul.f32 %v3916, %v3924
    %v3929 = vmul.f32 %v3917, %v3924
    %v3930 = vmul.f32 %v3918, %v3924
    %v3931 = vmul.f32 %v3919, %v3924
    %v3932 = vmul.f32 %v3920, %v3924
    %v3933 = vadd.f32 %v3873, %v3925
    %v3934 = vadd.f32 %v3874, %v3926
    %v3935 = vadd.f32 %v3875, %v3927
    %v3936 = vadd.f32 %v3876, %v3928
    %v3937 = vadd.f32 %v3877, %v3929
    %v3938 = vadd.f32 %v3878, %v3930
    %v3939 = vadd.f32 %v3879, %v3931
    %v3940 = vadd.f32 %v3880, %v3932
    %3941 = vset.pattern.permute.xlu0 5
    %3942 = vperm.xlu0 %3941, %v245
    %v3943 = vpop.permute.xlu0 %3942
    %3945 = vset.pattern.permute.xlu0 5
    %3946 = vperm.xlu0 %3945, %v246
    %v3947 = vpop.permute.xlu0 %3946
    %3949 = vset.pattern.permute.xlu0 5
    %3950 = vperm.xlu0 %3949, %v247
    %v3951 = vpop.permute.xlu0 %3950
    %3953 = vset.pattern.permute.xlu0 5
    %3954 = vperm.xlu0 %3953, %v248
    %v3955 = vpop.permute.xlu0 %3954
    %3957 = vset.pattern.permute.xlu0 5
    %3958 = vperm.xlu0 %3957, %v249
    %v3959 = vpop.permute.xlu0 %3958
    %3961 = vset.pattern.permute.xlu0 5
    %3962 = vperm.xlu0 %3961, %v250
    %v3963 = vpop.permute.xlu0 %3962
    %3965 = vset.pattern.permute.xlu0 5
    %3966 = vperm.xlu0 %3965, %v251
    %v3967 = vpop.permute.xlu0 %3966
    %3969 = vset.pattern.permute.xlu0 5
    %3970 = vperm.xlu0 %3969, %v252
    %v3971 = vpop.permute.xlu0 %3970
    %v3973 = vmul.f32 %v3819, %v3943
    %v3974 = vmul.f32 %v3818, %v3947
    %v3975 = vmul.f32 %v3817, %v3951
    %v3976 = vmul.f32 %v3816, %v3955
    %v3977 = vmul.f32 %v3815, %v3959
    %v3978 = vmul.f32 %v3814, %v3963
    %v3979 = vmul.f32 %v3813, %v3967
    %v3980 = vmul.f32 %v3820, %v3971
    %v3981 = vlaneseq
    %v3982 = vshrl.u32 %v3981, 7
    %v3983 = vsub.s32 5, %v3982
    %v3984 = vrot.slane %v3639, %v3983
    %v3985 = vmul.f32 %v3973, %v3984
    %v3986 = vmul.f32 %v3974, %v3984
    %v3987 = vmul.f32 %v3975, %v3984
    %v3988 = vmul.f32 %v3976, %v3984
    %v3989 = vmul.f32 %v3977, %v3984
    %v3990 = vmul.f32 %v3978, %v3984
    %v3991 = vmul.f32 %v3979, %v3984
    %v3992 = vmul.f32 %v3980, %v3984
    %v3993 = vadd.f32 %v3933, %v3985
    %v3994 = vadd.f32 %v3934, %v3986
    %v3995 = vadd.f32 %v3935, %v3987
    %v3996 = vadd.f32 %v3936, %v3988
    %v3997 = vadd.f32 %v3937, %v3989
    %v3998 = vadd.f32 %v3938, %v3990
    %v3999 = vadd.f32 %v3939, %v3991
    %v4000 = vadd.f32 %v3940, %v3992
    %4001 = vset.pattern.permute.xlu0 6
    %4002 = vperm.xlu0 %4001, %v245
    %v4003 = vpop.permute.xlu0 %4002
    %4005 = vset.pattern.permute.xlu0 6
    %4006 = vperm.xlu0 %4005, %v246
    %v4007 = vpop.permute.xlu0 %4006
    %4009 = vset.pattern.permute.xlu0 6
    %4010 = vperm.xlu0 %4009, %v247
    %v4011 = vpop.permute.xlu0 %4010
    %4013 = vset.pattern.permute.xlu0 6
    %4014 = vperm.xlu0 %4013, %v248
    %v4015 = vpop.permute.xlu0 %4014
    %4017 = vset.pattern.permute.xlu0 6
    %4018 = vperm.xlu0 %4017, %v249
    %v4019 = vpop.permute.xlu0 %4018
    %4021 = vset.pattern.permute.xlu0 6
    %4022 = vperm.xlu0 %4021, %v250
    %v4023 = vpop.permute.xlu0 %4022
    %4025 = vset.pattern.permute.xlu0 6
    %4026 = vperm.xlu0 %4025, %v251
    %v4027 = vpop.permute.xlu0 %4026
    %4029 = vset.pattern.permute.xlu0 6
    %4030 = vperm.xlu0 %4029, %v252
    %v4031 = vpop.permute.xlu0 %4030
    %v4033 = vmul.f32 %v3682, %v4003
    %v4034 = vmul.f32 %v3681, %v4007
    %v4035 = vmul.f32 %v3680, %v4011
    %v4036 = vmul.f32 %v3679, %v4015
    %v4037 = vmul.f32 %v3678, %v4019
    %v4038 = vmul.f32 %v3677, %v4023
    %v4039 = vmul.f32 %v3676, %v4027
    %v4040 = vmul.f32 %v3683, %v4031
    %v4041 = vlaneseq
    %v4042 = vshrl.u32 %v4041, 7
    %v4043 = vsub.s32 6, %v4042
    %v4044 = vrot.slane %v3639, %v4043
    %v4045 = vmul.f32 %v4033, %v4044
    %v4046 = vmul.f32 %v4034, %v4044
    %v4047 = vmul.f32 %v4035, %v4044
    %v4048 = vmul.f32 %v4036, %v4044
    %v4049 = vmul.f32 %v4037, %v4044
    %v4050 = vmul.f32 %v4038, %v4044
    %v4051 = vmul.f32 %v4039, %v4044
    %v4052 = vmul.f32 %v4040, %v4044
    %v4053 = vadd.f32 %v3993, %v4045
    %v4054 = vadd.f32 %v3994, %v4046
    %v4055 = vadd.f32 %v3995, %v4047
    %v4056 = vadd.f32 %v3996, %v4048
    %v4057 = vadd.f32 %v3997, %v4049
    %v4058 = vadd.f32 %v3998, %v4050
    %v4059 = vadd.f32 %v3999, %v4051
    %v4060 = vadd.f32 %v4000, %v4052
    %4061 = vset.pattern.permute.xlu0 7
    %4062 = vperm.xlu0 %4061, %v245
    %v4063 = vpop.permute.xlu0 %4062
    %4065 = vset.pattern.permute.xlu0 7
    %4066 = vperm.xlu0 %4065, %v246
    %v4067 = vpop.permute.xlu0 %4066
    %4069 = vset.pattern.permute.xlu0 7
    %4070 = vperm.xlu0 %4069, %v247
    %v4071 = vpop.permute.xlu0 %4070
    %4073 = vset.pattern.permute.xlu0 7
    %4074 = vperm.xlu0 %4073, %v248
    %v4075 = vpop.permute.xlu0 %4074
    %4077 = vset.pattern.permute.xlu0 7
    %4078 = vperm.xlu0 %4077, %v249
    %v4079 = vpop.permute.xlu0 %4078
    %4081 = vset.pattern.permute.xlu0 7
    %4082 = vperm.xlu0 %4081, %v250
    %v4083 = vpop.permute.xlu0 %4082
    %4085 = vset.pattern.permute.xlu0 7
    %4086 = vperm.xlu0 %4085, %v251
    %v4087 = vpop.permute.xlu0 %4086
    %4089 = vset.pattern.permute.xlu0 7
    %4090 = vperm.xlu0 %4089, %v252
    %v4091 = vpop.permute.xlu0 %4090
    %v4093 = vmul.f32 %v3632, %v4063
    %v4094 = vmul.f32 %v3633, %v4067
    %v4095 = vmul.f32 %v3634, %v4071
    %v4096 = vmul.f32 %v3635, %v4075
    %v4097 = vmul.f32 %v3636, %v4079
    %v4098 = vmul.f32 %v3637, %v4083
    %v4099 = vmul.f32 %v3638, %v4087
    %v4100 = vmul.f32 %v3631, %v4091
    %v4101 = vlaneseq
    %v4102 = vshrl.u32 %v4101, 7
    %v4103 = vsub.s32 7, %v4102
    %v4104 = vrot.slane %v3639, %v4103
    %v4105 = vmul.f32 %v4093, %v4104
    %v4106 = vmul.f32 %v4094, %v4104
    %v4107 = vmul.f32 %v4095, %v4104
    %v4108 = vmul.f32 %v4096, %v4104
    %v4109 = vmul.f32 %v4097, %v4104
    %v4110 = vmul.f32 %v4098, %v4104
    %v4111 = vmul.f32 %v4099, %v4104
    %v4112 = vmul.f32 %v4100, %v4104
    %v4113 = vadd.f32 %v4053, %v4105
    %v4114 = vadd.f32 %v4054, %v4106
    %v4115 = vadd.f32 %v4055, %v4107
    %v4116 = vadd.f32 %v4056, %v4108
    %v4117 = vadd.f32 %v4057, %v4109
    %v4118 = vadd.f32 %v4058, %v4110
    %v4119 = vadd.f32 %v4059, %v4111
    %v4120 = vadd.f32 %v4060, %v4112
    %4121 = vset.pattern.permute.xlu0 8
    %4122 = vperm.xlu0 %4121, %v245
    %v4123 = vpop.permute.xlu0 %4122
    %4125 = vset.pattern.permute.xlu0 8
    %4126 = vperm.xlu0 %4125, %v246
    %v4127 = vpop.permute.xlu0 %4126
    %4129 = vset.pattern.permute.xlu0 8
    %4130 = vperm.xlu0 %4129, %v247
    %v4131 = vpop.permute.xlu0 %4130
    %4133 = vset.pattern.permute.xlu0 8
    %4134 = vperm.xlu0 %4133, %v248
    %v4135 = vpop.permute.xlu0 %4134
    %4137 = vset.pattern.permute.xlu0 8
    %4138 = vperm.xlu0 %4137, %v249
    %v4139 = vpop.permute.xlu0 %4138
    %4141 = vset.pattern.permute.xlu0 8
    %4142 = vperm.xlu0 %4141, %v250
    %v4143 = vpop.permute.xlu0 %4142
    %4145 = vset.pattern.permute.xlu0 8
    %4146 = vperm.xlu0 %4145, %v251
    %v4147 = vpop.permute.xlu0 %4146
    %4149 = vset.pattern.permute.xlu0 8
    %4150 = vperm.xlu0 %4149, %v252
    %v4151 = vpop.permute.xlu0 %4150
    %v4153 = vmul.f32 %v3818, %v4123
    %v4154 = vmul.f32 %v3817, %v4127
    %v4155 = vmul.f32 %v3816, %v4131
    %v4156 = vmul.f32 %v3815, %v4135
    %v4157 = vmul.f32 %v3814, %v4139
    %v4158 = vmul.f32 %v3813, %v4143
    %v4159 = vmul.f32 %v3820, %v4147
    %v4160 = vmul.f32 %v3819, %v4151
    %v4161 = vlaneseq
    %v4162 = vshrl.u32 %v4161, 7
    %v4163 = vsub.s32 0, %v4162
    %v4164 = vrot.slane %v3640, %v4163
    %v4165 = vmul.f32 %v4153, %v4164
    %v4166 = vmul.f32 %v4154, %v4164
    %v4167 = vmul.f32 %v4155, %v4164
    %v4168 = vmul.f32 %v4156, %v4164
    %v4169 = vmul.f32 %v4157, %v4164
    %v4170 = vmul.f32 %v4158, %v4164
    %v4171 = vmul.f32 %v4159, %v4164
    %v4172 = vmul.f32 %v4160, %v4164
    %v4173 = vadd.f32 %v4113, %v4165
    %v4174 = vadd.f32 %v4114, %v4166
    %v4175 = vadd.f32 %v4115, %v4167
    %v4176 = vadd.f32 %v4116, %v4168
    %v4177 = vadd.f32 %v4117, %v4169
    %v4178 = vadd.f32 %v4118, %v4170
    %v4179 = vadd.f32 %v4119, %v4171
    %v4180 = vadd.f32 %v4120, %v4172
    %v4181 = vmul.f32 %v4173, 0.5
    %v4182 = vmul.f32 %v4174, 0.5
    %v4183 = vmul.f32 %v4175, 0.5
    %v4184 = vmul.f32 %v4176, 0.5
    %v4185 = vmul.f32 %v4177, 0.5
    %v4186 = vmul.f32 %v4178, 0.5
    %v4187 = vmul.f32 %v4179, 0.5
    %v4188 = vmul.f32 %v4180, 0.5
    %v4189 = vmul.f32 %v4173, 0.70710677
    %v4190 = vmul.f32 %v4174, 0.70710677
    %v4191 = vmul.f32 %v4175, 0.70710677
    %v4192 = vmul.f32 %v4176, 0.70710677
    %v4193 = vmul.f32 %v4177, 0.70710677
    %v4194 = vmul.f32 %v4178, 0.70710677
    %v4195 = vmul.f32 %v4179, 0.70710677
    %v4196 = vmul.f32 %v4180, 0.70710677
    %v4197 = vand.u32 2147483647, %v4189
    %v4198 = vand.u32 2147483647, %v4190
    %v4199 = vand.u32 2147483647, %v4191
    %v4200 = vand.u32 2147483647, %v4192
    %v4201 = vand.u32 2147483647, %v4193
    %v4202 = vand.u32 2147483647, %v4194
    %v4203 = vand.u32 2147483647, %v4195
    %v4204 = vand.u32 2147483647, %v4196
    %v4205 = vmul.f32 %v4197, 0.3275911
    %v4206 = vmul.f32 %v4198, 0.3275911
    %v4207 = vmul.f32 %v4199, 0.3275911
    %v4208 = vmul.f32 %v4200, 0.3275911
    %v4209 = vmul.f32 %v4201, 0.3275911
    %v4210 = vmul.f32 %v4202, 0.3275911
    %v4211 = vmul.f32 %v4203, 0.3275911
    %v4212 = vmul.f32 %v4204, 0.3275911
    %v4213 = vadd.f32 %v4205, 1.0
    %v4214 = vadd.f32 %v4206, 1.0
    %v4215 = vadd.f32 %v4207, 1.0
    %v4216 = vadd.f32 %v4208, 1.0
    %v4217 = vadd.f32 %v4209, 1.0
    %v4218 = vadd.f32 %v4210, 1.0
    %v4219 = vadd.f32 %v4211, 1.0
    %v4220 = vadd.f32 %v4212, 1.0
    %v4221 = vrcp.pop %v4213
    %v4222 = vrcp.pop %v4214
    %v4223 = vrcp.pop %v4215
    %v4224 = vrcp.pop %v4216
    %v4225 = vrcp.pop %v4217
    %v4226 = vrcp.pop %v4218
    %v4227 = vrcp.pop %v4219
    %v4228 = vrcp.pop %v4220
    %v4229 = vmul.f32 %v4221, 1.0614054
    %v4230 = vmul.f32 %v4222, 1.0614054
    %v4231 = vmul.f32 %v4223, 1.0614054
    %v4232 = vmul.f32 %v4224, 1.0614054
    %v4233 = vmul.f32 %v4225, 1.0614054
    %v4234 = vmul.f32 %v4226, 1.0614054
    %v4235 = vmul.f32 %v4227, 1.0614054
    %v4236 = vmul.f32 %v4228, 1.0614054
    %v4237 = vadd.f32 %v4229, -1.4531521
    %v4238 = vadd.f32 %v4230, -1.4531521
    %v4239 = vadd.f32 %v4231, -1.4531521
    %v4240 = vadd.f32 %v4232, -1.4531521
    %v4241 = vadd.f32 %v4233, -1.4531521
    %v4242 = vadd.f32 %v4234, -1.4531521
    %v4243 = vadd.f32 %v4235, -1.4531521
    %v4244 = vadd.f32 %v4236, -1.4531521
    %v4245 = vmul.f32 %v4237, %v4221
    %v4246 = vmul.f32 %v4238, %v4222
    %v4247 = vmul.f32 %v4239, %v4223
    %v4248 = vmul.f32 %v4240, %v4224
    %v4249 = vmul.f32 %v4241, %v4225
    %v4250 = vmul.f32 %v4242, %v4226
    %v4251 = vmul.f32 %v4243, %v4227
    %v4252 = vmul.f32 %v4244, %v4228
    %v4253 = vadd.f32 %v4245, 1.4214138
    %v4254 = vadd.f32 %v4246, 1.4214138
    %v4255 = vadd.f32 %v4247, 1.4214138
    %v4256 = vadd.f32 %v4248, 1.4214138
    %v4257 = vadd.f32 %v4249, 1.4214138
    %v4258 = vadd.f32 %v4250, 1.4214138
    %v4259 = vadd.f32 %v4251, 1.4214138
    %v4260 = vadd.f32 %v4252, 1.4214138
    %v4261 = vmul.f32 %v4253, %v4221
    %v4262 = vmul.f32 %v4254, %v4222
    %v4263 = vmul.f32 %v4255, %v4223
    %v4264 = vmul.f32 %v4256, %v4224
    %v4265 = vmul.f32 %v4257, %v4225
    %v4266 = vmul.f32 %v4258, %v4226
    %v4267 = vmul.f32 %v4259, %v4227
    %v4268 = vmul.f32 %v4260, %v4228
    %v4269 = vadd.f32 %v4261, -0.28449672
    %v4270 = vadd.f32 %v4262, -0.28449672
    %v4271 = vadd.f32 %v4263, -0.28449672
    %v4272 = vadd.f32 %v4264, -0.28449672
    %v4273 = vadd.f32 %v4265, -0.28449672
    %v4274 = vadd.f32 %v4266, -0.28449672
    %v4275 = vadd.f32 %v4267, -0.28449672
    %v4276 = vadd.f32 %v4268, -0.28449672
    %v4277 = vmul.f32 %v4269, %v4221
    %v4278 = vmul.f32 %v4270, %v4222
    %v4279 = vmul.f32 %v4271, %v4223
    %v4280 = vmul.f32 %v4272, %v4224
    %v4281 = vmul.f32 %v4273, %v4225
    %v4282 = vmul.f32 %v4274, %v4226
    %v4283 = vmul.f32 %v4275, %v4227
    %v4284 = vmul.f32 %v4276, %v4228
    %v4285 = vadd.f32 %v4277, 0.2548296
    %v4286 = vadd.f32 %v4278, 0.2548296
    %v4287 = vadd.f32 %v4279, 0.2548296
    %v4288 = vadd.f32 %v4280, 0.2548296
    %v4289 = vadd.f32 %v4281, 0.2548296
    %v4290 = vadd.f32 %v4282, 0.2548296
    %v4291 = vadd.f32 %v4283, 0.2548296
    %v4292 = vadd.f32 %v4284, 0.2548296
    %v4293 = vmul.f32 %v4285, %v4221
    %v4294 = vmul.f32 %v4286, %v4222
    %v4295 = vmul.f32 %v4287, %v4223
    %v4296 = vmul.f32 %v4288, %v4224
    %v4297 = vmul.f32 %v4289, %v4225
    %v4298 = vmul.f32 %v4290, %v4226
    %v4299 = vmul.f32 %v4291, %v4227
    %v4300 = vmul.f32 %v4292, %v4228
    %v4301 = vsub.f32 0.0, %v4197
    %v4302 = vsub.f32 0.0, %v4198
    %v4303 = vsub.f32 0.0, %v4199
    %v4304 = vsub.f32 0.0, %v4200
    %v4305 = vsub.f32 0.0, %v4201
    %v4306 = vsub.f32 0.0, %v4202
    %v4307 = vsub.f32 0.0, %v4203
    %v4308 = vsub.f32 0.0, %v4204
    %v4309 = vmul.f32 %v4301, %v4197
    %v4310 = vmul.f32 %v4302, %v4198
    %v4311 = vmul.f32 %v4303, %v4199
    %v4312 = vmul.f32 %v4304, %v4200
    %v4313 = vmul.f32 %v4305, %v4201
    %v4314 = vmul.f32 %v4306, %v4202
    %v4315 = vmul.f32 %v4307, %v4203
    %v4316 = vmul.f32 %v4308, %v4204
    %v4317 = vmul.f32 %v4309, 1.442695
    %v4318 = vpow.pop %v4317
    %v4319 = vmul.f32 %v4310, 1.442695
    %v4320 = vpow.pop %v4319
    %v4321 = vmul.f32 %v4311, 1.442695
    %v4322 = vpow.pop %v4321
    %v4323 = vmul.f32 %v4312, 1.442695
    %v4324 = vpow.pop %v4323
    %v4325 = vmul.f32 %v4313, 1.442695
    %v4326 = vpow.pop %v4325
    %v4327 = vmul.f32 %v4314, 1.442695
    %v4328 = vpow.pop %v4327
    %v4329 = vmul.f32 %v4315, 1.442695
    %v4330 = vpow.pop %v4329
    %v4331 = vmul.f32 %v4316, 1.442695
    %v4332 = vpow.pop %v4331
    %v4333 = vmul.f32 %v4293, %v4318
    %v4334 = vmul.f32 %v4294, %v4320
    %v4335 = vmul.f32 %v4295, %v4322
    %v4336 = vmul.f32 %v4296, %v4324
    %v4337 = vmul.f32 %v4297, %v4326
    %v4338 = vmul.f32 %v4298, %v4328
    %v4339 = vmul.f32 %v4299, %v4330
    %v4340 = vmul.f32 %v4300, %v4332
    %v4341 = vsub.f32 1.0, %v4333
    %v4342 = vsub.f32 1.0, %v4334
    %v4343 = vsub.f32 1.0, %v4335
    %v4344 = vsub.f32 1.0, %v4336
    %v4345 = vsub.f32 1.0, %v4337
    %v4346 = vsub.f32 1.0, %v4338
    %v4347 = vsub.f32 1.0, %v4339
    %v4348 = vsub.f32 1.0, %v4340
    %vm4349 = vcmp.ge.f32.partialorder %v4189, 0.0
    %vm4350 = vcmp.ge.f32.partialorder %v4190, 0.0
    %vm4351 = vcmp.ge.f32.partialorder %v4191, 0.0
    %vm4352 = vcmp.ge.f32.partialorder %v4192, 0.0
    %vm4353 = vcmp.ge.f32.partialorder %v4193, 0.0
    %vm4354 = vcmp.ge.f32.partialorder %v4194, 0.0
    %vm4355 = vcmp.ge.f32.partialorder %v4195, 0.0
    %vm4356 = vcmp.ge.f32.partialorder %v4196, 0.0
    %v4357 = vsub.f32 0.0, %v4341
    %v4358 = vsub.f32 0.0, %v4342
    %v4359 = vsub.f32 0.0, %v4343
    %v4360 = vsub.f32 0.0, %v4344
    %v4361 = vsub.f32 0.0, %v4345
    %v4362 = vsub.f32 0.0, %v4346
    %v4363 = vsub.f32 0.0, %v4347
    %v4364 = vsub.f32 0.0, %v4348
    %v4365 = vsel %vm4349, %v4341, %v4357
    %v4366 = vsel %vm4350, %v4342, %v4358
    %v4367 = vsel %vm4351, %v4343, %v4359
    %v4368 = vsel %vm4352, %v4344, %v4360
    %v4369 = vsel %vm4353, %v4345, %v4361
    %v4370 = vsel %vm4354, %v4346, %v4362
    %v4371 = vsel %vm4355, %v4347, %v4363
    %v4372 = vsel %vm4356, %v4348, %v4364
    %v4373 = vadd.f32 %v4365, 1.0
    %v4374 = vadd.f32 %v4366, 1.0
    %v4375 = vadd.f32 %v4367, 1.0
    %v4376 = vadd.f32 %v4368, 1.0
    %v4377 = vadd.f32 %v4369, 1.0
    %v4378 = vadd.f32 %v4370, 1.0
    %v4379 = vadd.f32 %v4371, 1.0
    %v4380 = vadd.f32 %v4372, 1.0
    %v4381 = vmul.f32 %v4181, %v4373
    %v4382 = vmul.f32 %v4182, %v4374
    %v4383 = vmul.f32 %v4183, %v4375
    %v4384 = vmul.f32 %v4184, %v4376
    %v4385 = vmul.f32 %v4185, %v4377
    %v4386 = vmul.f32 %v4186, %v4378
    %v4387 = vmul.f32 %v4187, %v4379
    %v4388 = vmul.f32 %v4188, %v4380
    %v4389 = vpack.c.bf16 %v4382, %v4381
    %v4390 = vpack.c.bf16 %v4384, %v4383
    %v4391 = vpack.c.bf16 %v4386, %v4385
    %v4392 = vpack.c.bf16 %v4388, %v4387
    %v4393 = vld [vmem:[%s15] sm:$0xf]
    %v4394 = vld [vmem:[%s15 + $0x4] sm:$0xf]
    %v4395 = vld [vmem:[%s15 + $0x8] sm:$0xf]
    %v4396 = vld [vmem:[%s15 + $0xc] sm:$0xf]
    %v4397 = vld [vmem:[%s15 + $0x10] sm:$0xf]
    %v4398 = vld [vmem:[%s15 + $0x14] sm:$0xf]
    %v4399 = vld [vmem:[%s15 + $0x18] sm:$0xf]
    %v4400 = vld [vmem:[%s15 + $0x1c] sm:$0xf]
    %v4401 = vld [vmem:[#allocation24] sm:$0x1]
    %v4403 = vlaneseq
    %v4404 = vshrl.u32 %v4403, 7
    %v4405 = vsub.s32 0, %v4404
    %v4406 = vrot.slane %v4401, %v4405
    %v4416 = vunpack.c.l.b16 %v4393
    %v4417 = vunpack.c.l.b16 %v4394
    %v4418 = vunpack.c.l.b16 %v4395
    %v4419 = vunpack.c.l.b16 %v4396
    %v4420 = vunpack.c.l.b16 %v4397
    %v4421 = vunpack.c.l.b16 %v4398
    %v4422 = vunpack.c.l.b16 %v4399
    %v4423 = vunpack.c.l.b16 %v4400
    %v4424 = vpack.c.b16 %v4417, %v4416
    %v4425 = vpack.c.b16 %v4419, %v4418
    %v4426 = vpack.c.b16 %v4421, %v4420
    %v4427 = vpack.c.b16 %v4423, %v4422
    %v4433 = vsel %vm269, %v4389, 0
    %v4436 = vsel %vm269, %v4390, 0
    %v4439 = vsel %vm269, %v4391, 0
    %v4442 = vsel %vm269, %v4392, 0
    %4444 = vmatprep.subr.bf16.mxu0 0
    %4445 = vmatpush1.bf16.msra.mxu0 %v4424
    %4446 = vmatprep.subr.bf16.mxu0 0
    %4447 = vmatpush1.bf16.msra.mxu0 %v4425
    %4448 = vmatprep.subr.bf16.mxu0 0
    %4449 = vmatpush1.bf16.msra.mxu0 %v4426
    %4450 = vmatprep.subr.bf16.mxu0 0
    %4451 = vmatpush1.bf16.msra.mxu0 %v4427
    %4452 = vmatprep.subr.bf16.mxu0 0
    %4453 = vmatpush1.bf16.msra.mxu0 0
    %4454 = vmatprep.subr.bf16.mxu0 0
    %4455 = vmatpush1.bf16.msra.mxu0 0
    %4456 = vmatprep.subr.bf16.mxu0 0
    %4457 = vmatpush1.bf16.msra.mxu0 0
    %4458 = vmatprep.subr.bf16.mxu0 0
    %4459 = vmatpush1.bf16.msra.mxu0 0
    %4460 = vmatprep.subr.bf16.mxu0 0
    %4461 = vmatpush1.bf16.msra.mxu0 0
    %4462 = vmatprep.subr.bf16.mxu0 0
    %4463 = vmatpush1.bf16.msra.mxu0 0
    %4464 = vmatprep.subr.bf16.mxu0 0
    %4465 = vmatpush1.bf16.msra.mxu0 0
    %4466 = vmatprep.subr.bf16.mxu0 0
    %4467 = vmatpush1.bf16.msra.mxu0 0
    %4468 = vmatprep.subr.bf16.mxu0 0
    %4469 = vmatpush1.bf16.msra.mxu0 0
    %4470 = vmatprep.subr.bf16.mxu0 0
    %4471 = vmatpush1.bf16.msra.mxu0 0
    %4472 = vmatprep.subr.bf16.mxu0 0
    %4473 = vmatpush1.bf16.msra.mxu0 0
    %4474 = vmatprep.subr.bf16.mxu0 0
    %4475 = vmatpush1.bf16.msra.mxu0 0
    %4476 = vmatprep.mubr.bf16.mxu0 0
    %4477 = vmatmul.mubr.bf16.gmra.mrb[0].mxu0 %v4433
    %v4478 = vpop.f32.mrb[0].mxu0
    %v4479 = vadd.f32 %v4406, %v4478
    %v4480 = vpop.f32.mrb[0].mxu0
    %v4481 = vpop.f32.mrb[0].mxu0
    %v4482 = vadd.f32 %v4406, %v4481
    %v4483 = vpop.f32.mrb[0].mxu0
    %4484 = vmatprep.mubr.bf16.mxu0 0
    %4485 = vmatmul.mubr.bf16.gmra.mrb[0].mxu0 %v4436
    %v4486 = vpop.f32.mrb[0].mxu0
    %v4487 = vadd.f32 %v4406, %v4486
    %v4488 = vpop.f32.mrb[0].mxu0
    %v4489 = vpop.f32.mrb[0].mxu0
    %v4490 = vadd.f32 %v4406, %v4489
    %v4491 = vpop.f32.mrb[0].mxu0
    %4492 = vmatprep.mubr.bf16.mxu0 0
    %4493 = vmatmul.mubr.bf16.gmra.mrb[0].mxu0 %v4439
    %v4494 = vpop.f32.mrb[0].mxu0
    %v4495 = vadd.f32 %v4406, %v4494
    %v4496 = vpop.f32.mrb[0].mxu0
    %v4497 = vpop.f32.mrb[0].mxu0
    %v4498 = vadd.f32 %v4406, %v4497
    %v4499 = vpop.f32.mrb[0].mxu0
    %4500 = vmatprep.mubr.bf16.mxu0 0
    %4501 = vmatmul.mubr.bf16.gmra.mrb[0].mxu0 %v4442
    %v4502 = vpop.f32.mrb[0].mxu0
    %v4503 = vadd.f32 %v4406, %v4502
    %v4504 = vpop.f32.mrb[0].mxu0
    %v4505 = vpop.f32.mrb[0].mxu0
    %v4506 = vadd.f32 %v4406, %v4505
    %v4507 = vpop.f32.mrb[0].mxu0
    %4508 = vdwg.mxu0
    %v4509 = vsel %vm269, %v4479, 0.0
    %v4510 = vsel %vm269, %v4482, 0.0
    %v4511 = vadd.f32 %v4509, %v4510
    %v4512 = vsel %vm269, %v4487, 0.0
    %v4513 = vadd.f32 %v4511, %v4512
    %v4514 = vsel %vm269, %v4490, 0.0
    %v4515 = vadd.f32 %v4513, %v4514
    %v4516 = vsel %vm269, %v4495, 0.0
    %v4517 = vadd.f32 %v4515, %v4516
    %v4518 = vsel %vm269, %v4498, 0.0
    %v4519 = vadd.f32 %v4517, %v4518
    %v4520 = vsel %vm269, %v4503, 0.0
    %v4521 = vadd.f32 %v4519, %v4520
    %v4522 = vsel %vm269, %v4506, 0.0
    %v4523 = vadd.f32 %v4521, %v4522
    %v4524 = vrot.slane %v4523, 4
    %v4525 = vadd.f32 %v4523, %v4524
    %v4526 = vrot.slane %v4525, 2
    %v4527 = vadd.f32 %v4525, %v4526
    %v4528 = vrot.slane %v4527, 1
    %v4529 = vadd.f32 %v4527, %v4528
    %v4530 = vmul.f32 %v4529, 0.015625
    %v4531 = vmul.f32 %v4479, %v4479
    %v4532 = vmul.f32 %v4482, %v4482
    %v4533 = vmul.f32 %v4487, %v4487
    %v4534 = vmul.f32 %v4490, %v4490
    %v4535 = vmul.f32 %v4495, %v4495
    %v4536 = vmul.f32 %v4498, %v4498
    %v4537 = vmul.f32 %v4503, %v4503
    %v4538 = vmul.f32 %v4506, %v4506
    %v4539 = vsel %vm269, %v4531, 0.0
    %v4540 = vsel %vm269, %v4532, 0.0
    %v4541 = vadd.f32 %v4539, %v4540
    %v4542 = vsel %vm269, %v4533, 0.0
    %v4543 = vadd.f32 %v4541, %v4542
    %v4544 = vsel %vm269, %v4534, 0.0
    %v4545 = vadd.f32 %v4543, %v4544
    %v4546 = vsel %vm269, %v4535, 0.0
    %v4547 = vadd.f32 %v4545, %v4546
    %v4548 = vsel %vm269, %v4536, 0.0
    %v4549 = vadd.f32 %v4547, %v4548
    %v4550 = vsel %vm269, %v4537, 0.0
    %v4551 = vadd.f32 %v4549, %v4550
    %v4552 = vsel %vm269, %v4538, 0.0
    %v4553 = vadd.f32 %v4551, %v4552
    %v4554 = vrot.slane %v4553, 4
    %v4555 = vadd.f32 %v4553, %v4554
    %v4556 = vrot.slane %v4555, 2
    %v4557 = vadd.f32 %v4555, %v4556
    %v4558 = vrot.slane %v4557, 1
    %v4559 = vadd.f32 %v4557, %v4558
    %v4560 = vmul.f32 %v4559, 0.015625
    %v4561 = vmul.f32 %v4530, %v4530
    %v4562 = vsub.f32 %v4560, %v4561
    %v4563 = vmax.f32 %v4562, 0.0
    %v4564 = vsub.f32 %v4479, %v4530
    %v4565 = vsub.f32 %v4482, %v4530
    %v4566 = vsub.f32 %v4487, %v4530
    %v4567 = vsub.f32 %v4490, %v4530
    %v4568 = vsub.f32 %v4495, %v4530
    %v4569 = vsub.f32 %v4498, %v4530
    %v4570 = vsub.f32 %v4503, %v4530
    %v4571 = vsub.f32 %v4506, %v4530
    %v4572 = vadd.f32 %v4563, 1e-05
    %v4573 = vrsqrt.pop %v4572
    %v4574 = vmul.f32 %v4564, %v4573
    %v4575 = vmul.f32 %v4565, %v4573
    %v4576 = vmul.f32 %v4566, %v4573
    %v4577 = vmul.f32 %v4567, %v4573
    %v4578 = vmul.f32 %v4568, %v4573
    %v4579 = vmul.f32 %v4569, %v4573
    %v4580 = vmul.f32 %v4570, %v4573
    %v4581 = vmul.f32 %v4571, %v4573
    %v4582 = vld [vmem:[#allocation25] sm:$0xff]
    %v4583 = vld [vmem:[#allocation25 + $0x8] sm:$0x1]
    %v4584 = vld [vmem:[%s20] sm:$0x1]
    %v4585 = vlaneseq
    %v4586 = vshrl.u32 %v4585, 7
    %v4587 = vsub.s32 4, %v4586
    %v4588 = vrot.slane %v4582, %v4587
    %v4589 = vmul.f32 %v4574, %v4588
    %v4590 = vmul.f32 %v4575, %v4588
    %v4591 = vmul.f32 %v4576, %v4588
    %v4592 = vmul.f32 %v4577, %v4588
    %v4593 = vmul.f32 %v4578, %v4588
    %v4594 = vmul.f32 %v4579, %v4588
    %v4595 = vmul.f32 %v4580, %v4588
    %v4596 = vmul.f32 %v4581, %v4588
    %v4598 = vlaneseq
    %v4599 = vshrl.u32 %v4598, 7
    %v4600 = vsub.s32 0, %v4599
    %v4601 = vrot.slane %v4584, %v4600
    %v4603 = vadd.f32 %v4601, %v4589
    %v4604 = vadd.f32 %v4601, %v4590
    %v4605 = vadd.f32 %v4601, %v4591
    %v4606 = vadd.f32 %v4601, %v4592
    %v4607 = vadd.f32 %v4601, %v4593
    %v4608 = vadd.f32 %v4601, %v4594
    %v4609 = vadd.f32 %v4601, %v4595
    %v4610 = vadd.f32 %v4601, %v4596
    %v4611 = vrot.slane %v4574, 7
    %v4612 = vrot.slane %v4575, 7
    %v4613 = vrot.slane %v4576, 7
    %v4614 = vrot.slane %v4577, 7
    %v4615 = vrot.slane %v4578, 7
    %v4616 = vrot.slane %v4579, 7
    %v4617 = vrot.slane %v4580, 7
    %v4618 = vrot.slane %v4581, 7
    %v4619 = vsel %vm909, %v4617, %v4618
    %v4620 = vsel %vm909, %v4616, %v4617
    %v4621 = vsel %vm909, %v4615, %v4616
    %v4622 = vsel %vm909, %v4614, %v4615
    %v4623 = vsel %vm909, %v4613, %v4614
    %v4624 = vsel %vm909, %v4612, %v4613
    %v4625 = vsel %vm909, %v4611, %v4612
    %v4626 = vsel %vm909, %v4618, %v4611
    %v4627 = vmul.f32 %v4619, %v3686
    %v4628 = vmul.f32 %v4626, %v3690
    %v4629 = vmul.f32 %v4625, %v3694
    %v4630 = vmul.f32 %v4624, %v3698
    %v4631 = vmul.f32 %v4623, %v3702
    %v4632 = vmul.f32 %v4622, %v3706
    %v4633 = vmul.f32 %v4621, %v3710
    %v4634 = vmul.f32 %v4620, %v3714
    %v4635 = vlaneseq
    %v4636 = vshrl.u32 %v4635, 7
    %v4637 = vsub.s32 0, %v4636
    %v4638 = vrot.slane %v4582, %v4637
    %v4639 = vmul.f32 %v4627, %v4638
    %v4640 = vmul.f32 %v4628, %v4638
    %v4641 = vmul.f32 %v4629, %v4638
    %v4642 = vmul.f32 %v4630, %v4638
    %v4643 = vmul.f32 %v4631, %v4638
    %v4644 = vmul.f32 %v4632, %v4638
    %v4645 = vmul.f32 %v4633, %v4638
    %v4646 = vmul.f32 %v4634, %v4638
    %v4647 = vadd.f32 %v4603, %v4639
    %v4648 = vadd.f32 %v4604, %v4640
    %v4649 = vadd.f32 %v4605, %v4641
    %v4650 = vadd.f32 %v4606, %v4642
    %v4651 = vadd.f32 %v4607, %v4643
    %v4652 = vadd.f32 %v4608, %v4644
    %v4653 = vadd.f32 %v4609, %v4645
    %v4654 = vadd.f32 %v4610, %v4646
    %v4655 = vmul.f32 %v4581, %v3746
    %v4656 = vmul.f32 %v4574, %v3750
    %v4657 = vmul.f32 %v4575, %v3754
    %v4658 = vmul.f32 %v4576, %v3758
    %v4659 = vmul.f32 %v4577, %v3762
    %v4660 = vmul.f32 %v4578, %v3766
    %v4661 = vmul.f32 %v4579, %v3770
    %v4662 = vmul.f32 %v4580, %v3774
    %v4663 = vlaneseq
    %v4664 = vshrl.u32 %v4663, 7
    %v4665 = vsub.s32 1, %v4664
    %v4666 = vrot.slane %v4582, %v4665
    %v4667 = vmul.f32 %v4655, %v4666
    %v4668 = vmul.f32 %v4656, %v4666
    %v4669 = vmul.f32 %v4657, %v4666
    %v4670 = vmul.f32 %v4658, %v4666
    %v4671 = vmul.f32 %v4659, %v4666
    %v4672 = vmul.f32 %v4660, %v4666
    %v4673 = vmul.f32 %v4661, %v4666
    %v4674 = vmul.f32 %v4662, %v4666
    %v4675 = vadd.f32 %v4647, %v4667
    %v4676 = vadd.f32 %v4648, %v4668
    %v4677 = vadd.f32 %v4649, %v4669
    %v4678 = vadd.f32 %v4650, %v4670
    %v4679 = vadd.f32 %v4651, %v4671
    %v4680 = vadd.f32 %v4652, %v4672
    %v4681 = vadd.f32 %v4653, %v4673
    %v4682 = vadd.f32 %v4654, %v4674
    %v4683 = vrot.slane %v4574, 1
    %v4684 = vrot.slane %v4575, 1
    %v4685 = vrot.slane %v4576, 1
    %v4686 = vrot.slane %v4577, 1
    %v4687 = vrot.slane %v4578, 1
    %v4688 = vrot.slane %v4579, 1
    %v4689 = vrot.slane %v4580, 1
    %v4690 = vrot.slane %v4581, 1
    %v4691 = vsel %vm3812, %v4689, %v4690
    %v4692 = vsel %vm3812, %v4688, %v4689
    %v4693 = vsel %vm3812, %v4687, %v4688
    %v4694 = vsel %vm3812, %v4686, %v4687
    %v4695 = vsel %vm3812, %v4685, %v4686
    %v4696 = vsel %vm3812, %v4684, %v4685
    %v4697 = vsel %vm3812, %v4683, %v4684
    %v4698 = vsel %vm3812, %v4690, %v4683
    %v4699 = vmul.f32 %v4698, %v3823
    %v4700 = vmul.f32 %v4697, %v3827
    %v4701 = vmul.f32 %v4696, %v3831
    %v4702 = vmul.f32 %v4695, %v3835
    %v4703 = vmul.f32 %v4694, %v3839
    %v4704 = vmul.f32 %v4693, %v3843
    %v4705 = vmul.f32 %v4692, %v3847
    %v4706 = vmul.f32 %v4691, %v3851
    %v4707 = vlaneseq
    %v4708 = vshrl.u32 %v4707, 7
    %v4709 = vsub.s32 2, %v4708
    %v4710 = vrot.slane %v4582, %v4709
    %v4711 = vmul.f32 %v4699, %v4710
    %v4712 = vmul.f32 %v4700, %v4710
    %v4713 = vmul.f32 %v4701, %v4710
    %v4714 = vmul.f32 %v4702, %v4710
    %v4715 = vmul.f32 %v4703, %v4710
    %v4716 = vmul.f32 %v4704, %v4710
    %v4717 = vmul.f32 %v4705, %v4710
    %v4718 = vmul.f32 %v4706, %v4710
    %v4719 = vadd.f32 %v4675, %v4711
    %v4720 = vadd.f32 %v4676, %v4712
    %v4721 = vadd.f32 %v4677, %v4713
    %v4722 = vadd.f32 %v4678, %v4714
    %v4723 = vadd.f32 %v4679, %v4715
    %v4724 = vadd.f32 %v4680, %v4716
    %v4725 = vadd.f32 %v4681, %v4717
    %v4726 = vadd.f32 %v4682, %v4718
    %v4727 = vmul.f32 %v4626, %v3883
    %v4728 = vmul.f32 %v4625, %v3887
    %v4729 = vmul.f32 %v4624, %v3891
    %v4730 = vmul.f32 %v4623, %v3895
    %v4731 = vmul.f32 %v4622, %v3899
    %v4732 = vmul.f32 %v4621, %v3903
    %v4733 = vmul.f32 %v4620, %v3907
    %v4734 = vmul.f32 %v4619, %v3911
    %v4735 = vlaneseq
    %v4736 = vshrl.u32 %v4735, 7
    %v4737 = vsub.s32 3, %v4736
    %v4738 = vrot.slane %v4582, %v4737
    %v4739 = vmul.f32 %v4727, %v4738
    %v4740 = vmul.f32 %v4728, %v4738
    %v4741 = vmul.f32 %v4729, %v4738
    %v4742 = vmul.f32 %v4730, %v4738
    %v4743 = vmul.f32 %v4731, %v4738
    %v4744 = vmul.f32 %v4732, %v4738
    %v4745 = vmul.f32 %v4733, %v4738
    %v4746 = vmul.f32 %v4734, %v4738
    %v4747 = vadd.f32 %v4719, %v4739
    %v4748 = vadd.f32 %v4720, %v4740
    %v4749 = vadd.f32 %v4721, %v4741
    %v4750 = vadd.f32 %v4722, %v4742
    %v4751 = vadd.f32 %v4723, %v4743
    %v4752 = vadd.f32 %v4724, %v4744
    %v4753 = vadd.f32 %v4725, %v4745
    %v4754 = vadd.f32 %v4726, %v4746
    %v4755 = vmul.f32 %v4697, %v3943
    %v4756 = vmul.f32 %v4696, %v3947
    %v4757 = vmul.f32 %v4695, %v3951
    %v4758 = vmul.f32 %v4694, %v3955
    %v4759 = vmul.f32 %v4693, %v3959
    %v4760 = vmul.f32 %v4692, %v3963
    %v4761 = vmul.f32 %v4691, %v3967
    %v4762 = vmul.f32 %v4698, %v3971
    %v4763 = vlaneseq
    %v4764 = vshrl.u32 %v4763, 7
    %v4765 = vsub.s32 5, %v4764
    %v4766 = vrot.slane %v4582, %v4765
    %v4767 = vmul.f32 %v4755, %v4766
    %v4768 = vmul.f32 %v4756, %v4766
    %v4769 = vmul.f32 %v4757, %v4766
    %v4770 = vmul.f32 %v4758, %v4766
    %v4771 = vmul.f32 %v4759, %v4766
    %v4772 = vmul.f32 %v4760, %v4766
    %v4773 = vmul.f32 %v4761, %v4766
    %v4774 = vmul.f32 %v4762, %v4766
    %v4775 = vadd.f32 %v4747, %v4767
    %v4776 = vadd.f32 %v4748, %v4768
    %v4777 = vadd.f32 %v4749, %v4769
    %v4778 = vadd.f32 %v4750, %v4770
    %v4779 = vadd.f32 %v4751, %v4771
    %v4780 = vadd.f32 %v4752, %v4772
    %v4781 = vadd.f32 %v4753, %v4773
    %v4782 = vadd.f32 %v4754, %v4774
    %v4783 = vmul.f32 %v4625, %v4003
    %v4784 = vmul.f32 %v4624, %v4007
    %v4785 = vmul.f32 %v4623, %v4011
    %v4786 = vmul.f32 %v4622, %v4015
    %v4787 = vmul.f32 %v4621, %v4019
    %v4788 = vmul.f32 %v4620, %v4023
    %v4789 = vmul.f32 %v4619, %v4027
    %v4790 = vmul.f32 %v4626, %v4031
    %v4791 = vlaneseq
    %v4792 = vshrl.u32 %v4791, 7
    %v4793 = vsub.s32 6, %v4792
    %v4794 = vrot.slane %v4582, %v4793
    %v4795 = vmul.f32 %v4783, %v4794
    %v4796 = vmul.f32 %v4784, %v4794
    %v4797 = vmul.f32 %v4785, %v4794
    %v4798 = vmul.f32 %v4786, %v4794
    %v4799 = vmul.f32 %v4787, %v4794
    %v4800 = vmul.f32 %v4788, %v4794
    %v4801 = vmul.f32 %v4789, %v4794
    %v4802 = vmul.f32 %v4790, %v4794
    %v4803 = vadd.f32 %v4775, %v4795
    %v4804 = vadd.f32 %v4776, %v4796
    %v4805 = vadd.f32 %v4777, %v4797
    %v4806 = vadd.f32 %v4778, %v4798
    %v4807 = vadd.f32 %v4779, %v4799
    %v4808 = vadd.f32 %v4780, %v4800
    %v4809 = vadd.f32 %v4781, %v4801
    %v4810 = vadd.f32 %v4782, %v4802
    %v4811 = vmul.f32 %v4575, %v4063
    %v4812 = vmul.f32 %v4576, %v4067
    %v4813 = vmul.f32 %v4577, %v4071
    %v4814 = vmul.f32 %v4578, %v4075
    %v4815 = vmul.f32 %v4579, %v4079
    %v4816 = vmul.f32 %v4580, %v4083
    %v4817 = vmul.f32 %v4581, %v4087
    %v4818 = vmul.f32 %v4574, %v4091
    %v4819 = vlaneseq
    %v4820 = vshrl.u32 %v4819, 7
    %v4821 = vsub.s32 7, %v4820
    %v4822 = vrot.slane %v4582, %v4821
    %v4823 = vmul.f32 %v4811, %v4822
    %v4824 = vmul.f32 %v4812, %v4822
    %v4825 = vmul.f32 %v4813, %v4822
    %v4826 = vmul.f32 %v4814, %v4822
    %v4827 = vmul.f32 %v4815, %v4822
    %v4828 = vmul.f32 %v4816, %v4822
    %v4829 = vmul.f32 %v4817, %v4822
    %v4830 = vmul.f32 %v4818, %v4822
    %v4831 = vadd.f32 %v4803, %v4823
    %v4832 = vadd.f32 %v4804, %v4824
    %v4833 = vadd.f32 %v4805, %v4825
    %v4834 = vadd.f32 %v4806, %v4826
    %v4835 = vadd.f32 %v4807, %v4827
    %v4836 = vadd.f32 %v4808, %v4828
    %v4837 = vadd.f32 %v4809, %v4829
    %v4838 = vadd.f32 %v4810, %v4830
    %v4839 = vmul.f32 %v4696, %v4123
    %v4840 = vmul.f32 %v4695, %v4127
    %v4841 = vmul.f32 %v4694, %v4131
    %v4842 = vmul.f32 %v4693, %v4135
    %v4843 = vmul.f32 %v4692, %v4139
    %v4844 = vmul.f32 %v4691, %v4143
    %v4845 = vmul.f32 %v4698, %v4147
    %v4846 = vmul.f32 %v4697, %v4151
    %v4847 = vlaneseq
    %v4848 = vshrl.u32 %v4847, 7
    %v4849 = vsub.s32 0, %v4848
    %v4850 = vrot.slane %v4583, %v4849
    %v4851 = vmul.f32 %v4839, %v4850
    %v4852 = vmul.f32 %v4840, %v4850
    %v4853 = vmul.f32 %v4841, %v4850
    %v4854 = vmul.f32 %v4842, %v4850
    %v4855 = vmul.f32 %v4843, %v4850
    %v4856 = vmul.f32 %v4844, %v4850
    %v4857 = vmul.f32 %v4845, %v4850
    %v4858 = vmul.f32 %v4846, %v4850
    %v4859 = vadd.f32 %v4831, %v4851
    %v4860 = vadd.f32 %v4832, %v4852
    %v4861 = vadd.f32 %v4833, %v4853
    %v4862 = vadd.f32 %v4834, %v4854
    %v4863 = vadd.f32 %v4835, %v4855
    %v4864 = vadd.f32 %v4836, %v4856
    %v4865 = vadd.f32 %v4837, %v4857
    %v4866 = vadd.f32 %v4838, %v4858
    %v4867 = vadd.f32 %v4859, %v3558
    %v4868 = vadd.f32 %v4860, %v3559
    %v4869 = vadd.f32 %v4861, %v3560
    %v4870 = vadd.f32 %v4862, %v3561
    %v4871 = vadd.f32 %v4863, %v3562
    %v4872 = vadd.f32 %v4864, %v3563
    %v4873 = vadd.f32 %v4865, %v3564
    %v4874 = vadd.f32 %v4866, %v3565
    %v4875 = vmul.f32 %v4867, 2.0
    %v4876 = vmul.f32 %v4868, 2.0
    %v4877 = vmul.f32 %v4869, 2.0
    %v4878 = vmul.f32 %v4870, 2.0
    %v4879 = vmul.f32 %v4871, 2.0
    %v4880 = vmul.f32 %v4872, 2.0
    %v4881 = vmul.f32 %v4873, 2.0
    %v4882 = vmul.f32 %v4874, 2.0
    %4883 = vst.msk [vmem:[#allocation27] sm:$0xff] %vm269, %v4875
    %4884 = vst.msk [vmem:[#allocation27 + $0x8] sm:$0xff] %vm269, %v4876
    %4885 = vst.msk [vmem:[#allocation27 + $0x10] sm:$0xff] %vm269, %v4877
    %4886 = vst.msk [vmem:[#allocation27 + $0x18] sm:$0xff] %vm269, %v4878
    %4887 = vst.msk [vmem:[#allocation27 + $0x20] sm:$0xff] %vm269, %v4879
    %4888 = vst.msk [vmem:[#allocation27 + $0x28] sm:$0xff] %vm269, %v4880
    %4889 = vst.msk [vmem:[#allocation27 + $0x30] sm:$0xff] %vm269, %v4881
    %4890 = vst.msk [vmem:[#allocation27 + $0x38] sm:$0xff] %vm269, %v4882
    // Predicated region
    $region153: #{tpu_custom_call.1} parent=1 // pred_check
      _
    $region154: #{tpu_custom_call.1} parent=1 // pred_check_branch
      %4892 = sbr.rel (0) target = $region156
    $region155: #{tpu_custom_call.1} parent=1 // pred_region
      %s4894 = ssub.s32 1024, 1024
      %4895 = vsyncadd [#allocation6], %s4894
      %s4896 = sshll.u32 [#allocation27], 4
      %s4897 = int_to_ptr.vmem [resolvable:$true] %s4896
      %4902 = dma.vmem_to_hbm [thread:$0]  %s4897, 1024, %s22, [#allocation6], 128, 128, 8
    $region156: #{tpu_custom_call.1} parent=1 // pred_fallthru
      _
    // Predicated region
    $region157: #{tpu_custom_call.1} parent=1 // pred_check
      _
    $region158: #{tpu_custom_call.1} parent=1 // pred_check_branch
      %4904 = sbr.rel (0) target = $region160
    $region159: #{tpu_custom_call.1} parent=1 // pred_region
      %4905 = dma.done [#allocation6], 1024
    $region160: #{tpu_custom_call.1} parent=1 // pred_fallthru
      _
    %4906 = vsyncpa [#allocation5], 1
    %4907 = vsyncpa [#allocation8], 1
    %4908 = vsyncpa [#allocation11], 1
    %4909 = vsyncpa [#allocation14], 1
    %4910 = vsyncpa [#allocation17], 1
    %4911 = vsyncpa [#allocation20], 1
    %4912 = vsyncpa [#allocation23], 1
    %4913 = vsyncpa [#allocation26], 1
    %4914 = vsyncpa [#allocation6], 1

</llo_original>
